<compile_context>
chip_gen: v7x
topology: tpu7x:2x2x1
jax: 0.10.0
libtpu: 0.0.40
codegen_flags: <defaults>
</compile_context>

<pallas_src>
import functools
import math

import jax
import jax.numpy as jnp
from jax.experimental import pallas as pl
from jax.experimental.pallas import tpu as pltpu

# ----------------------------- model hyper-params ---------------------------
IMAGE_SIZE = 16
PATCH = 4
CHANNELS = 3
DIM = 32
DEPTH = 2
HEADS = 4
DIM_HEAD = 8
INNER = HEADS * DIM_HEAD                      # 32
MLP_DIM = 64
NUM_CLASSES = 10
NUM_PATCHES = (IMAGE_SIZE // PATCH) ** 2      # 16
N_TOK = NUM_PATCHES + 1                       # 17 (cls + patches)
PATCH_DIM = PATCH * PATCH * 5 * CHANNELS      # 240 (SPT: 5x channels)
HEAD_PAD = 128                                # lane-dense padded class dim
EPS = 1e-5
_SQRT2_INV = 0.7071067811865476
MASK_VALUE = -1e30                            # large-negative, avoids -inf after max-sub

LAYER_KEYS = ('ln1_g', 'ln1_b', 'wqkv', 'wout', 'bout',
              'ln2_g', 'ln2_b', 'w1', 'b1', 'w2', 'b2')


# ----------------------------- in-kernel helpers ----------------------------
def _layernorm(x, g, b):
    mu = jnp.mean(x, axis=-1, keepdims=True)
    var = jnp.mean((x - mu) ** 2, axis=-1, keepdims=True)
    return (x - mu) * jax.lax.rsqrt(var + EPS) * g + b


def _gelu_exact(x):
    # PyTorch nn.GELU() default (erf-based, exact)
    return 0.5 * x * (1.0 + jax.lax.erf(x * _SQRT2_INV))


# ----------------------------- fused Pallas kernel --------------------------
def vit_fused_kernel(*refs, batch_tile):
    bt = batch_tile
    tok_ref = refs[0]                                  # (bt, 16, PATCH_DIM)
    cls_ref, pos_ref = refs[1], refs[2]                # (1,1,D), (1,17,D)
    sg_ref, sb_ref, sw_ref, sbias_ref = refs[3:7]      # SPT LN + Linear
    off = 7
    layer_refs = []
    for _ in range(DEPTH):
        layer_refs.append(refs[off:off + len(LAYER_KEYS)])
        off += len(LAYER_KEYS)
    hg_ref, hb_ref, hw_ref, hbias_ref = refs[off:off + 4]   # head (w/bias lane-padded)
    off += 4
    scales_ref = refs[off]                             # (DEPTH,) f32 in SMEM: exp(temperature)
    out_ref = refs[off + 1]                            # (bt, 1, HEAD_PAD)

    # ---- SPT embedding: LayerNorm(patch_dim) + Linear(patch_dim -> dim) ----
    tok = tok_ref[...].reshape(bt * NUM_PATCHES, PATCH_DIM)
    tn = _layernorm(tok, sg_ref[...], sb_ref[...])
    emb = jnp.dot(tn, sw_ref[...], preferred_element_type=jnp.float32) + sbias_ref[...]
    emb3 = emb.reshape(bt, NUM_PATCHES, DIM)

    # ---- cls token + positional embedding (dropout p=0 -> identity) ----
    cls = jnp.broadcast_to(cls_ref[...], (bt, 1, DIM))
    x3 = jnp.concatenate([cls, emb3], axis=1) + pos_ref[...]   # (bt, 17, D)
    x = x3.reshape(bt * N_TOK, DIM)                            # row-packed 2-D form

    # LSA diagonal mask (shared by every layer / head / batch element)
    row = jax.lax.broadcasted_iota(jnp.int32, (N_TOK, N_TOK), 0)
    col = jax.lax.broadcasted_iota(jnp.int32, (N_TOK, N_TOK), 1)
    diag = (row == col)[None, :, :]                            # (1, 17, 17)

    for li, lrefs in enumerate(layer_refs):
        (ln1_g, ln1_b, wqkv, wout, bout,
         ln2_g, ln2_b, w1, b1, w2, b2) = lrefs
        scale = scales_ref[li]                                 # exp(learnable temperature)

        # --- PreNorm + LSA attention ---
        xn = _layernorm(x, ln1_g[...], ln1_b[...])
        qkv = jnp.dot(xn, wqkv[...], preferred_element_type=jnp.float32)   # (bt*17, 3*INNER)
        qkv3 = qkv.reshape(bt, N_TOK, 3 * INNER)

        head_outs = []
        for h in range(HEADS):                                 # static unroll (4)
            o = h * DIM_HEAD
            qh = qkv3[:, :, o:o + DIM_HEAD]
            kh = qkv3[:, :, INNER + o:INNER + o + DIM_HEAD]
            vh = qkv3[:, :, 2 * INNER + o:2 * INNER + o + DIM_HEAD]
            dots = jnp.einsum('bnd,bmd->bnm', qh, kh,
                              preferred_element_type=jnp.float32) * scale
            dots = jnp.where(diag, MASK_VALUE, dots)           # LSA: mask self-attention
            dots = dots - jnp.max(dots, axis=-1, keepdims=True)
            e = jnp.exp(dots)
            attn = e * pl.reciprocal(jnp.sum(e, axis=-1, keepdims=True), approx=True)
            head_outs.append(jnp.einsum('bnm,bmd->bnd', attn, vh,
                                        preferred_element_type=jnp.float32))
        # concat-over-heads ('b h n d -> b n (h d)'), single output projection matmul
        ocat = jnp.concatenate(head_outs, axis=-1).reshape(bt * N_TOK, INNER)
        proj = jnp.dot(ocat, wout[...], preferred_element_type=jnp.float32) + bout[...]
        x = x + proj

        # --- PreNorm + FeedForward ---
        xn2 = _layernorm(x, ln2_g[...], ln2_b[...])
        h1 = jnp.dot(xn2, w1[...], preferred_element_type=jnp.float32) + b1[...]
        h1 = _gelu_exact(h1)
        ff = jnp.dot(h1, w2[...], preferred_element_type=jnp.float32) + b2[...]
        x = x + ff

    # ---- cls pool + MLP head (fused, lane-padded to 128 for an unmasked store) ----
    cls_out = x.reshape(bt, N_TOK, DIM)[:, 0, :]               # pool = 'cls'
    hn = _layernorm(cls_out, hg_ref[...], hb_ref[...])
    logits = jnp.dot(hn, hw_ref[...], preferred_element_type=jnp.float32) + hbias_ref[...]
    out_ref[...] = logits.reshape(bt, 1, HEAD_PAD)


# ----------------------------- spec / wrapper helpers ------------------------
def _full_spec(shape):
    nd = len(shape)
    return pl.BlockSpec(tuple(shape), lambda i, _nd=nd: (0,) * _nd)


def _batch_tile(batch):
    """Largest batch tile <= 8 that divides B while keeping >=2 grid steps
    (so both v7x TensorCores get work when B >= 2)."""
    if batch <= 1:
        return max(batch, 1)
    for bt in (8, 4, 2, 1):
        if batch % bt == 0 and batch // bt >= 2:
            return bt
    return 1


def _flatten_params(params):
    # Head weight / bias are zero-padded to HEAD_PAD lanes for a lane-dense store.
    hw = params['head']['w']
    hb = params['head']['bias']
    hw_p = jnp.pad(hw, ((0, 0), (0, HEAD_PAD - hw.shape[1])))
    hb_p = jnp.pad(hb, ((0, 0), (0, HEAD_PAD - hb.shape[1])))
    flat = [params['cls'], params['pos'],
            params['spt']['g'], params['spt']['b'],
            params['spt']['w'], params['spt']['bias']]
    for lp in params['layers']:
        flat.extend(lp[k] for k in LAYER_KEYS)
    flat.extend([params['head']['g'], params['head']['b'], hw_p, hb_p])
    return flat


def vit_fused(tokens, params):
    B = tokens.shape[0]
    bt = _batch_tile(B)
    num_tiles = B // bt
    flat = _flatten_params(params)
    # learnable LSA temperature -> per-layer softmax scale (runtime, via SMEM)
    scales = jnp.exp(jnp.stack([lp['temp'] for lp in params['layers']])
                     .astype(jnp.float32))                       # (DEPTH,)

    kernel = functools.partial(vit_fused_kernel, batch_tile=bt)
    in_specs = [pl.BlockSpec((bt, NUM_PATCHES, PATCH_DIM), lambda i: (i, 0, 0))]
    in_specs += [_full_spec(a.shape) for a in flat]
    in_specs += [pl.BlockSpec((DEPTH,), lambda i: (0,),
                              memory_space=pltpu.MemorySpace.SMEM)]

    out = pl.pallas_call(
        kernel,
        out_shape=jax.ShapeDtypeStruct((B, 1, HEAD_PAD), jnp.float32),
        grid=(num_tiles,),
        in_specs=in_specs,
        out_specs=pl.BlockSpec((bt, 1, HEAD_PAD), lambda i: (i, 0, 0)),
        compiler_params=pltpu.CompilerParams(dimension_semantics=("parallel",)),
    )(tokens, *flat, scales)
    return out[:, 0, :NUM_CLASSES]                               # (B, 10)


# ----------------------------- JAX glue (SPT shifts + rearrange) ------------
# TODO(synk): the SPT pixel shifts + patch rearrange are pure data movement with
# no clean in-kernel equivalent (cross-tile gather); kept as XLA glue.
def spt_tokens(img):
    """Shifted Patch Tokenization: 4 one-pixel shifts, concat on channels,
    then 'b c (h p1) (w p2) -> b (h w) (p1 p2 c)'."""
    B, C, H, W = img.shape
    z = ((0, 0), (0, 0))
    s_r = jnp.pad(img, z + ((0, 0), (1, 0)))[:, :, :, :W]   # F.pad (1,-1,0,0)
    s_l = jnp.pad(img, z + ((0, 0), (0, 1)))[:, :, :, 1:]   # F.pad (-1,1,0,0)
    s_d = jnp.pad(img, z + ((1, 0), (0, 0)))[:, :, :H, :]   # F.pad (0,0,1,-1)
    s_u = jnp.pad(img, z + ((0, 1), (0, 0)))[:, :, 1:, :]   # F.pad (0,0,-1,1)
    x = jnp.concatenate([img, s_r, s_l, s_d, s_u], axis=1)  # (B, 5C, H, W)
    C5 = 5 * C
    h, w = H // PATCH, W // PATCH
    x = x.reshape(B, C5, h, PATCH, w, PATCH)
    x = x.transpose(0, 2, 4, 3, 5, 1)                       # b h w p1 p2 c
    return x.reshape(B, h * w, PATCH * PATCH * C5)          # (B, Np, PATCH_DIM)


# ----------------------------- parameters -----------------------------------
def init_params(key):
    keys = iter(jax.random.split(key, 64))

    def nrm(shape, s=0.02):
        return jax.random.normal(next(keys), shape, jnp.float32) * s

    p = {
        'spt': dict(g=jnp.ones((1, PATCH_DIM), jnp.float32),
                    b=jnp.zeros((1, PATCH_DIM), jnp.float32),
                    w=nrm((PATCH_DIM, DIM)), bias=nrm((1, DIM))),
        'cls': nrm((1, 1, DIM), 1.0),
        'pos': nrm((1, N_TOK, DIM), 1.0),
        'layers': [],
        'head': dict(g=jnp.ones((1, DIM), jnp.float32),
                     b=jnp.zeros((1, DIM), jnp.float32),
                     w=nrm((DIM, NUM_CLASSES)), bias=nrm((1, NUM_CLASSES))),
    }
    for _ in range(DEPTH):
        p['layers'].append(dict(
            ln1_g=jnp.ones((1, DIM), jnp.float32), ln1_b=jnp.zeros((1, DIM), jnp.float32),
            wqkv=nrm((DIM, 3 * INNER)),
            wout=nrm((INNER, DIM)), bout=nrm((1, DIM)),
            ln2_g=jnp.ones((1, DIM), jnp.float32), ln2_b=jnp.zeros((1, DIM), jnp.float32),
            w1=nrm((DIM, MLP_DIM)), b1=nrm((1, MLP_DIM)),
            w2=nrm((MLP_DIM, DIM)), b2=nrm((1, DIM)),
            # learnable LSA temperature, init = log(dim_head ** -0.5)
            temp=jnp.asarray(math.log(DIM_HEAD ** -0.5), jnp.float32),
        ))
    return p


# ----------------------------- full forward ---------------------------------
def vit_forward(img, params):
    tokens = spt_tokens(img)               # (B, 16, 240)  [XLA glue: data movement only]
    return vit_fused(tokens, params)       # (B, 10)       [single fused Pallas kernel]


# ----------------------------- main ------------------------------------------
if __name__ == "__main__":
    key = jax.random.PRNGKey(0)
    k_img, k_params = jax.random.split(key)
    img = jax.random.normal(k_img, (2, CHANNELS, IMAGE_SIZE, IMAGE_SIZE), jnp.float32)
    params = init_params(k_params)

    out = jax.jit(vit_forward)(img, params)
    out = jax.block_until_ready(out)
    assert out.shape == (2, NUM_CLASSES) and out.dtype == jnp.float32
    assert bool(jnp.all(jnp.isfinite(out)))
    print("KERNEL_OK")
</pallas_src>

<mosaic_0001>
module attributes {stable_mosaic.version = 11 : i64} {
  func.func @vit_fused_kernel(%arg0: i32, %arg1: memref<1x16x240xf32, #tpu.memory_space<vmem>>, %arg2: memref<1x1x32xf32, #tpu.memory_space<vmem>>, %arg3: memref<1x17x32xf32, #tpu.memory_space<vmem>>, %arg4: memref<1x240xf32, #tpu.memory_space<vmem>>, %arg5: memref<1x240xf32, #tpu.memory_space<vmem>>, %arg6: memref<240x32xf32, #tpu.memory_space<vmem>>, %arg7: memref<1x32xf32, #tpu.memory_space<vmem>>, %arg8: memref<1x32xf32, #tpu.memory_space<vmem>>, %arg9: memref<1x32xf32, #tpu.memory_space<vmem>>, %arg10: memref<32x96xf32, #tpu.memory_space<vmem>>, %arg11: memref<32x32xf32, #tpu.memory_space<vmem>>, %arg12: memref<1x32xf32, #tpu.memory_space<vmem>>, %arg13: memref<1x32xf32, #tpu.memory_space<vmem>>, %arg14: memref<1x32xf32, #tpu.memory_space<vmem>>, %arg15: memref<32x64xf32, #tpu.memory_space<vmem>>, %arg16: memref<1x64xf32, #tpu.memory_space<vmem>>, %arg17: memref<64x32xf32, #tpu.memory_space<vmem>>, %arg18: memref<1x32xf32, #tpu.memory_space<vmem>>, %arg19: memref<1x32xf32, #tpu.memory_space<vmem>>, %arg20: memref<1x32xf32, #tpu.memory_space<vmem>>, %arg21: memref<32x96xf32, #tpu.memory_space<vmem>>, %arg22: memref<32x32xf32, #tpu.memory_space<vmem>>, %arg23: memref<1x32xf32, #tpu.memory_space<vmem>>, %arg24: memref<1x32xf32, #tpu.memory_space<vmem>>, %arg25: memref<1x32xf32, #tpu.memory_space<vmem>>, %arg26: memref<32x64xf32, #tpu.memory_space<vmem>>, %arg27: memref<1x64xf32, #tpu.memory_space<vmem>>, %arg28: memref<64x32xf32, #tpu.memory_space<vmem>>, %arg29: memref<1x32xf32, #tpu.memory_space<vmem>>, %arg30: memref<1x32xf32, #tpu.memory_space<vmem>>, %arg31: memref<1x32xf32, #tpu.memory_space<vmem>>, %arg32: memref<32x128xf32, #tpu.memory_space<vmem>>, %arg33: memref<1x128xf32, #tpu.memory_space<vmem>>, %arg34: memref<2xf32, #tpu.memory_space<smem>>, %arg35: memref<1x1x128xf32, #tpu.memory_space<vmem>>) attributes {dimension_semantics = [#tpu.dimension_semantics<parallel>], iteration_bounds = array<i64: 2>, scalar_prefetch = 0 : i64, scratch_operands = 0 : i64, tpu.core_type = #tpu.core_type<tc>, window_params = [{transform_indices = @transform_0, window_bounds = array<i64: 1, 16, 240>}, {pipeline_mode = #tpu.pipeline_mode<synchronous>, transform_indices = @transform_1, window_bounds = array<i64: 1, 1, 32>}, {pipeline_mode = #tpu.pipeline_mode<synchronous>, transform_indices = @transform_2, window_bounds = array<i64: 1, 17, 32>}, {pipeline_mode = #tpu.pipeline_mode<synchronous>, transform_indices = @transform_3, window_bounds = array<i64: 1, 240>}, {pipeline_mode = #tpu.pipeline_mode<synchronous>, transform_indices = @transform_4, window_bounds = array<i64: 1, 240>}, {pipeline_mode = #tpu.pipeline_mode<synchronous>, transform_indices = @transform_5, window_bounds = array<i64: 240, 32>}, {pipeline_mode = #tpu.pipeline_mode<synchronous>, transform_indices = @transform_6, window_bounds = array<i64: 1, 32>}, {pipeline_mode = #tpu.pipeline_mode<synchronous>, transform_indices = @transform_7, window_bounds = array<i64: 1, 32>}, {pipeline_mode = #tpu.pipeline_mode<synchronous>, transform_indices = @transform_8, window_bounds = array<i64: 1, 32>}, {pipeline_mode = #tpu.pipeline_mode<synchronous>, transform_indices = @transform_9, window_bounds = array<i64: 32, 96>}, {pipeline_mode = #tpu.pipeline_mode<synchronous>, transform_indices = @transform_10, window_bounds = array<i64: 32, 32>}, {pipeline_mode = #tpu.pipeline_mode<synchronous>, transform_indices = @transform_11, window_bounds = array<i64: 1, 32>}, {pipeline_mode = #tpu.pipeline_mode<synchronous>, transform_indices = @transform_12, window_bounds = array<i64: 1, 32>}, {pipeline_mode = #tpu.pipeline_mode<synchronous>, transform_indices = @transform_13, window_bounds = array<i64: 1, 32>}, {pipeline_mode = #tpu.pipeline_mode<synchronous>, transform_indices = @transform_14, window_bounds = array<i64: 32, 64>}, {pipeline_mode = #tpu.pipeline_mode<synchronous>, transform_indices = @transform_15, window_bounds = array<i64: 1, 64>}, {pipeline_mode = #tpu.pipeline_mode<synchronous>, transform_indices = @transform_16, window_bounds = array<i64: 64, 32>}, {pipeline_mode = #tpu.pipeline_mode<synchronous>, transform_indices = @transform_17, window_bounds = array<i64: 1, 32>}, {pipeline_mode = #tpu.pipeline_mode<synchronous>, transform_indices = @transform_18, window_bounds = array<i64: 1, 32>}, {pipeline_mode = #tpu.pipeline_mode<synchronous>, transform_indices = @transform_19, window_bounds = array<i64: 1, 32>}, {pipeline_mode = #tpu.pipeline_mode<synchronous>, transform_indices = @transform_20, window_bounds = array<i64: 32, 96>}, {pipeline_mode = #tpu.pipeline_mode<synchronous>, transform_indices = @transform_21, window_bounds = array<i64: 32, 32>}, {pipeline_mode = #tpu.pipeline_mode<synchronous>, transform_indices = @transform_22, window_bounds = array<i64: 1, 32>}, {pipeline_mode = #tpu.pipeline_mode<synchronous>, transform_indices = @transform_23, window_bounds = array<i64: 1, 32>}, {pipeline_mode = #tpu.pipeline_mode<synchronous>, transform_indices = @transform_24, window_bounds = array<i64: 1, 32>}, {pipeline_mode = #tpu.pipeline_mode<synchronous>, transform_indices = @transform_25, window_bounds = array<i64: 32, 64>}, {pipeline_mode = #tpu.pipeline_mode<synchronous>, transform_indices = @transform_26, window_bounds = array<i64: 1, 64>}, {pipeline_mode = #tpu.pipeline_mode<synchronous>, transform_indices = @transform_27, window_bounds = array<i64: 64, 32>}, {pipeline_mode = #tpu.pipeline_mode<synchronous>, transform_indices = @transform_28, window_bounds = array<i64: 1, 32>}, {pipeline_mode = #tpu.pipeline_mode<synchronous>, transform_indices = @transform_29, window_bounds = array<i64: 1, 32>}, {pipeline_mode = #tpu.pipeline_mode<synchronous>, transform_indices = @transform_30, window_bounds = array<i64: 1, 32>}, {pipeline_mode = #tpu.pipeline_mode<synchronous>, transform_indices = @transform_31, window_bounds = array<i64: 32, 128>}, {pipeline_mode = #tpu.pipeline_mode<synchronous>, transform_indices = @transform_32, window_bounds = array<i64: 1, 128>}, {transform_indices = @transform_33, window_bounds = array<i64: 2>}, {transform_indices = @transform_34, window_bounds = array<i64: 1, 1, 128>}]} {
    %c0 = arith.constant 0 : index
    %c0_0 = arith.constant 0 : index
    %c0_1 = arith.constant 0 : index
    %0 = vector.load %arg1[%c0, %c0_0, %c0_1] : memref<1x16x240xf32, #tpu.memory_space<vmem>>, vector<1x16x240xf32>
    %1 = vector.shape_cast %0 : vector<1x16x240xf32> to vector<16x240xf32>
    %c0_2 = arith.constant 0 : index
    %c0_3 = arith.constant 0 : index
    %2 = vector.load %arg4[%c0_2, %c0_3] : memref<1x240xf32, #tpu.memory_space<vmem>>, vector<1x240xf32>
    %c0_4 = arith.constant 0 : index
    %c0_5 = arith.constant 0 : index
    %3 = vector.load %arg5[%c0_4, %c0_5] : memref<1x240xf32, #tpu.memory_space<vmem>>, vector<1x240xf32>
    %cst = arith.constant dense<0.000000e+00> : vector<16xf32>
    %4 = vector.multi_reduction <add>, %1, %cst [1] : vector<16x240xf32> to vector<16xf32>
    %5 = vector.shape_cast %4 : vector<16xf32> to vector<16x1xf32>
    %cst_6 = arith.constant 2.400000e+02 : f32
    %6 = vector.broadcast %cst_6 : f32 to vector<16x1xf32>
    %7 = arith.divf %5, %6 : vector<16x1xf32>
    %8 = vector.broadcast %7 : vector<16x1xf32> to vector<16x240xf32>
    %9 = arith.subf %1, %8 : vector<16x240xf32>
    %10 = arith.mulf %9, %9 : vector<16x240xf32>
    %cst_7 = arith.constant dense<0.000000e+00> : vector<16xf32>
    %11 = vector.multi_reduction <add>, %10, %cst_7 [1] : vector<16x240xf32> to vector<16xf32>
    %12 = vector.shape_cast %11 : vector<16xf32> to vector<16x1xf32>
    %cst_8 = arith.constant 2.400000e+02 : f32
    %13 = vector.broadcast %cst_8 : f32 to vector<16x1xf32>
    %14 = arith.divf %12, %13 : vector<16x1xf32>
    %15 = vector.broadcast %7 : vector<16x1xf32> to vector<16x240xf32>
    %16 = arith.subf %1, %15 : vector<16x240xf32>
    %cst_9 = arith.constant 9.99999974E-6 : f32
    %17 = vector.broadcast %cst_9 : f32 to vector<16x1xf32>
    %18 = arith.addf %14, %17 : vector<16x1xf32>
    %19 = math.rsqrt %18 : vector<16x1xf32>
    %20 = vector.broadcast %19 : vector<16x1xf32> to vector<16x240xf32>
    %21 = arith.mulf %16, %20 : vector<16x240xf32>
    %22 = vector.broadcast %2 : vector<1x240xf32> to vector<16x240xf32>
    %23 = arith.mulf %21, %22 : vector<16x240xf32>
    %24 = vector.broadcast %3 : vector<1x240xf32> to vector<16x240xf32>
    %25 = arith.addf %23, %24 : vector<16x240xf32>
    %c0_10 = arith.constant 0 : index
    %c0_11 = arith.constant 0 : index
    %26 = vector.load %arg6[%c0_10, %c0_11] : memref<240x32xf32, #tpu.memory_space<vmem>>, vector<240x32xf32>
    %cst_12 = arith.constant dense<0.000000e+00> : vector<16x32xf32>
    %27 = tpu.matmul %25, %26, %cst_12 {dimension_numbers = #tpu.dot_dimension_numbers<[1], [0], [0], [1], [0, 0, 1, 1], [], []>} : vector<16x240xf32>, vector<240x32xf32>, vector<16x32xf32> -> vector<16x32xf32>
    %c0_13 = arith.constant 0 : index
    %c0_14 = arith.constant 0 : index
    %28 = vector.load %arg7[%c0_13, %c0_14] : memref<1x32xf32, #tpu.memory_space<vmem>>, vector<1x32xf32>
    %29 = vector.broadcast %28 : vector<1x32xf32> to vector<16x32xf32>
    %30 = arith.addf %27, %29 : vector<16x32xf32>
    %31 = vector.shape_cast %30 : vector<16x32xf32> to vector<1x16x32xf32>
    %c0_15 = arith.constant 0 : index
    %c0_16 = arith.constant 0 : index
    %c0_17 = arith.constant 0 : index
    %32 = vector.load %arg2[%c0_15, %c0_16, %c0_17] : memref<1x1x32xf32, #tpu.memory_space<vmem>>, vector<1x1x32xf32>
    %33 = tpu.concatenate %32, %31 in 1 : vector<1x1x32xf32>, vector<1x16x32xf32> -> vector<1x17x32xf32>
    %c0_18 = arith.constant 0 : index
    %c0_19 = arith.constant 0 : index
    %c0_20 = arith.constant 0 : index
    %34 = vector.load %arg3[%c0_18, %c0_19, %c0_20] : memref<1x17x32xf32, #tpu.memory_space<vmem>>, vector<1x17x32xf32>
    %35 = arith.addf %33, %34 : vector<1x17x32xf32>
    %36 = vector.shape_cast %35 : vector<1x17x32xf32> to vector<17x32xf32>
    %37 = tpu.iota {dimensions = array<i32: 0>} : vector<17x17xi32>
    %38 = tpu.iota {dimensions = array<i32: 1>} : vector<17x17xi32>
    %39 = arith.cmpi eq, %37, %38 : vector<17x17xi32>
    %40 = vector.shape_cast %39 : vector<17x17xi1> to vector<1x17x17xi1>
    %c0_21 = arith.constant 0 : index
    %41 = memref.load %arg34[%c0_21] : memref<2xf32, #tpu.memory_space<smem>>
    %c0_22 = arith.constant 0 : index
    %c0_23 = arith.constant 0 : index
    %42 = vector.load %arg8[%c0_22, %c0_23] : memref<1x32xf32, #tpu.memory_space<vmem>>, vector<1x32xf32>
    %c0_24 = arith.constant 0 : index
    %c0_25 = arith.constant 0 : index
    %43 = vector.load %arg9[%c0_24, %c0_25] : memref<1x32xf32, #tpu.memory_space<vmem>>, vector<1x32xf32>
    %cst_26 = arith.constant dense<0.000000e+00> : vector<17xf32>
    %44 = vector.multi_reduction <add>, %36, %cst_26 [1] : vector<17x32xf32> to vector<17xf32>
    %45 = vector.shape_cast %44 : vector<17xf32> to vector<17x1xf32>
    %cst_27 = arith.constant 3.200000e+01 : f32
    %46 = vector.broadcast %cst_27 : f32 to vector<17x1xf32>
    %47 = arith.divf %45, %46 : vector<17x1xf32>
    %48 = vector.broadcast %47 : vector<17x1xf32> to vector<17x32xf32>
    %49 = arith.subf %36, %48 : vector<17x32xf32>
    %50 = arith.mulf %49, %49 : vector<17x32xf32>
    %cst_28 = arith.constant dense<0.000000e+00> : vector<17xf32>
    %51 = vector.multi_reduction <add>, %50, %cst_28 [1] : vector<17x32xf32> to vector<17xf32>
    %52 = vector.shape_cast %51 : vector<17xf32> to vector<17x1xf32>
    %cst_29 = arith.constant 3.200000e+01 : f32
    %53 = vector.broadcast %cst_29 : f32 to vector<17x1xf32>
    %54 = arith.divf %52, %53 : vector<17x1xf32>
    %55 = vector.broadcast %47 : vector<17x1xf32> to vector<17x32xf32>
    %56 = arith.subf %36, %55 : vector<17x32xf32>
    %cst_30 = arith.constant 9.99999974E-6 : f32
    %57 = vector.broadcast %cst_30 : f32 to vector<17x1xf32>
    %58 = arith.addf %54, %57 : vector<17x1xf32>
    %59 = math.rsqrt %58 : vector<17x1xf32>
    %60 = vector.broadcast %59 : vector<17x1xf32> to vector<17x32xf32>
    %61 = arith.mulf %56, %60 : vector<17x32xf32>
    %62 = vector.broadcast %42 : vector<1x32xf32> to vector<17x32xf32>
    %63 = arith.mulf %61, %62 : vector<17x32xf32>
    %64 = vector.broadcast %43 : vector<1x32xf32> to vector<17x32xf32>
    %65 = arith.addf %63, %64 : vector<17x32xf32>
    %c0_31 = arith.constant 0 : index
    %c0_32 = arith.constant 0 : index
    %66 = vector.load %arg10[%c0_31, %c0_32] : memref<32x96xf32, #tpu.memory_space<vmem>>, vector<32x96xf32>
    %cst_33 = arith.constant dense<0.000000e+00> : vector<17x96xf32>
    %67 = tpu.matmul %65, %66, %cst_33 {dimension_numbers = #tpu.dot_dimension_numbers<[1], [0], [0], [1], [0, 0, 1, 1], [], []>} : vector<17x32xf32>, vector<32x96xf32>, vector<17x96xf32> -> vector<17x96xf32>
    %68 = vector.shape_cast %67 : vector<17x96xf32> to vector<1x17x96xf32>
    %69 = vector.extract_strided_slice %68 {offsets = [0, 0, 0], sizes = [1, 17, 8], strides = [1, 1, 1]} : vector<1x17x96xf32> to vector<1x17x8xf32>
    %70 = vector.extract_strided_slice %68 {offsets = [0, 0, 32], sizes = [1, 17, 8], strides = [1, 1, 1]} : vector<1x17x96xf32> to vector<1x17x8xf32>
    %71 = vector.extract_strided_slice %68 {offsets = [0, 0, 64], sizes = [1, 17, 8], strides = [1, 1, 1]} : vector<1x17x96xf32> to vector<1x17x8xf32>
    "tpu.trace_start"() <{level = 10 : i32, message = "bnd,bmd->bnm"}> : () -> ()
    %cst_34 = arith.constant dense<0.000000e+00> : vector<1x17x17xf32>
    %72 = tpu.matmul %69, %70, %cst_34 {dimension_numbers = #tpu.dot_dimension_numbers<[2], [2], [1], [1], [0, 0, 0, 1, 1, 1], [0], [0]>} : vector<1x17x8xf32>, vector<1x17x8xf32>, vector<1x17x17xf32> -> vector<1x17x17xf32>
    "tpu.trace_stop"() : () -> ()
    %73 = vector.broadcast %41 : f32 to vector<1x17x17xf32>
    %74 = arith.mulf %72, %73 : vector<1x17x17xf32>
    %cst_35 = arith.constant -1.000000e+30 : f32
    %75 = vector.broadcast %cst_35 : f32 to vector<1x17x17xf32>
    %76 = arith.select %40, %75, %74 : vector<1x17x17xi1>, vector<1x17x17xf32>
    %cst_36 = arith.constant dense<0xFF800000> : vector<1x17xf32>
    %77 = vector.multi_reduction <maximumf>, %76, %cst_36 [2] : vector<1x17x17xf32> to vector<1x17xf32>
    %78 = vector.shape_cast %77 : vector<1x17xf32> to vector<1x17x1xf32>
    %79 = vector.broadcast %78 : vector<1x17x1xf32> to vector<1x17x17xf32>
    %80 = arith.subf %76, %79 : vector<1x17x17xf32>
    %81 = math.exp %80 : vector<1x17x17xf32>
    %cst_37 = arith.constant dense<0.000000e+00> : vector<1x17xf32>
    %82 = vector.multi_reduction <add>, %81, %cst_37 [2] : vector<1x17x17xf32> to vector<1x17xf32>
    %83 = vector.shape_cast %82 : vector<1x17xf32> to vector<1x17x1xf32>
    %84 = tpu.reciprocal %83 {approx = true} : vector<1x17x1xf32> -> vector<1x17x1xf32>
    %85 = vector.broadcast %84 : vector<1x17x1xf32> to vector<1x17x17xf32>
    %86 = arith.mulf %81, %85 : vector<1x17x17xf32>
    "tpu.trace_start"() <{level = 10 : i32, message = "bnm,bmd->bnd"}> : () -> ()
    %cst_38 = arith.constant dense<0.000000e+00> : vector<1x17x8xf32>
    %87 = tpu.matmul %86, %71, %cst_38 {dimension_numbers = #tpu.dot_dimension_numbers<[2], [1], [1], [2], [0, 0, 0, 1, 1, 2], [0], [0]>} : vector<1x17x17xf32>, vector<1x17x8xf32>, vector<1x17x8xf32> -> vector<1x17x8xf32>
    "tpu.trace_stop"() : () -> ()
    %88 = vector.extract_strided_slice %68 {offsets = [0, 0, 8], sizes = [1, 17, 8], strides = [1, 1, 1]} : vector<1x17x96xf32> to vector<1x17x8xf32>
    %89 = vector.extract_strided_slice %68 {offsets = [0, 0, 40], sizes = [1, 17, 8], strides = [1, 1, 1]} : vector<1x17x96xf32> to vector<1x17x8xf32>
    %90 = vector.extract_strided_slice %68 {offsets = [0, 0, 72], sizes = [1, 17, 8], strides = [1, 1, 1]} : vector<1x17x96xf32> to vector<1x17x8xf32>
    "tpu.trace_start"() <{level = 10 : i32, message = "bnd,bmd->bnm"}> : () -> ()
    %cst_39 = arith.constant dense<0.000000e+00> : vector<1x17x17xf32>
    %91 = tpu.matmul %88, %89, %cst_39 {dimension_numbers = #tpu.dot_dimension_numbers<[2], [2], [1], [1], [0, 0, 0, 1, 1, 1], [0], [0]>} : vector<1x17x8xf32>, vector<1x17x8xf32>, vector<1x17x17xf32> -> vector<1x17x17xf32>
    "tpu.trace_stop"() : () -> ()
    %92 = vector.broadcast %41 : f32 to vector<1x17x17xf32>
    %93 = arith.mulf %91, %92 : vector<1x17x17xf32>
    %cst_40 = arith.constant -1.000000e+30 : f32
    %94 = vector.broadcast %cst_40 : f32 to vector<1x17x17xf32>
    %95 = arith.select %40, %94, %93 : vector<1x17x17xi1>, vector<1x17x17xf32>
    %cst_41 = arith.constant dense<0xFF800000> : vector<1x17xf32>
    %96 = vector.multi_reduction <maximumf>, %95, %cst_41 [2] : vector<1x17x17xf32> to vector<1x17xf32>
    %97 = vector.shape_cast %96 : vector<1x17xf32> to vector<1x17x1xf32>
    %98 = vector.broadcast %97 : vector<1x17x1xf32> to vector<1x17x17xf32>
    %99 = arith.subf %95, %98 : vector<1x17x17xf32>
    %100 = math.exp %99 : vector<1x17x17xf32>
    %cst_42 = arith.constant dense<0.000000e+00> : vector<1x17xf32>
    %101 = vector.multi_reduction <add>, %100, %cst_42 [2] : vector<1x17x17xf32> to vector<1x17xf32>
    %102 = vector.shape_cast %101 : vector<1x17xf32> to vector<1x17x1xf32>
    %103 = tpu.reciprocal %102 {approx = true} : vector<1x17x1xf32> -> vector<1x17x1xf32>
    %104 = vector.broadcast %103 : vector<1x17x1xf32> to vector<1x17x17xf32>
    %105 = arith.mulf %100, %104 : vector<1x17x17xf32>
    "tpu.trace_start"() <{level = 10 : i32, message = "bnm,bmd->bnd"}> : () -> ()
    %cst_43 = arith.constant dense<0.000000e+00> : vector<1x17x8xf32>
    %106 = tpu.matmul %105, %90, %cst_43 {dimension_numbers = #tpu.dot_dimension_numbers<[2], [1], [1], [2], [0, 0, 0, 1, 1, 2], [0], [0]>} : vector<1x17x17xf32>, vector<1x17x8xf32>, vector<1x17x8xf32> -> vector<1x17x8xf32>
    "tpu.trace_stop"() : () -> ()
    %107 = vector.extract_strided_slice %68 {offsets = [0, 0, 16], sizes = [1, 17, 8], strides = [1, 1, 1]} : vector<1x17x96xf32> to vector<1x17x8xf32>
    %108 = vector.extract_strided_slice %68 {offsets = [0, 0, 48], sizes = [1, 17, 8], strides = [1, 1, 1]} : vector<1x17x96xf32> to vector<1x17x8xf32>
    %109 = vector.extract_strided_slice %68 {offsets = [0, 0, 80], sizes = [1, 17, 8], strides = [1, 1, 1]} : vector<1x17x96xf32> to vector<1x17x8xf32>
    "tpu.trace_start"() <{level = 10 : i32, message = "bnd,bmd->bnm"}> : () -> ()
    %cst_44 = arith.constant dense<0.000000e+00> : vector<1x17x17xf32>
    %110 = tpu.matmul %107, %108, %cst_44 {dimension_numbers = #tpu.dot_dimension_numbers<[2], [2], [1], [1], [0, 0, 0, 1, 1, 1], [0], [0]>} : vector<1x17x8xf32>, vector<1x17x8xf32>, vector<1x17x17xf32> -> vector<1x17x17xf32>
    "tpu.trace_stop"() : () -> ()
    %111 = vector.broadcast %41 : f32 to vector<1x17x17xf32>
    %112 = arith.mulf %110, %111 : vector<1x17x17xf32>
    %cst_45 = arith.constant -1.000000e+30 : f32
    %113 = vector.broadcast %cst_45 : f32 to vector<1x17x17xf32>
    %114 = arith.select %40, %113, %112 : vector<1x17x17xi1>, vector<1x17x17xf32>
    %cst_46 = arith.constant dense<0xFF800000> : vector<1x17xf32>
    %115 = vector.multi_reduction <maximumf>, %114, %cst_46 [2] : vector<1x17x17xf32> to vector<1x17xf32>
    %116 = vector.shape_cast %115 : vector<1x17xf32> to vector<1x17x1xf32>
    %117 = vector.broadcast %116 : vector<1x17x1xf32> to vector<1x17x17xf32>
    %118 = arith.subf %114, %117 : vector<1x17x17xf32>
    %119 = math.exp %118 : vector<1x17x17xf32>
    %cst_47 = arith.constant dense<0.000000e+00> : vector<1x17xf32>
    %120 = vector.multi_reduction <add>, %119, %cst_47 [2] : vector<1x17x17xf32> to vector<1x17xf32>
    %121 = vector.shape_cast %120 : vector<1x17xf32> to vector<1x17x1xf32>
    %122 = tpu.reciprocal %121 {approx = true} : vector<1x17x1xf32> -> vector<1x17x1xf32>
    %123 = vector.broadcast %122 : vector<1x17x1xf32> to vector<1x17x17xf32>
    %124 = arith.mulf %119, %123 : vector<1x17x17xf32>
    "tpu.trace_start"() <{level = 10 : i32, message = "bnm,bmd->bnd"}> : () -> ()
    %cst_48 = arith.constant dense<0.000000e+00> : vector<1x17x8xf32>
    %125 = tpu.matmul %124, %109, %cst_48 {dimension_numbers = #tpu.dot_dimension_numbers<[2], [1], [1], [2], [0, 0, 0, 1, 1, 2], [0], [0]>} : vector<1x17x17xf32>, vector<1x17x8xf32>, vector<1x17x8xf32> -> vector<1x17x8xf32>
    "tpu.trace_stop"() : () -> ()
    %126 = vector.extract_strided_slice %68 {offsets = [0, 0, 24], sizes = [1, 17, 8], strides = [1, 1, 1]} : vector<1x17x96xf32> to vector<1x17x8xf32>
    %127 = vector.extract_strided_slice %68 {offsets = [0, 0, 56], sizes = [1, 17, 8], strides = [1, 1, 1]} : vector<1x17x96xf32> to vector<1x17x8xf32>
    %128 = vector.extract_strided_slice %68 {offsets = [0, 0, 88], sizes = [1, 17, 8], strides = [1, 1, 1]} : vector<1x17x96xf32> to vector<1x17x8xf32>
    "tpu.trace_start"() <{level = 10 : i32, message = "bnd,bmd->bnm"}> : () -> ()
    %cst_49 = arith.constant dense<0.000000e+00> : vector<1x17x17xf32>
    %129 = tpu.matmul %126, %127, %cst_49 {dimension_numbers = #tpu.dot_dimension_numbers<[2], [2], [1], [1], [0, 0, 0, 1, 1, 1], [0], [0]>} : vector<1x17x8xf32>, vector<1x17x8xf32>, vector<1x17x17xf32> -> vector<1x17x17xf32>
    "tpu.trace_stop"() : () -> ()
    %130 = vector.broadcast %41 : f32 to vector<1x17x17xf32>
    %131 = arith.mulf %129, %130 : vector<1x17x17xf32>
    %cst_50 = arith.constant -1.000000e+30 : f32
    %132 = vector.broadcast %cst_50 : f32 to vector<1x17x17xf32>
    %133 = arith.select %40, %132, %131 : vector<1x17x17xi1>, vector<1x17x17xf32>
    %cst_51 = arith.constant dense<0xFF800000> : vector<1x17xf32>
    %134 = vector.multi_reduction <maximumf>, %133, %cst_51 [2] : vector<1x17x17xf32> to vector<1x17xf32>
    %135 = vector.shape_cast %134 : vector<1x17xf32> to vector<1x17x1xf32>
    %136 = vector.broadcast %135 : vector<1x17x1xf32> to vector<1x17x17xf32>
    %137 = arith.subf %133, %136 : vector<1x17x17xf32>
    %138 = math.exp %137 : vector<1x17x17xf32>
    %cst_52 = arith.constant dense<0.000000e+00> : vector<1x17xf32>
    %139 = vector.multi_reduction <add>, %138, %cst_52 [2] : vector<1x17x17xf32> to vector<1x17xf32>
    %140 = vector.shape_cast %139 : vector<1x17xf32> to vector<1x17x1xf32>
    %141 = tpu.reciprocal %140 {approx = true} : vector<1x17x1xf32> -> vector<1x17x1xf32>
    %142 = vector.broadcast %141 : vector<1x17x1xf32> to vector<1x17x17xf32>
    %143 = arith.mulf %138, %142 : vector<1x17x17xf32>
    "tpu.trace_start"() <{level = 10 : i32, message = "bnm,bmd->bnd"}> : () -> ()
    %cst_53 = arith.constant dense<0.000000e+00> : vector<1x17x8xf32>
    %144 = tpu.matmul %143, %128, %cst_53 {dimension_numbers = #tpu.dot_dimension_numbers<[2], [1], [1], [2], [0, 0, 0, 1, 1, 2], [0], [0]>} : vector<1x17x17xf32>, vector<1x17x8xf32>, vector<1x17x8xf32> -> vector<1x17x8xf32>
    "tpu.trace_stop"() : () -> ()
    %145 = tpu.concatenate %87, %106, %125, %144 in 2 : vector<1x17x8xf32>, vector<1x17x8xf32>, vector<1x17x8xf32>, vector<1x17x8xf32> -> vector<1x17x32xf32>
    %146 = vector.shape_cast %145 : vector<1x17x32xf32> to vector<17x32xf32>
    %c0_54 = arith.constant 0 : index
    %c0_55 = arith.constant 0 : index
    %147 = vector.load %arg11[%c0_54, %c0_55] : memref<32x32xf32, #tpu.memory_space<vmem>>, vector<32x32xf32>
    %cst_56 = arith.constant dense<0.000000e+00> : vector<17x32xf32>
    %148 = tpu.matmul %146, %147, %cst_56 {dimension_numbers = #tpu.dot_dimension_numbers<[1], [0], [0], [1], [0, 0, 1, 1], [], []>} : vector<17x32xf32>, vector<32x32xf32>, vector<17x32xf32> -> vector<17x32xf32>
    %c0_57 = arith.constant 0 : index
    %c0_58 = arith.constant 0 : index
    %149 = vector.load %arg12[%c0_57, %c0_58] : memref<1x32xf32, #tpu.memory_space<vmem>>, vector<1x32xf32>
    %150 = vector.broadcast %149 : vector<1x32xf32> to vector<17x32xf32>
    %151 = arith.addf %148, %150 : vector<17x32xf32>
    %152 = arith.addf %36, %151 : vector<17x32xf32>
    %c0_59 = arith.constant 0 : index
    %c0_60 = arith.constant 0 : index
    %153 = vector.load %arg13[%c0_59, %c0_60] : memref<1x32xf32, #tpu.memory_space<vmem>>, vector<1x32xf32>
    %c0_61 = arith.constant 0 : index
    %c0_62 = arith.constant 0 : index
    %154 = vector.load %arg14[%c0_61, %c0_62] : memref<1x32xf32, #tpu.memory_space<vmem>>, vector<1x32xf32>
    %cst_63 = arith.constant dense<0.000000e+00> : vector<17xf32>
    %155 = vector.multi_reduction <add>, %152, %cst_63 [1] : vector<17x32xf32> to vector<17xf32>
    %156 = vector.shape_cast %155 : vector<17xf32> to vector<17x1xf32>
    %cst_64 = arith.constant 3.200000e+01 : f32
    %157 = vector.broadcast %cst_64 : f32 to vector<17x1xf32>
    %158 = arith.divf %156, %157 : vector<17x1xf32>
    %159 = vector.broadcast %158 : vector<17x1xf32> to vector<17x32xf32>
    %160 = arith.subf %152, %159 : vector<17x32xf32>
    %161 = arith.mulf %160, %160 : vector<17x32xf32>
    %cst_65 = arith.constant dense<0.000000e+00> : vector<17xf32>
    %162 = vector.multi_reduction <add>, %161, %cst_65 [1] : vector<17x32xf32> to vector<17xf32>
    %163 = vector.shape_cast %162 : vector<17xf32> to vector<17x1xf32>
    %cst_66 = arith.constant 3.200000e+01 : f32
    %164 = vector.broadcast %cst_66 : f32 to vector<17x1xf32>
    %165 = arith.divf %163, %164 : vector<17x1xf32>
    %166 = vector.broadcast %158 : vector<17x1xf32> to vector<17x32xf32>
    %167 = arith.subf %152, %166 : vector<17x32xf32>
    %cst_67 = arith.constant 9.99999974E-6 : f32
    %168 = vector.broadcast %cst_67 : f32 to vector<17x1xf32>
    %169 = arith.addf %165, %168 : vector<17x1xf32>
    %170 = math.rsqrt %169 : vector<17x1xf32>
    %171 = vector.broadcast %170 : vector<17x1xf32> to vector<17x32xf32>
    %172 = arith.mulf %167, %171 : vector<17x32xf32>
    %173 = vector.broadcast %153 : vector<1x32xf32> to vector<17x32xf32>
    %174 = arith.mulf %172, %173 : vector<17x32xf32>
    %175 = vector.broadcast %154 : vector<1x32xf32> to vector<17x32xf32>
    %176 = arith.addf %174, %175 : vector<17x32xf32>
    %c0_68 = arith.constant 0 : index
    %c0_69 = arith.constant 0 : index
    %177 = vector.load %arg15[%c0_68, %c0_69] : memref<32x64xf32, #tpu.memory_space<vmem>>, vector<32x64xf32>
    %cst_70 = arith.constant dense<0.000000e+00> : vector<17x64xf32>
    %178 = tpu.matmul %176, %177, %cst_70 {dimension_numbers = #tpu.dot_dimension_numbers<[1], [0], [0], [1], [0, 0, 1, 1], [], []>} : vector<17x32xf32>, vector<32x64xf32>, vector<17x64xf32> -> vector<17x64xf32>
    %c0_71 = arith.constant 0 : index
    %c0_72 = arith.constant 0 : index
    %179 = vector.load %arg16[%c0_71, %c0_72] : memref<1x64xf32, #tpu.memory_space<vmem>>, vector<1x64xf32>
    %180 = vector.broadcast %179 : vector<1x64xf32> to vector<17x64xf32>
    %181 = arith.addf %178, %180 : vector<17x64xf32>
    %cst_73 = arith.constant 5.000000e-01 : f32
    %182 = vector.broadcast %cst_73 : f32 to vector<17x64xf32>
    %183 = arith.mulf %182, %181 : vector<17x64xf32>
    %cst_74 = arith.constant 0.707106769 : f32
    %184 = vector.broadcast %cst_74 : f32 to vector<17x64xf32>
    %185 = arith.mulf %181, %184 : vector<17x64xf32>
    %186 = math.erf %185 : vector<17x64xf32>
    %cst_75 = arith.constant 1.000000e+00 : f32
    %187 = vector.broadcast %cst_75 : f32 to vector<17x64xf32>
    %188 = arith.addf %187, %186 : vector<17x64xf32>
    %189 = arith.mulf %183, %188 : vector<17x64xf32>
    %c0_76 = arith.constant 0 : index
    %c0_77 = arith.constant 0 : index
    %190 = vector.load %arg17[%c0_76, %c0_77] : memref<64x32xf32, #tpu.memory_space<vmem>>, vector<64x32xf32>
    %cst_78 = arith.constant dense<0.000000e+00> : vector<17x32xf32>
    %191 = tpu.matmul %189, %190, %cst_78 {dimension_numbers = #tpu.dot_dimension_numbers<[1], [0], [0], [1], [0, 0, 1, 1], [], []>} : vector<17x64xf32>, vector<64x32xf32>, vector<17x32xf32> -> vector<17x32xf32>
    %c0_79 = arith.constant 0 : index
    %c0_80 = arith.constant 0 : index
    %192 = vector.load %arg18[%c0_79, %c0_80] : memref<1x32xf32, #tpu.memory_space<vmem>>, vector<1x32xf32>
    %193 = vector.broadcast %192 : vector<1x32xf32> to vector<17x32xf32>
    %194 = arith.addf %191, %193 : vector<17x32xf32>
    %195 = arith.addf %152, %194 : vector<17x32xf32>
    %c1 = arith.constant 1 : index
    %196 = memref.load %arg34[%c1] : memref<2xf32, #tpu.memory_space<smem>>
    %c0_81 = arith.constant 0 : index
    %c0_82 = arith.constant 0 : index
    %197 = vector.load %arg19[%c0_81, %c0_82] : memref<1x32xf32, #tpu.memory_space<vmem>>, vector<1x32xf32>
    %c0_83 = arith.constant 0 : index
    %c0_84 = arith.constant 0 : index
    %198 = vector.load %arg20[%c0_83, %c0_84] : memref<1x32xf32, #tpu.memory_space<vmem>>, vector<1x32xf32>
    %cst_85 = arith.constant dense<0.000000e+00> : vector<17xf32>
    %199 = vector.multi_reduction <add>, %195, %cst_85 [1] : vector<17x32xf32> to vector<17xf32>
    %200 = vector.shape_cast %199 : vector<17xf32> to vector<17x1xf32>
    %cst_86 = arith.constant 3.200000e+01 : f32
    %201 = vector.broadcast %cst_86 : f32 to vector<17x1xf32>
    %202 = arith.divf %200, %201 : vector<17x1xf32>
    %203 = vector.broadcast %202 : vector<17x1xf32> to vector<17x32xf32>
    %204 = arith.subf %195, %203 : vector<17x32xf32>
    %205 = arith.mulf %204, %204 : vector<17x32xf32>
    %cst_87 = arith.constant dense<0.000000e+00> : vector<17xf32>
    %206 = vector.multi_reduction <add>, %205, %cst_87 [1] : vector<17x32xf32> to vector<17xf32>
    %207 = vector.shape_cast %206 : vector<17xf32> to vector<17x1xf32>
    %cst_88 = arith.constant 3.200000e+01 : f32
    %208 = vector.broadcast %cst_88 : f32 to vector<17x1xf32>
    %209 = arith.divf %207, %208 : vector<17x1xf32>
    %210 = vector.broadcast %202 : vector<17x1xf32> to vector<17x32xf32>
    %211 = arith.subf %195, %210 : vector<17x32xf32>
    %cst_89 = arith.constant 9.99999974E-6 : f32
    %212 = vector.broadcast %cst_89 : f32 to vector<17x1xf32>
    %213 = arith.addf %209, %212 : vector<17x1xf32>
    %214 = math.rsqrt %213 : vector<17x1xf32>
    %215 = vector.broadcast %214 : vector<17x1xf32> to vector<17x32xf32>
    %216 = arith.mulf %211, %215 : vector<17x32xf32>
    %217 = vector.broadcast %197 : vector<1x32xf32> to vector<17x32xf32>
    %218 = arith.mulf %216, %217 : vector<17x32xf32>
    %219 = vector.broadcast %198 : vector<1x32xf32> to vector<17x32xf32>
    %220 = arith.addf %218, %219 : vector<17x32xf32>
    %c0_90 = arith.constant 0 : index
    %c0_91 = arith.constant 0 : index
    %221 = vector.load %arg21[%c0_90, %c0_91] : memref<32x96xf32, #tpu.memory_space<vmem>>, vector<32x96xf32>
    %cst_92 = arith.constant dense<0.000000e+00> : vector<17x96xf32>
    %222 = tpu.matmul %220, %221, %cst_92 {dimension_numbers = #tpu.dot_dimension_numbers<[1], [0], [0], [1], [0, 0, 1, 1], [], []>} : vector<17x32xf32>, vector<32x96xf32>, vector<17x96xf32> -> vector<17x96xf32>
    %223 = vector.shape_cast %222 : vector<17x96xf32> to vector<1x17x96xf32>
    %224 = vector.extract_strided_slice %223 {offsets = [0, 0, 0], sizes = [1, 17, 8], strides = [1, 1, 1]} : vector<1x17x96xf32> to vector<1x17x8xf32>
    %225 = vector.extract_strided_slice %223 {offsets = [0, 0, 32], sizes = [1, 17, 8], strides = [1, 1, 1]} : vector<1x17x96xf32> to vector<1x17x8xf32>
    %226 = vector.extract_strided_slice %223 {offsets = [0, 0, 64], sizes = [1, 17, 8], strides = [1, 1, 1]} : vector<1x17x96xf32> to vector<1x17x8xf32>
    "tpu.trace_start"() <{level = 10 : i32, message = "bnd,bmd->bnm"}> : () -> ()
    %cst_93 = arith.constant dense<0.000000e+00> : vector<1x17x17xf32>
    %227 = tpu.matmul %224, %225, %cst_93 {dimension_numbers = #tpu.dot_dimension_numbers<[2], [2], [1], [1], [0, 0, 0, 1, 1, 1], [0], [0]>} : vector<1x17x8xf32>, vector<1x17x8xf32>, vector<1x17x17xf32> -> vector<1x17x17xf32>
    "tpu.trace_stop"() : () -> ()
    %228 = vector.broadcast %196 : f32 to vector<1x17x17xf32>
    %229 = arith.mulf %227, %228 : vector<1x17x17xf32>
    %cst_94 = arith.constant -1.000000e+30 : f32
    %230 = vector.broadcast %cst_94 : f32 to vector<1x17x17xf32>
    %231 = arith.select %40, %230, %229 : vector<1x17x17xi1>, vector<1x17x17xf32>
    %cst_95 = arith.constant dense<0xFF800000> : vector<1x17xf32>
    %232 = vector.multi_reduction <maximumf>, %231, %cst_95 [2] : vector<1x17x17xf32> to vector<1x17xf32>
    %233 = vector.shape_cast %232 : vector<1x17xf32> to vector<1x17x1xf32>
    %234 = vector.broadcast %233 : vector<1x17x1xf32> to vector<1x17x17xf32>
    %235 = arith.subf %231, %234 : vector<1x17x17xf32>
    %236 = math.exp %235 : vector<1x17x17xf32>
    %cst_96 = arith.constant dense<0.000000e+00> : vector<1x17xf32>
    %237 = vector.multi_reduction <add>, %236, %cst_96 [2] : vector<1x17x17xf32> to vector<1x17xf32>
    %238 = vector.shape_cast %237 : vector<1x17xf32> to vector<1x17x1xf32>
    %239 = tpu.reciprocal %238 {approx = true} : vector<1x17x1xf32> -> vector<1x17x1xf32>
    %240 = vector.broadcast %239 : vector<1x17x1xf32> to vector<1x17x17xf32>
    %241 = arith.mulf %236, %240 : vector<1x17x17xf32>
    "tpu.trace_start"() <{level = 10 : i32, message = "bnm,bmd->bnd"}> : () -> ()
    %cst_97 = arith.constant dense<0.000000e+00> : vector<1x17x8xf32>
    %242 = tpu.matmul %241, %226, %cst_97 {dimension_numbers = #tpu.dot_dimension_numbers<[2], [1], [1], [2], [0, 0, 0, 1, 1, 2], [0], [0]>} : vector<1x17x17xf32>, vector<1x17x8xf32>, vector<1x17x8xf32> -> vector<1x17x8xf32>
    "tpu.trace_stop"() : () -> ()
    %243 = vector.extract_strided_slice %223 {offsets = [0, 0, 8], sizes = [1, 17, 8], strides = [1, 1, 1]} : vector<1x17x96xf32> to vector<1x17x8xf32>
    %244 = vector.extract_strided_slice %223 {offsets = [0, 0, 40], sizes = [1, 17, 8], strides = [1, 1, 1]} : vector<1x17x96xf32> to vector<1x17x8xf32>
    %245 = vector.extract_strided_slice %223 {offsets = [0, 0, 72], sizes = [1, 17, 8], strides = [1, 1, 1]} : vector<1x17x96xf32> to vector<1x17x8xf32>
    "tpu.trace_start"() <{level = 10 : i32, message = "bnd,bmd->bnm"}> : () -> ()
    %cst_98 = arith.constant dense<0.000000e+00> : vector<1x17x17xf32>
    %246 = tpu.matmul %243, %244, %cst_98 {dimension_numbers = #tpu.dot_dimension_numbers<[2], [2], [1], [1], [0, 0, 0, 1, 1, 1], [0], [0]>} : vector<1x17x8xf32>, vector<1x17x8xf32>, vector<1x17x17xf32> -> vector<1x17x17xf32>
    "tpu.trace_stop"() : () -> ()
    %247 = vector.broadcast %196 : f32 to vector<1x17x17xf32>
    %248 = arith.mulf %246, %247 : vector<1x17x17xf32>
    %cst_99 = arith.constant -1.000000e+30 : f32
    %249 = vector.broadcast %cst_99 : f32 to vector<1x17x17xf32>
    %250 = arith.select %40, %249, %248 : vector<1x17x17xi1>, vector<1x17x17xf32>
    %cst_100 = arith.constant dense<0xFF800000> : vector<1x17xf32>
    %251 = vector.multi_reduction <maximumf>, %250, %cst_100 [2] : vector<1x17x17xf32> to vector<1x17xf32>
    %252 = vector.shape_cast %251 : vector<1x17xf32> to vector<1x17x1xf32>
    %253 = vector.broadcast %252 : vector<1x17x1xf32> to vector<1x17x17xf32>
    %254 = arith.subf %250, %253 : vector<1x17x17xf32>
    %255 = math.exp %254 : vector<1x17x17xf32>
    %cst_101 = arith.constant dense<0.000000e+00> : vector<1x17xf32>
    %256 = vector.multi_reduction <add>, %255, %cst_101 [2] : vector<1x17x17xf32> to vector<1x17xf32>
    %257 = vector.shape_cast %256 : vector<1x17xf32> to vector<1x17x1xf32>
    %258 = tpu.reciprocal %257 {approx = true} : vector<1x17x1xf32> -> vector<1x17x1xf32>
    %259 = vector.broadcast %258 : vector<1x17x1xf32> to vector<1x17x17xf32>
    %260 = arith.mulf %255, %259 : vector<1x17x17xf32>
    "tpu.trace_start"() <{level = 10 : i32, message = "bnm,bmd->bnd"}> : () -> ()
    %cst_102 = arith.constant dense<0.000000e+00> : vector<1x17x8xf32>
    %261 = tpu.matmul %260, %245, %cst_102 {dimension_numbers = #tpu.dot_dimension_numbers<[2], [1], [1], [2], [0, 0, 0, 1, 1, 2], [0], [0]>} : vector<1x17x17xf32>, vector<1x17x8xf32>, vector<1x17x8xf32> -> vector<1x17x8xf32>
    "tpu.trace_stop"() : () -> ()
    %262 = vector.extract_strided_slice %223 {offsets = [0, 0, 16], sizes = [1, 17, 8], strides = [1, 1, 1]} : vector<1x17x96xf32> to vector<1x17x8xf32>
    %263 = vector.extract_strided_slice %223 {offsets = [0, 0, 48], sizes = [1, 17, 8], strides = [1, 1, 1]} : vector<1x17x96xf32> to vector<1x17x8xf32>
    %264 = vector.extract_strided_slice %223 {offsets = [0, 0, 80], sizes = [1, 17, 8], strides = [1, 1, 1]} : vector<1x17x96xf32> to vector<1x17x8xf32>
    "tpu.trace_start"() <{level = 10 : i32, message = "bnd,bmd->bnm"}> : () -> ()
    %cst_103 = arith.constant dense<0.000000e+00> : vector<1x17x17xf32>
    %265 = tpu.matmul %262, %263, %cst_103 {dimension_numbers = #tpu.dot_dimension_numbers<[2], [2], [1], [1], [0, 0, 0, 1, 1, 1], [0], [0]>} : vector<1x17x8xf32>, vector<1x17x8xf32>, vector<1x17x17xf32> -> vector<1x17x17xf32>
    "tpu.trace_stop"() : () -> ()
    %266 = vector.broadcast %196 : f32 to vector<1x17x17xf32>
    %267 = arith.mulf %265, %266 : vector<1x17x17xf32>
    %cst_104 = arith.constant -1.000000e+30 : f32
    %268 = vector.broadcast %cst_104 : f32 to vector<1x17x17xf32>
    %269 = arith.select %40, %268, %267 : vector<1x17x17xi1>, vector<1x17x17xf32>
    %cst_105 = arith.constant dense<0xFF800000> : vector<1x17xf32>
    %270 = vector.multi_reduction <maximumf>, %269, %cst_105 [2] : vector<1x17x17xf32> to vector<1x17xf32>
    %271 = vector.shape_cast %270 : vector<1x17xf32> to vector<1x17x1xf32>
    %272 = vector.broadcast %271 : vector<1x17x1xf32> to vector<1x17x17xf32>
    %273 = arith.subf %269, %272 : vector<1x17x17xf32>
    %274 = math.exp %273 : vector<1x17x17xf32>
    %cst_106 = arith.constant dense<0.000000e+00> : vector<1x17xf32>
    %275 = vector.multi_reduction <add>, %274, %cst_106 [2] : vector<1x17x17xf32> to vector<1x17xf32>
    %276 = vector.shape_cast %275 : vector<1x17xf32> to vector<1x17x1xf32>
    %277 = tpu.reciprocal %276 {approx = true} : vector<1x17x1xf32> -> vector<1x17x1xf32>
    %278 = vector.broadcast %277 : vector<1x17x1xf32> to vector<1x17x17xf32>
    %279 = arith.mulf %274, %278 : vector<1x17x17xf32>
    "tpu.trace_start"() <{level = 10 : i32, message = "bnm,bmd->bnd"}> : () -> ()
    %cst_107 = arith.constant dense<0.000000e+00> : vector<1x17x8xf32>
    %280 = tpu.matmul %279, %264, %cst_107 {dimension_numbers = #tpu.dot_dimension_numbers<[2], [1], [1], [2], [0, 0, 0, 1, 1, 2], [0], [0]>} : vector<1x17x17xf32>, vector<1x17x8xf32>, vector<1x17x8xf32> -> vector<1x17x8xf32>
    "tpu.trace_stop"() : () -> ()
    %281 = vector.extract_strided_slice %223 {offsets = [0, 0, 24], sizes = [1, 17, 8], strides = [1, 1, 1]} : vector<1x17x96xf32> to vector<1x17x8xf32>
    %282 = vector.extract_strided_slice %223 {offsets = [0, 0, 56], sizes = [1, 17, 8], strides = [1, 1, 1]} : vector<1x17x96xf32> to vector<1x17x8xf32>
    %283 = vector.extract_strided_slice %223 {offsets = [0, 0, 88], sizes = [1, 17, 8], strides = [1, 1, 1]} : vector<1x17x96xf32> to vector<1x17x8xf32>
    "tpu.trace_start"() <{level = 10 : i32, message = "bnd,bmd->bnm"}> : () -> ()
    %cst_108 = arith.constant dense<0.000000e+00> : vector<1x17x17xf32>
    %284 = tpu.matmul %281, %282, %cst_108 {dimension_numbers = #tpu.dot_dimension_numbers<[2], [2], [1], [1], [0, 0, 0, 1, 1, 1], [0], [0]>} : vector<1x17x8xf32>, vector<1x17x8xf32>, vector<1x17x17xf32> -> vector<1x17x17xf32>
    "tpu.trace_stop"() : () -> ()
    %285 = vector.broadcast %196 : f32 to vector<1x17x17xf32>
    %286 = arith.mulf %284, %285 : vector<1x17x17xf32>
    %cst_109 = arith.constant -1.000000e+30 : f32
    %287 = vector.broadcast %cst_109 : f32 to vector<1x17x17xf32>
    %288 = arith.select %40, %287, %286 : vector<1x17x17xi1>, vector<1x17x17xf32>
    %cst_110 = arith.constant dense<0xFF800000> : vector<1x17xf32>
    %289 = vector.multi_reduction <maximumf>, %288, %cst_110 [2] : vector<1x17x17xf32> to vector<1x17xf32>
    %290 = vector.shape_cast %289 : vector<1x17xf32> to vector<1x17x1xf32>
    %291 = vector.broadcast %290 : vector<1x17x1xf32> to vector<1x17x17xf32>
    %292 = arith.subf %288, %291 : vector<1x17x17xf32>
    %293 = math.exp %292 : vector<1x17x17xf32>
    %cst_111 = arith.constant dense<0.000000e+00> : vector<1x17xf32>
    %294 = vector.multi_reduction <add>, %293, %cst_111 [2] : vector<1x17x17xf32> to vector<1x17xf32>
    %295 = vector.shape_cast %294 : vector<1x17xf32> to vector<1x17x1xf32>
    %296 = tpu.reciprocal %295 {approx = true} : vector<1x17x1xf32> -> vector<1x17x1xf32>
    %297 = vector.broadcast %296 : vector<1x17x1xf32> to vector<1x17x17xf32>
    %298 = arith.mulf %293, %297 : vector<1x17x17xf32>
    "tpu.trace_start"() <{level = 10 : i32, message = "bnm,bmd->bnd"}> : () -> ()
    %cst_112 = arith.constant dense<0.000000e+00> : vector<1x17x8xf32>
    %299 = tpu.matmul %298, %283, %cst_112 {dimension_numbers = #tpu.dot_dimension_numbers<[2], [1], [1], [2], [0, 0, 0, 1, 1, 2], [0], [0]>} : vector<1x17x17xf32>, vector<1x17x8xf32>, vector<1x17x8xf32> -> vector<1x17x8xf32>
    "tpu.trace_stop"() : () -> ()
    %300 = tpu.concatenate %242, %261, %280, %299 in 2 : vector<1x17x8xf32>, vector<1x17x8xf32>, vector<1x17x8xf32>, vector<1x17x8xf32> -> vector<1x17x32xf32>
    %301 = vector.shape_cast %300 : vector<1x17x32xf32> to vector<17x32xf32>
    %c0_113 = arith.constant 0 : index
    %c0_114 = arith.constant 0 : index
    %302 = vector.load %arg22[%c0_113, %c0_114] : memref<32x32xf32, #tpu.memory_space<vmem>>, vector<32x32xf32>
    %cst_115 = arith.constant dense<0.000000e+00> : vector<17x32xf32>
    %303 = tpu.matmul %301, %302, %cst_115 {dimension_numbers = #tpu.dot_dimension_numbers<[1], [0], [0], [1], [0, 0, 1, 1], [], []>} : vector<17x32xf32>, vector<32x32xf32>, vector<17x32xf32> -> vector<17x32xf32>
    %c0_116 = arith.constant 0 : index
    %c0_117 = arith.constant 0 : index
    %304 = vector.load %arg23[%c0_116, %c0_117] : memref<1x32xf32, #tpu.memory_space<vmem>>, vector<1x32xf32>
    %305 = vector.broadcast %304 : vector<1x32xf32> to vector<17x32xf32>
    %306 = arith.addf %303, %305 : vector<17x32xf32>
    %307 = arith.addf %195, %306 : vector<17x32xf32>
    %c0_118 = arith.constant 0 : index
    %c0_119 = arith.constant 0 : index
    %308 = vector.load %arg24[%c0_118, %c0_119] : memref<1x32xf32, #tpu.memory_space<vmem>>, vector<1x32xf32>
    %c0_120 = arith.constant 0 : index
    %c0_121 = arith.constant 0 : index
    %309 = vector.load %arg25[%c0_120, %c0_121] : memref<1x32xf32, #tpu.memory_space<vmem>>, vector<1x32xf32>
    %cst_122 = arith.constant dense<0.000000e+00> : vector<17xf32>
    %310 = vector.multi_reduction <add>, %307, %cst_122 [1] : vector<17x32xf32> to vector<17xf32>
    %311 = vector.shape_cast %310 : vector<17xf32> to vector<17x1xf32>
    %cst_123 = arith.constant 3.200000e+01 : f32
    %312 = vector.broadcast %cst_123 : f32 to vector<17x1xf32>
    %313 = arith.divf %311, %312 : vector<17x1xf32>
    %314 = vector.broadcast %313 : vector<17x1xf32> to vector<17x32xf32>
    %315 = arith.subf %307, %314 : vector<17x32xf32>
    %316 = arith.mulf %315, %315 : vector<17x32xf32>
    %cst_124 = arith.constant dense<0.000000e+00> : vector<17xf32>
    %317 = vector.multi_reduction <add>, %316, %cst_124 [1] : vector<17x32xf32> to vector<17xf32>
    %318 = vector.shape_cast %317 : vector<17xf32> to vector<17x1xf32>
    %cst_125 = arith.constant 3.200000e+01 : f32
    %319 = vector.broadcast %cst_125 : f32 to vector<17x1xf32>
    %320 = arith.divf %318, %319 : vector<17x1xf32>
    %321 = vector.broadcast %313 : vector<17x1xf32> to vector<17x32xf32>
    %322 = arith.subf %307, %321 : vector<17x32xf32>
    %cst_126 = arith.constant 9.99999974E-6 : f32
    %323 = vector.broadcast %cst_126 : f32 to vector<17x1xf32>
    %324 = arith.addf %320, %323 : vector<17x1xf32>
    %325 = math.rsqrt %324 : vector<17x1xf32>
    %326 = vector.broadcast %325 : vector<17x1xf32> to vector<17x32xf32>
    %327 = arith.mulf %322, %326 : vector<17x32xf32>
    %328 = vector.broadcast %308 : vector<1x32xf32> to vector<17x32xf32>
    %329 = arith.mulf %327, %328 : vector<17x32xf32>
    %330 = vector.broadcast %309 : vector<1x32xf32> to vector<17x32xf32>
    %331 = arith.addf %329, %330 : vector<17x32xf32>
    %c0_127 = arith.constant 0 : index
    %c0_128 = arith.constant 0 : index
    %332 = vector.load %arg26[%c0_127, %c0_128] : memref<32x64xf32, #tpu.memory_space<vmem>>, vector<32x64xf32>
    %cst_129 = arith.constant dense<0.000000e+00> : vector<17x64xf32>
    %333 = tpu.matmul %331, %332, %cst_129 {dimension_numbers = #tpu.dot_dimension_numbers<[1], [0], [0], [1], [0, 0, 1, 1], [], []>} : vector<17x32xf32>, vector<32x64xf32>, vector<17x64xf32> -> vector<17x64xf32>
    %c0_130 = arith.constant 0 : index
    %c0_131 = arith.constant 0 : index
    %334 = vector.load %arg27[%c0_130, %c0_131] : memref<1x64xf32, #tpu.memory_space<vmem>>, vector<1x64xf32>
    %335 = vector.broadcast %334 : vector<1x64xf32> to vector<17x64xf32>
    %336 = arith.addf %333, %335 : vector<17x64xf32>
    %cst_132 = arith.constant 5.000000e-01 : f32
    %337 = vector.broadcast %cst_132 : f32 to vector<17x64xf32>
    %338 = arith.mulf %337, %336 : vector<17x64xf32>
    %cst_133 = arith.constant 0.707106769 : f32
    %339 = vector.broadcast %cst_133 : f32 to vector<17x64xf32>
    %340 = arith.mulf %336, %339 : vector<17x64xf32>
    %341 = math.erf %340 : vector<17x64xf32>
    %cst_134 = arith.constant 1.000000e+00 : f32
    %342 = vector.broadcast %cst_134 : f32 to vector<17x64xf32>
    %343 = arith.addf %342, %341 : vector<17x64xf32>
    %344 = arith.mulf %338, %343 : vector<17x64xf32>
    %c0_135 = arith.constant 0 : index
    %c0_136 = arith.constant 0 : index
    %345 = vector.load %arg28[%c0_135, %c0_136] : memref<64x32xf32, #tpu.memory_space<vmem>>, vector<64x32xf32>
    %cst_137 = arith.constant dense<0.000000e+00> : vector<17x32xf32>
    %346 = tpu.matmul %344, %345, %cst_137 {dimension_numbers = #tpu.dot_dimension_numbers<[1], [0], [0], [1], [0, 0, 1, 1], [], []>} : vector<17x64xf32>, vector<64x32xf32>, vector<17x32xf32> -> vector<17x32xf32>
    %c0_138 = arith.constant 0 : index
    %c0_139 = arith.constant 0 : index
    %347 = vector.load %arg29[%c0_138, %c0_139] : memref<1x32xf32, #tpu.memory_space<vmem>>, vector<1x32xf32>
    %348 = vector.broadcast %347 : vector<1x32xf32> to vector<17x32xf32>
    %349 = arith.addf %346, %348 : vector<17x32xf32>
    %350 = arith.addf %307, %349 : vector<17x32xf32>
    %351 = vector.shape_cast %350 : vector<17x32xf32> to vector<1x17x32xf32>
    %352 = vector.extract_strided_slice %351 {offsets = [0, 0, 0], sizes = [1, 1, 32], strides = [1, 1, 1]} : vector<1x17x32xf32> to vector<1x1x32xf32>
    %353 = vector.shape_cast %352 : vector<1x1x32xf32> to vector<1x32xf32>
    %c0_140 = arith.constant 0 : index
    %c0_141 = arith.constant 0 : index
    %354 = vector.load %arg30[%c0_140, %c0_141] : memref<1x32xf32, #tpu.memory_space<vmem>>, vector<1x32xf32>
    %c0_142 = arith.constant 0 : index
    %c0_143 = arith.constant 0 : index
    %355 = vector.load %arg31[%c0_142, %c0_143] : memref<1x32xf32, #tpu.memory_space<vmem>>, vector<1x32xf32>
    %cst_144 = arith.constant dense<0.000000e+00> : vector<1xf32>
    %356 = vector.multi_reduction <add>, %353, %cst_144 [1] : vector<1x32xf32> to vector<1xf32>
    %357 = vector.shape_cast %356 : vector<1xf32> to vector<1x1xf32>
    %cst_145 = arith.constant 3.200000e+01 : f32
    %358 = vector.broadcast %cst_145 : f32 to vector<1x1xf32>
    %359 = arith.divf %357, %358 : vector<1x1xf32>
    %360 = vector.broadcast %359 : vector<1x1xf32> to vector<1x32xf32>
    %361 = arith.subf %353, %360 : vector<1x32xf32>
    %362 = arith.mulf %361, %361 : vector<1x32xf32>
    %cst_146 = arith.constant dense<0.000000e+00> : vector<1xf32>
    %363 = vector.multi_reduction <add>, %362, %cst_146 [1] : vector<1x32xf32> to vector<1xf32>
    %364 = vector.shape_cast %363 : vector<1xf32> to vector<1x1xf32>
    %cst_147 = arith.constant 3.200000e+01 : f32
    %365 = vector.broadcast %cst_147 : f32 to vector<1x1xf32>
    %366 = arith.divf %364, %365 : vector<1x1xf32>
    %367 = vector.broadcast %359 : vector<1x1xf32> to vector<1x32xf32>
    %368 = arith.subf %353, %367 : vector<1x32xf32>
    %cst_148 = arith.constant 9.99999974E-6 : f32
    %369 = vector.broadcast %cst_148 : f32 to vector<1x1xf32>
    %370 = arith.addf %366, %369 : vector<1x1xf32>
    %371 = math.rsqrt %370 : vector<1x1xf32>
    %372 = vector.broadcast %371 : vector<1x1xf32> to vector<1x32xf32>
    %373 = arith.mulf %368, %372 : vector<1x32xf32>
    %374 = arith.mulf %373, %354 : vector<1x32xf32>
    %375 = arith.addf %374, %355 : vector<1x32xf32>
    %c0_149 = arith.constant 0 : index
    %c0_150 = arith.constant 0 : index
    %376 = vector.load %arg32[%c0_149, %c0_150] : memref<32x128xf32, #tpu.memory_space<vmem>>, vector<32x128xf32>
    %cst_151 = arith.constant dense<0.000000e+00> : vector<1x128xf32>
    %377 = tpu.matmul %375, %376, %cst_151 {dimension_numbers = #tpu.dot_dimension_numbers<[1], [0], [0], [1], [0, 0, 1, 1], [], []>} : vector<1x32xf32>, vector<32x128xf32>, vector<1x128xf32> -> vector<1x128xf32>
    %c0_152 = arith.constant 0 : index
    %c0_153 = arith.constant 0 : index
    %378 = vector.load %arg33[%c0_152, %c0_153] : memref<1x128xf32, #tpu.memory_space<vmem>>, vector<1x128xf32>
    %379 = arith.addf %377, %378 : vector<1x128xf32>
    %380 = vector.shape_cast %379 : vector<1x128xf32> to vector<1x1x128xf32>
    %c0_154 = arith.constant 0 : index
    %c0_155 = arith.constant 0 : index
    %c0_156 = arith.constant 0 : index
    %381 = vector.load %arg35[%c0_154, %c0_155, %c0_156] : memref<1x1x128xf32, #tpu.memory_space<vmem>>, vector<1x1x128xf32>
    tpu.vector_store %arg35[%c0_154, %c0_155, %c0_156], %380 {strides = array<i32>} : memref<1x1x128xf32, #tpu.memory_space<vmem>>, vector<1x1x128xf32>,
    return
  }
  func.func @transform_0(%arg0: i32) -> (i32, i32, i32) {
    %c0_i32 = arith.constant 0 : i32
    %c0_i32_0 = arith.constant 0 : i32
    %c0_i32_1 = arith.constant 0 : i32
    return %arg0, %c0_i32, %c0_i32_0 : i32, i32, i32
  }
  func.func @transform_1(%arg0: i32) -> (i32, i32, i32) {
    %c0_i32 = arith.constant 0 : i32
    %c0_i32_0 = arith.constant 0 : i32
    %c0_i32_1 = arith.constant 0 : i32
    %c0_i32_2 = arith.constant 0 : i32
    return %c0_i32, %c0_i32_0, %c0_i32_1 : i32, i32, i32
  }
  func.func @transform_2(%arg0: i32) -> (i32, i32, i32) {
    %c0_i32 = arith.constant 0 : i32
    %c0_i32_0 = arith.constant 0 : i32
    %c0_i32_1 = arith.constant 0 : i32
    %c0_i32_2 = arith.constant 0 : i32
    return %c0_i32, %c0_i32_0, %c0_i32_1 : i32, i32, i32
  }
  func.func @transform_3(%arg0: i32) -> (i32, i32) {
    %c0_i32 = arith.constant 0 : i32
    %c0_i32_0 = arith.constant 0 : i32
    %c0_i32_1 = arith.constant 0 : i32
    return %c0_i32, %c0_i32_0 : i32, i32
  }
  func.func @transform_4(%arg0: i32) -> (i32, i32) {
    %c0_i32 = arith.constant 0 : i32
    %c0_i32_0 = arith.constant 0 : i32
    %c0_i32_1 = arith.constant 0 : i32
    return %c0_i32, %c0_i32_0 : i32, i32
  }
  func.func @transform_5(%arg0: i32) -> (i32, i32) {
    %c0_i32 = arith.constant 0 : i32
    %c0_i32_0 = arith.constant 0 : i32
    %c0_i32_1 = arith.constant 0 : i32
    return %c0_i32, %c0_i32_0 : i32, i32
  }
  func.func @transform_6(%arg0: i32) -> (i32, i32) {
    %c0_i32 = arith.constant 0 : i32
    %c0_i32_0 = arith.constant 0 : i32
    %c0_i32_1 = arith.constant 0 : i32
    return %c0_i32, %c0_i32_0 : i32, i32
  }
  func.func @transform_7(%arg0: i32) -> (i32, i32) {
    %c0_i32 = arith.constant 0 : i32
    %c0_i32_0 = arith.constant 0 : i32
    %c0_i32_1 = arith.constant 0 : i32
    return %c0_i32, %c0_i32_0 : i32, i32
  }
  func.func @transform_8(%arg0: i32) -> (i32, i32) {
    %c0_i32 = arith.constant 0 : i32
    %c0_i32_0 = arith.constant 0 : i32
    %c0_i32_1 = arith.constant 0 : i32
    return %c0_i32, %c0_i32_0 : i32, i32
  }
  func.func @transform_9(%arg0: i32) -> (i32, i32) {
    %c0_i32 = arith.constant 0 : i32
    %c0_i32_0 = arith.constant 0 : i32
    %c0_i32_1 = arith.constant 0 : i32
    return %c0_i32, %c0_i32_0 : i32, i32
  }
  func.func @transform_10(%arg0: i32) -> (i32, i32) {
    %c0_i32 = arith.constant 0 : i32
    %c0_i32_0 = arith.constant 0 : i32
    %c0_i32_1 = arith.constant 0 : i32
    return %c0_i32, %c0_i32_0 : i32, i32
  }
  func.func @transform_11(%arg0: i32) -> (i32, i32) {
    %c0_i32 = arith.constant 0 : i32
    %c0_i32_0 = arith.constant 0 : i32
    %c0_i32_1 = arith.constant 0 : i32
    return %c0_i32, %c0_i32_0 : i32, i32
  }
  func.func @transform_12(%arg0: i32) -> (i32, i32) {
    %c0_i32 = arith.constant 0 : i32
    %c0_i32_0 = arith.constant 0 : i32
    %c0_i32_1 = arith.constant 0 : i32
    return %c0_i32, %c0_i32_0 : i32, i32
  }
  func.func @transform_13(%arg0: i32) -> (i32, i32) {
    %c0_i32 = arith.constant 0 : i32
    %c0_i32_0 = arith.constant 0 : i32
    %c0_i32_1 = arith.constant 0 : i32
    return %c0_i32, %c0_i32_0 : i32, i32
  }
  func.func @transform_14(%arg0: i32) -> (i32, i32) {
    %c0_i32 = arith.constant 0 : i32
    %c0_i32_0 = arith.constant 0 : i32
    %c0_i32_1 = arith.constant 0 : i32
    return %c0_i32, %c0_i32_0 : i32, i32
  }
  func.func @transform_15(%arg0: i32) -> (i32, i32) {
    %c0_i32 = arith.constant 0 : i32
    %c0_i32_0 = arith.constant 0 : i32
    %c0_i32_1 = arith.constant 0 : i32
    return %c0_i32, %c0_i32_0 : i32, i32
  }
  func.func @transform_16(%arg0: i32) -> (i32, i32) {
    %c0_i32 = arith.constant 0 : i32
    %c0_i32_0 = arith.constant 0 : i32
    %c0_i32_1 = arith.constant 0 : i32
    return %c0_i32, %c0_i32_0 : i32, i32
  }
  func.func @transform_17(%arg0: i32) -> (i32, i32) {
    %c0_i32 = arith.constant 0 : i32
    %c0_i32_0 = arith.constant 0 : i32
    %c0_i32_1 = arith.constant 0 : i32
    return %c0_i32, %c0_i32_0 : i32, i32
  }
  func.func @transform_18(%arg0: i32) -> (i32, i32) {
    %c0_i32 = arith.constant 0 : i32
    %c0_i32_0 = arith.constant 0 : i32
    %c0_i32_1 = arith.constant 0 : i32
    return %c0_i32, %c0_i32_0 : i32, i32
  }
  func.func @transform_19(%arg0: i32) -> (i32, i32) {
    %c0_i32 = arith.constant 0 : i32
    %c0_i32_0 = arith.constant 0 : i32
    %c0_i32_1 = arith.constant 0 : i32
    return %c0_i32, %c0_i32_0 : i32, i32
  }
  func.func @transform_20(%arg0: i32) -> (i32, i32) {
    %c0_i32 = arith.constant 0 : i32
    %c0_i32_0 = arith.constant 0 : i32
    %c0_i32_1 = arith.constant 0 : i32
    return %c0_i32, %c0_i32_0 : i32, i32
  }
  func.func @transform_21(%arg0: i32) -> (i32, i32) {
    %c0_i32 = arith.constant 0 : i32
    %c0_i32_0 = arith.constant 0 : i32
    %c0_i32_1 = arith.constant 0 : i32
    return %c0_i32, %c0_i32_0 : i32, i32
  }
  func.func @transform_22(%arg0: i32) -> (i32, i32) {
    %c0_i32 = arith.constant 0 : i32
    %c0_i32_0 = arith.constant 0 : i32
    %c0_i32_1 = arith.constant 0 : i32
    return %c0_i32, %c0_i32_0 : i32, i32
  }
  func.func @transform_23(%arg0: i32) -> (i32, i32) {
    %c0_i32 = arith.constant 0 : i32
    %c0_i32_0 = arith.constant 0 : i32
    %c0_i32_1 = arith.constant 0 : i32
    return %c0_i32, %c0_i32_0 : i32, i32
  }
  func.func @transform_24(%arg0: i32) -> (i32, i32) {
    %c0_i32 = arith.constant 0 : i32
    %c0_i32_0 = arith.constant 0 : i32
    %c0_i32_1 = arith.constant 0 : i32
    return %c0_i32, %c0_i32_0 : i32, i32
  }
  func.func @transform_25(%arg0: i32) -> (i32, i32) {
    %c0_i32 = arith.constant 0 : i32
    %c0_i32_0 = arith.constant 0 : i32
    %c0_i32_1 = arith.constant 0 : i32
    return %c0_i32, %c0_i32_0 : i32, i32
  }
  func.func @transform_26(%arg0: i32) -> (i32, i32) {
    %c0_i32 = arith.constant 0 : i32
    %c0_i32_0 = arith.constant 0 : i32
    %c0_i32_1 = arith.constant 0 : i32
    return %c0_i32, %c0_i32_0 : i32, i32
  }
  func.func @transform_27(%arg0: i32) -> (i32, i32) {
    %c0_i32 = arith.constant 0 : i32
    %c0_i32_0 = arith.constant 0 : i32
    %c0_i32_1 = arith.constant 0 : i32
    return %c0_i32, %c0_i32_0 : i32, i32
  }
  func.func @transform_28(%arg0: i32) -> (i32, i32) {
    %c0_i32 = arith.constant 0 : i32
    %c0_i32_0 = arith.constant 0 : i32
    %c0_i32_1 = arith.constant 0 : i32
    return %c0_i32, %c0_i32_0 : i32, i32
  }
  func.func @transform_29(%arg0: i32) -> (i32, i32) {
    %c0_i32 = arith.constant 0 : i32
    %c0_i32_0 = arith.constant 0 : i32
    %c0_i32_1 = arith.constant 0 : i32
    return %c0_i32, %c0_i32_0 : i32, i32
  }
  func.func @transform_30(%arg0: i32) -> (i32, i32) {
    %c0_i32 = arith.constant 0 : i32
    %c0_i32_0 = arith.constant 0 : i32
    %c0_i32_1 = arith.constant 0 : i32
    return %c0_i32, %c0_i32_0 : i32, i32
  }
  func.func @transform_31(%arg0: i32) -> (i32, i32) {
    %c0_i32 = arith.constant 0 : i32
    %c0_i32_0 = arith.constant 0 : i32
    %c0_i32_1 = arith.constant 0 : i32
    return %c0_i32, %c0_i32_0 : i32, i32
  }
  func.func @transform_32(%arg0: i32) -> (i32, i32) {
    %c0_i32 = arith.constant 0 : i32
    %c0_i32_0 = arith.constant 0 : i32
    %c0_i32_1 = arith.constant 0 : i32
    return %c0_i32, %c0_i32_0 : i32, i32
  }
  func.func @transform_33(%arg0: i32) -> i32 {
    %c0_i32 = arith.constant 0 : i32
    %c0_i32_0 = arith.constant 0 : i32
    return %c0_i32 : i32
  }
  func.func @transform_34(%arg0: i32) -> (i32, i32, i32) {
    %c0_i32 = arith.constant 0 : i32
    %c0_i32_0 = arith.constant 0 : i32
    %c0_i32_1 = arith.constant 0 : i32
    return %arg0, %c0_i32, %c0_i32_0 : i32, i32, i32
  }
}

</mosaic_0001>

<llo_original>
// kernel: vit_forward.1
$region0: #{vit_forward.1}
  #allocation0 [shape = 'u32[]', space=smem, size = 0x4, offset = 0x4, fixed_abs, tag = 'smem constant byte address 0x4 - core index']
  #allocation1 [shape = 'u32[144,128]{1,0:T(1,128)}', space=vmem, size = 0x12000, scoped, tag = 'internal scratch']
  %s0 = inlined_call_operand.smem [shape: u32[35], index: -1, kind: input, shape index: {}]
  %s1 = sld [smem:[%s0]]
  %s2 = scalar_lea.smem %s0, 1
  %s3 = sld [smem:[%s2]]
  %s4 = scalar_lea.smem %s0, 2
  %s5 = sld [smem:[%s4]]
  %s6 = scalar_lea.smem %s0, 3
  %s7 = sld [smem:[%s6]]
  %s8 = scalar_lea.smem %s0, 4
  %s9 = sld [smem:[%s8]]
  %s10 = scalar_lea.smem %s0, 5
  %s11 = sld [smem:[%s10]]
  %s12 = scalar_lea.smem %s0, 6
  %s13 = sld [smem:[%s12]]
  %s14 = scalar_lea.smem %s0, 7
  %s15 = sld [smem:[%s14]]
  %s16 = scalar_lea.smem %s0, 8
  %s17 = sld [smem:[%s16]]
  %s18 = scalar_lea.smem %s0, 9
  %s19 = sld [smem:[%s18]]
  %s20 = scalar_lea.smem %s0, 10
  %s21 = sld [smem:[%s20]]
  %s22 = scalar_lea.smem %s0, 11
  %s23 = sld [smem:[%s22]]
  %s24 = scalar_lea.smem %s0, 12
  %s25 = sld [smem:[%s24]]
  %s26 = scalar_lea.smem %s0, 13
  %s27 = sld [smem:[%s26]]
  %s28 = scalar_lea.smem %s0, 14
  %s29 = sld [smem:[%s28]]
  %s30 = scalar_lea.smem %s0, 15
  %s31 = sld [smem:[%s30]]
  %s32 = scalar_lea.smem %s0, 16
  %s33 = sld [smem:[%s32]]
  %s34 = scalar_lea.smem %s0, 17
  %s35 = sld [smem:[%s34]]
  %s36 = scalar_lea.smem %s0, 18
  %s37 = sld [smem:[%s36]]
  %s38 = scalar_lea.smem %s0, 19
  %s39 = sld [smem:[%s38]]
  %s40 = scalar_lea.smem %s0, 20
  %s41 = sld [smem:[%s40]]
  %s42 = scalar_lea.smem %s0, 21
  %s43 = sld [smem:[%s42]]
  %s44 = scalar_lea.smem %s0, 22
  %s45 = sld [smem:[%s44]]
  %s46 = scalar_lea.smem %s0, 23
  %s47 = sld [smem:[%s46]]
  %s48 = scalar_lea.smem %s0, 24
  %s49 = sld [smem:[%s48]]
  %s50 = scalar_lea.smem %s0, 25
  %s51 = sld [smem:[%s50]]
  %s52 = scalar_lea.smem %s0, 26
  %s53 = sld [smem:[%s52]]
  %s54 = scalar_lea.smem %s0, 27
  %s55 = sld [smem:[%s54]]
  %s56 = scalar_lea.smem %s0, 28
  %s57 = sld [smem:[%s56]]
  %s58 = scalar_lea.smem %s0, 29
  %s59 = sld [smem:[%s58]]
  %s60 = scalar_lea.smem %s0, 30
  %s61 = sld [smem:[%s60]]
  %s62 = scalar_lea.smem %s0, 31
  %s63 = sld [smem:[%s62]]
  %s64 = scalar_lea.smem %s0, 32
  %s65 = sld [smem:[%s64]]
  %s66 = scalar_lea.smem %s0, 33
  %s67 = sld [smem:[%s66]]
  %s68 = scalar_lea.smem %s0, 34
  %s69 = sld [smem:[%s68]]
  %s70 = sld [smem:[#allocation0]]
  $region173: #{vit_forward.1} parent=0
    _
  %s72 = ssub.s32 1, %s70
  %s73 = scalar_select 0, %s72, %s70
  $region1: #{vit_forward.1} parent=0
    #allocation2 [shape = 'u8[512]{0}', space=smem, size = 0x200, scoped, tag = 'input window, operand 33, single buffered']
    #allocation3 [shape = 's32[2]{0}', space=sflag, size = 0x8, scoped, tag = 'scoped memory for vit_forward.1']
    #allocation4 [shape = 's32[2]{0}', space=sflag, size = 0x8, scoped, tag = 'scoped memory for vit_forward.1']
    #allocation5 [shape = 'u8[1024]{0}', space=vmem, size = 0x400, scoped, tag = 'output window, operand 0']
    %74 = vsyncpa [#allocation4], 0
    %75 = vsyncpa [#allocation3], 0
    %s76 = scalar_lea.sflag [#allocation3], 1
    %77 = vsyncpa %s76, 0
    loop: start=0, step=1, limit=4
    $region2: #{vit_forward.1} parent=1 // loop_pre_header
      _
    $region3: #{vit_forward.1} parent=1 // loop_header
      %s79 = sphi 0, %s83
      %p80 = scmp.ge.s32.totalorder %s79, 4
      %s89 = sphi 0, %s91
      %s92 = sphi 0, %s89
      %s93 = sphi 0, %s92
      %s109 = sphi 0, %s93
      %s113 = sphi 0, %s113
      %s115 = sphi 0, %s113
      %s116 = sphi 0, %s115
      %s130 = sphi 0, %s116
      %s134 = sphi 0, %s134
      %s136 = sphi 0, %s134
      %s137 = sphi 0, %s136
      %s151 = sphi 0, %s137
      %s155 = sphi 0, %s155
      %s157 = sphi 0, %s155
      %s158 = sphi 0, %s157
      %s172 = sphi 0, %s158
      %s176 = sphi 0, %s176
      %s178 = sphi 0, %s176
      %s179 = sphi 0, %s178
      %s193 = sphi 0, %s179
      %s197 = sphi 0, %s197
      %s199 = sphi 0, %s197
      %s200 = sphi 0, %s199
      %s214 = sphi 0, %s200
      %s218 = sphi 0, %s218
      %s220 = sphi 0, %s218
      %s221 = sphi 0, %s220
      %s235 = sphi 0, %s221
      %s239 = sphi 0, %s239
      %s241 = sphi 0, %s239
      %s242 = sphi 0, %s241
      %s256 = sphi 0, %s242
      %s260 = sphi 0, %s260
      %s262 = sphi 0, %s260
      %s263 = sphi 0, %s262
      %s277 = sphi 0, %s263
      %s281 = sphi 0, %s281
      %s283 = sphi 0, %s281
      %s284 = sphi 0, %s283
      %s298 = sphi 0, %s284
      %s302 = sphi 0, %s302
      %s304 = sphi 0, %s302
      %s305 = sphi 0, %s304
      %s319 = sphi 0, %s305
      %s323 = sphi 0, %s323
      %s325 = sphi 0, %s323
      %s326 = sphi 0, %s325
      %s340 = sphi 0, %s326
      %s344 = sphi 0, %s344
      %s346 = sphi 0, %s344
      %s347 = sphi 0, %s346
      %s361 = sphi 0, %s347
      %s365 = sphi 0, %s365
      %s367 = sphi 0, %s365
      %s368 = sphi 0, %s367
      %s382 = sphi 0, %s368
      %s386 = sphi 0, %s386
      %s388 = sphi 0, %s386
      %s389 = sphi 0, %s388
      %s403 = sphi 0, %s389
      %s407 = sphi 0, %s407
      %s409 = sphi 0, %s407
      %s410 = sphi 0, %s409
      %s424 = sphi 0, %s410
      %s428 = sphi 0, %s428
      %s430 = sphi 0, %s428
      %s431 = sphi 0, %s430
      %s445 = sphi 0, %s431
      %s449 = sphi 0, %s449
      %s451 = sphi 0, %s449
      %s452 = sphi 0, %s451
      %s466 = sphi 0, %s452
      %s470 = sphi 0, %s470
      %s472 = sphi 0, %s470
      %s473 = sphi 0, %s472
      %s487 = sphi 0, %s473
      %s491 = sphi 0, %s491
      %s493 = sphi 0, %s491
      %s494 = sphi 0, %s493
      %s508 = sphi 0, %s494
      %s512 = sphi 0, %s512
      %s514 = sphi 0, %s512
      %s515 = sphi 0, %s514
      %s529 = sphi 0, %s515
      %s533 = sphi 0, %s533
      %s535 = sphi 0, %s533
      %s536 = sphi 0, %s535
      %s550 = sphi 0, %s536
      %s554 = sphi 0, %s554
      %s556 = sphi 0, %s554
      %s557 = sphi 0, %s556
      %s571 = sphi 0, %s557
      %s575 = sphi 0, %s575
      %s577 = sphi 0, %s575
      %s578 = sphi 0, %s577
      %s592 = sphi 0, %s578
      %s596 = sphi 0, %s596
      %s598 = sphi 0, %s596
      %s599 = sphi 0, %s598
      %s613 = sphi 0, %s599
      %s617 = sphi 0, %s617
      %s619 = sphi 0, %s617
      %s620 = sphi 0, %s619
      %s634 = sphi 0, %s620
      %s638 = sphi 0, %s638
      %s640 = sphi 0, %s638
      %s641 = sphi 0, %s640
      %s655 = sphi 0, %s641
      %s659 = sphi 0, %s659
      %s661 = sphi 0, %s659
      %s662 = sphi 0, %s661
      %s676 = sphi 0, %s662
      %s680 = sphi 0, %s680
      %s682 = sphi 0, %s680
      %s683 = sphi 0, %s682
      %s697 = sphi 0, %s683
      %s701 = sphi 0, %s701
      %s703 = sphi 0, %s701
      %s704 = sphi 0, %s703
      %s718 = sphi 0, %s704
      %s722 = sphi 0, %s722
      %s724 = sphi 0, %s722
      %s725 = sphi 0, %s724
      %s739 = sphi 0, %s725
      %s743 = sphi 0, %s743
      %s745 = sphi 0, %s743
      %s746 = sphi 0, %s745
      %s760 = sphi 0, %s746
      %s764 = sphi 0, %s764
      %s766 = sphi 0, %s764
      %s767 = sphi 0, %s766
      %s781 = sphi 0, %s767
      %s785 = sphi 0, %s785
      %s787 = sphi 0, %s785
      %s788 = sphi 0, %s787
      %s802 = sphi 0, %s788
      %s808 = sphi 0, %s810
      %s811 = sphi 0, %s808
      %s812 = sphi 0, %s811
      %s828 = sphi 0, %s812
    $region4: #{vit_forward.1} parent=1 // loop_header_branch
      %82 = sbr.rel (%p80) target = $region8
    $region5: #{vit_forward.1} parent=1 // loop_body
      %s84 = ssub.s32 %s79, 1
      %s85 = ssub.s32 %s79, 2
      %s86 = sadd.s32 %s79, 1
      %s87 = ssub.s32 %s79, %s86
      %p88 = scmp.eq.s32.totalorder %s87, 0
      %s90 = sadd.s32 %s89, 1
      %s91 = scalar_select %p88, %s89, %s90
      %p94 = pneg %p88
      %p95 = scmp.eq.s32.totalorder %s79, 1
      %p96 = por %p94, %p95
      %p97 = scmp.ne.s32.totalorder %s89, %s92
      %p98 = scmp.eq.s32.totalorder %s79, 0
      %p99 = por %p97, %p98
      %p100 = scmp.ne.s32.totalorder %s89, %s92
      %p101 = scmp.eq.s32.totalorder %s84, 1
      %p102 = por %p100, %p101
      %p103 = scmp.ne.s32.totalorder %s92, %s93
      %p104 = scmp.eq.s32.totalorder %s84, 0
      %p105 = por %p103, %p104
      %p106 = scmp.ne.s32.totalorder %s92, %s93
      %p107 = scmp.eq.s32.totalorder %s85, 1
      %p108 = por %p106, %p107
      %p110 = scmp.ne.s32.totalorder %s93, %s109
      %p111 = scmp.eq.s32.totalorder %s85, 0
      %p112 = por %p110, %p111
      %s114 = sadd.s32 %s113, 1
      %p117 = scmp.eq.s32.totalorder %s79, 1
      %p118 = scmp.ne.s32.totalorder %s113, %s115
      %p119 = scmp.eq.s32.totalorder %s79, 0
      %p120 = por %p118, %p119
      %p121 = scmp.ne.s32.totalorder %s113, %s115
      %p122 = scmp.eq.s32.totalorder %s84, 1
      %p123 = por %p121, %p122
      %p124 = scmp.ne.s32.totalorder %s115, %s116
      %p125 = scmp.eq.s32.totalorder %s84, 0
      %p126 = por %p124, %p125
      %p127 = scmp.ne.s32.totalorder %s115, %s116
      %p128 = scmp.eq.s32.totalorder %s85, 1
      %p129 = por %p127, %p128
      %p131 = scmp.ne.s32.totalorder %s116, %s130
      %p132 = scmp.eq.s32.totalorder %s85, 0
      %p133 = por %p131, %p132
      %s135 = sadd.s32 %s134, 1
      %p138 = scmp.eq.s32.totalorder %s79, 1
      %p139 = scmp.ne.s32.totalorder %s134, %s136
      %p140 = scmp.eq.s32.totalorder %s79, 0
      %p141 = por %p139, %p140
      %p142 = scmp.ne.s32.totalorder %s134, %s136
      %p143 = scmp.eq.s32.totalorder %s84, 1
      %p144 = por %p142, %p143
      %p145 = scmp.ne.s32.totalorder %s136, %s137
      %p146 = scmp.eq.s32.totalorder %s84, 0
      %p147 = por %p145, %p146
      %p148 = scmp.ne.s32.totalorder %s136, %s137
      %p149 = scmp.eq.s32.totalorder %s85, 1
      %p150 = por %p148, %p149
      %p152 = scmp.ne.s32.totalorder %s137, %s151
      %p153 = scmp.eq.s32.totalorder %s85, 0
      %p154 = por %p152, %p153
      %s156 = sadd.s32 %s155, 1
      %p159 = scmp.eq.s32.totalorder %s79, 1
      %p160 = scmp.ne.s32.totalorder %s155, %s157
      %p161 = scmp.eq.s32.totalorder %s79, 0
      %p162 = por %p160, %p161
      %p163 = scmp.ne.s32.totalorder %s155, %s157
      %p164 = scmp.eq.s32.totalorder %s84, 1
      %p165 = por %p163, %p164
      %p166 = scmp.ne.s32.totalorder %s157, %s158
      %p167 = scmp.eq.s32.totalorder %s84, 0
      %p168 = por %p166, %p167
      %p169 = scmp.ne.s32.totalorder %s157, %s158
      %p170 = scmp.eq.s32.totalorder %s85, 1
      %p171 = por %p169, %p170
      %p173 = scmp.ne.s32.totalorder %s158, %s172
      %p174 = scmp.eq.s32.totalorder %s85, 0
      %p175 = por %p173, %p174
      %s177 = sadd.s32 %s176, 1
      %p180 = scmp.eq.s32.totalorder %s79, 1
      %p181 = scmp.ne.s32.totalorder %s176, %s178
      %p182 = scmp.eq.s32.totalorder %s79, 0
      %p183 = por %p181, %p182
      %p184 = scmp.ne.s32.totalorder %s176, %s178
      %p185 = scmp.eq.s32.totalorder %s84, 1
      %p186 = por %p184, %p185
      %p187 = scmp.ne.s32.totalorder %s178, %s179
      %p188 = scmp.eq.s32.totalorder %s84, 0
      %p189 = por %p187, %p188
      %p190 = scmp.ne.s32.totalorder %s178, %s179
      %p191 = scmp.eq.s32.totalorder %s85, 1
      %p192 = por %p190, %p191
      %p194 = scmp.ne.s32.totalorder %s179, %s193
      %p195 = scmp.eq.s32.totalorder %s85, 0
      %p196 = por %p194, %p195
      %s198 = sadd.s32 %s197, 1
      %p201 = scmp.eq.s32.totalorder %s79, 1
      %p202 = scmp.ne.s32.totalorder %s197, %s199
      %p203 = scmp.eq.s32.totalorder %s79, 0
      %p204 = por %p202, %p203
      %p205 = scmp.ne.s32.totalorder %s197, %s199
      %p206 = scmp.eq.s32.totalorder %s84, 1
      %p207 = por %p205, %p206
      %p208 = scmp.ne.s32.totalorder %s199, %s200
      %p209 = scmp.eq.s32.totalorder %s84, 0
      %p210 = por %p208, %p209
      %p211 = scmp.ne.s32.totalorder %s199, %s200
      %p212 = scmp.eq.s32.totalorder %s85, 1
      %p213 = por %p211, %p212
      %p215 = scmp.ne.s32.totalorder %s200, %s214
      %p216 = scmp.eq.s32.totalorder %s85, 0
      %p217 = por %p215, %p216
      %s219 = sadd.s32 %s218, 1
      %p222 = scmp.eq.s32.totalorder %s79, 1
      %p223 = scmp.ne.s32.totalorder %s218, %s220
      %p224 = scmp.eq.s32.totalorder %s79, 0
      %p225 = por %p223, %p224
      %p226 = scmp.ne.s32.totalorder %s218, %s220
      %p227 = scmp.eq.s32.totalorder %s84, 1
      %p228 = por %p226, %p227
      %p229 = scmp.ne.s32.totalorder %s220, %s221
      %p230 = scmp.eq.s32.totalorder %s84, 0
      %p231 = por %p229, %p230
      %p232 = scmp.ne.s32.totalorder %s220, %s221
      %p233 = scmp.eq.s32.totalorder %s85, 1
      %p234 = por %p232, %p233
      %p236 = scmp.ne.s32.totalorder %s221, %s235
      %p237 = scmp.eq.s32.totalorder %s85, 0
      %p238 = por %p236, %p237
      %s240 = sadd.s32 %s239, 1
      %p243 = scmp.eq.s32.totalorder %s79, 1
      %p244 = scmp.ne.s32.totalorder %s239, %s241
      %p245 = scmp.eq.s32.totalorder %s79, 0
      %p246 = por %p244, %p245
      %p247 = scmp.ne.s32.totalorder %s239, %s241
      %p248 = scmp.eq.s32.totalorder %s84, 1
      %p249 = por %p247, %p248
      %p250 = scmp.ne.s32.totalorder %s241, %s242
      %p251 = scmp.eq.s32.totalorder %s84, 0
      %p252 = por %p250, %p251
      %p253 = scmp.ne.s32.totalorder %s241, %s242
      %p254 = scmp.eq.s32.totalorder %s85, 1
      %p255 = por %p253, %p254
      %p257 = scmp.ne.s32.totalorder %s242, %s256
      %p258 = scmp.eq.s32.totalorder %s85, 0
      %p259 = por %p257, %p258
      %s261 = sadd.s32 %s260, 1
      %p264 = scmp.eq.s32.totalorder %s79, 1
      %p265 = scmp.ne.s32.totalorder %s260, %s262
      %p266 = scmp.eq.s32.totalorder %s79, 0
      %p267 = por %p265, %p266
      %p268 = scmp.ne.s32.totalorder %s260, %s262
      %p269 = scmp.eq.s32.totalorder %s84, 1
      %p270 = por %p268, %p269
      %p271 = scmp.ne.s32.totalorder %s262, %s263
      %p272 = scmp.eq.s32.totalorder %s84, 0
      %p273 = por %p271, %p272
      %p274 = scmp.ne.s32.totalorder %s262, %s263
      %p275 = scmp.eq.s32.totalorder %s85, 1
      %p276 = por %p274, %p275
      %p278 = scmp.ne.s32.totalorder %s263, %s277
      %p279 = scmp.eq.s32.totalorder %s85, 0
      %p280 = por %p278, %p279
      %s282 = sadd.s32 %s281, 1
      %p285 = scmp.eq.s32.totalorder %s79, 1
      %p286 = scmp.ne.s32.totalorder %s281, %s283
      %p287 = scmp.eq.s32.totalorder %s79, 0
      %p288 = por %p286, %p287
      %p289 = scmp.ne.s32.totalorder %s281, %s283
      %p290 = scmp.eq.s32.totalorder %s84, 1
      %p291 = por %p289, %p290
      %p292 = scmp.ne.s32.totalorder %s283, %s284
      %p293 = scmp.eq.s32.totalorder %s84, 0
      %p294 = por %p292, %p293
      %p295 = scmp.ne.s32.totalorder %s283, %s284
      %p296 = scmp.eq.s32.totalorder %s85, 1
      %p297 = por %p295, %p296
      %p299 = scmp.ne.s32.totalorder %s284, %s298
      %p300 = scmp.eq.s32.totalorder %s85, 0
      %p301 = por %p299, %p300
      %s303 = sadd.s32 %s302, 1
      %p306 = scmp.eq.s32.totalorder %s79, 1
      %p307 = scmp.ne.s32.totalorder %s302, %s304
      %p308 = scmp.eq.s32.totalorder %s79, 0
      %p309 = por %p307, %p308
      %p310 = scmp.ne.s32.totalorder %s302, %s304
      %p311 = scmp.eq.s32.totalorder %s84, 1
      %p312 = por %p310, %p311
      %p313 = scmp.ne.s32.totalorder %s304, %s305
      %p314 = scmp.eq.s32.totalorder %s84, 0
      %p315 = por %p313, %p314
      %p316 = scmp.ne.s32.totalorder %s304, %s305
      %p317 = scmp.eq.s32.totalorder %s85, 1
      %p318 = por %p316, %p317
      %p320 = scmp.ne.s32.totalorder %s305, %s319
      %p321 = scmp.eq.s32.totalorder %s85, 0
      %p322 = por %p320, %p321
      %s324 = sadd.s32 %s323, 1
      %p327 = scmp.eq.s32.totalorder %s79, 1
      %p328 = scmp.ne.s32.totalorder %s323, %s325
      %p329 = scmp.eq.s32.totalorder %s79, 0
      %p330 = por %p328, %p329
      %p331 = scmp.ne.s32.totalorder %s323, %s325
      %p332 = scmp.eq.s32.totalorder %s84, 1
      %p333 = por %p331, %p332
      %p334 = scmp.ne.s32.totalorder %s325, %s326
      %p335 = scmp.eq.s32.totalorder %s84, 0
      %p336 = por %p334, %p335
      %p337 = scmp.ne.s32.totalorder %s325, %s326
      %p338 = scmp.eq.s32.totalorder %s85, 1
      %p339 = por %p337, %p338
      %p341 = scmp.ne.s32.totalorder %s326, %s340
      %p342 = scmp.eq.s32.totalorder %s85, 0
      %p343 = por %p341, %p342
      %s345 = sadd.s32 %s344, 1
      %p348 = scmp.eq.s32.totalorder %s79, 1
      %p349 = scmp.ne.s32.totalorder %s344, %s346
      %p350 = scmp.eq.s32.totalorder %s79, 0
      %p351 = por %p349, %p350
      %p352 = scmp.ne.s32.totalorder %s344, %s346
      %p353 = scmp.eq.s32.totalorder %s84, 1
      %p354 = por %p352, %p353
      %p355 = scmp.ne.s32.totalorder %s346, %s347
      %p356 = scmp.eq.s32.totalorder %s84, 0
      %p357 = por %p355, %p356
      %p358 = scmp.ne.s32.totalorder %s346, %s347
      %p359 = scmp.eq.s32.totalorder %s85, 1
      %p360 = por %p358, %p359
      %p362 = scmp.ne.s32.totalorder %s347, %s361
      %p363 = scmp.eq.s32.totalorder %s85, 0
      %p364 = por %p362, %p363
      %s366 = sadd.s32 %s365, 1
      %p369 = scmp.eq.s32.totalorder %s79, 1
      %p370 = scmp.ne.s32.totalorder %s365, %s367
      %p371 = scmp.eq.s32.totalorder %s79, 0
      %p372 = por %p370, %p371
      %p373 = scmp.ne.s32.totalorder %s365, %s367
      %p374 = scmp.eq.s32.totalorder %s84, 1
      %p375 = por %p373, %p374
      %p376 = scmp.ne.s32.totalorder %s367, %s368
      %p377 = scmp.eq.s32.totalorder %s84, 0
      %p378 = por %p376, %p377
      %p379 = scmp.ne.s32.totalorder %s367, %s368
      %p380 = scmp.eq.s32.totalorder %s85, 1
      %p381 = por %p379, %p380
      %p383 = scmp.ne.s32.totalorder %s368, %s382
      %p384 = scmp.eq.s32.totalorder %s85, 0
      %p385 = por %p383, %p384
      %s387 = sadd.s32 %s386, 1
      %p390 = scmp.eq.s32.totalorder %s79, 1
      %p391 = scmp.ne.s32.totalorder %s386, %s388
      %p392 = scmp.eq.s32.totalorder %s79, 0
      %p393 = por %p391, %p392
      %p394 = scmp.ne.s32.totalorder %s386, %s388
      %p395 = scmp.eq.s32.totalorder %s84, 1
      %p396 = por %p394, %p395
      %p397 = scmp.ne.s32.totalorder %s388, %s389
      %p398 = scmp.eq.s32.totalorder %s84, 0
      %p399 = por %p397, %p398
      %p400 = scmp.ne.s32.totalorder %s388, %s389
      %p401 = scmp.eq.s32.totalorder %s85, 1
      %p402 = por %p400, %p401
      %p404 = scmp.ne.s32.totalorder %s389, %s403
      %p405 = scmp.eq.s32.totalorder %s85, 0
      %p406 = por %p404, %p405
      %s408 = sadd.s32 %s407, 1
      %p411 = scmp.eq.s32.totalorder %s79, 1
      %p412 = scmp.ne.s32.totalorder %s407, %s409
      %p413 = scmp.eq.s32.totalorder %s79, 0
      %p414 = por %p412, %p413
      %p415 = scmp.ne.s32.totalorder %s407, %s409
      %p416 = scmp.eq.s32.totalorder %s84, 1
      %p417 = por %p415, %p416
      %p418 = scmp.ne.s32.totalorder %s409, %s410
      %p419 = scmp.eq.s32.totalorder %s84, 0
      %p420 = por %p418, %p419
      %p421 = scmp.ne.s32.totalorder %s409, %s410
      %p422 = scmp.eq.s32.totalorder %s85, 1
      %p423 = por %p421, %p422
      %p425 = scmp.ne.s32.totalorder %s410, %s424
      %p426 = scmp.eq.s32.totalorder %s85, 0
      %p427 = por %p425, %p426
      %s429 = sadd.s32 %s428, 1
      %p432 = scmp.eq.s32.totalorder %s79, 1
      %p433 = scmp.ne.s32.totalorder %s428, %s430
      %p434 = scmp.eq.s32.totalorder %s79, 0
      %p435 = por %p433, %p434
      %p436 = scmp.ne.s32.totalorder %s428, %s430
      %p437 = scmp.eq.s32.totalorder %s84, 1
      %p438 = por %p436, %p437
      %p439 = scmp.ne.s32.totalorder %s430, %s431
      %p440 = scmp.eq.s32.totalorder %s84, 0
      %p441 = por %p439, %p440
      %p442 = scmp.ne.s32.totalorder %s430, %s431
      %p443 = scmp.eq.s32.totalorder %s85, 1
      %p444 = por %p442, %p443
      %p446 = scmp.ne.s32.totalorder %s431, %s445
      %p447 = scmp.eq.s32.totalorder %s85, 0
      %p448 = por %p446, %p447
      %s450 = sadd.s32 %s449, 1
      %p453 = scmp.eq.s32.totalorder %s79, 1
      %p454 = scmp.ne.s32.totalorder %s449, %s451
      %p455 = scmp.eq.s32.totalorder %s79, 0
      %p456 = por %p454, %p455
      %p457 = scmp.ne.s32.totalorder %s449, %s451
      %p458 = scmp.eq.s32.totalorder %s84, 1
      %p459 = por %p457, %p458
      %p460 = scmp.ne.s32.totalorder %s451, %s452
      %p461 = scmp.eq.s32.totalorder %s84, 0
      %p462 = por %p460, %p461
      %p463 = scmp.ne.s32.totalorder %s451, %s452
      %p464 = scmp.eq.s32.totalorder %s85, 1
      %p465 = por %p463, %p464
      %p467 = scmp.ne.s32.totalorder %s452, %s466
      %p468 = scmp.eq.s32.totalorder %s85, 0
      %p469 = por %p467, %p468
      %s471 = sadd.s32 %s470, 1
      %p474 = scmp.eq.s32.totalorder %s79, 1
      %p475 = scmp.ne.s32.totalorder %s470, %s472
      %p476 = scmp.eq.s32.totalorder %s79, 0
      %p477 = por %p475, %p476
      %p478 = scmp.ne.s32.totalorder %s470, %s472
      %p479 = scmp.eq.s32.totalorder %s84, 1
      %p480 = por %p478, %p479
      %p481 = scmp.ne.s32.totalorder %s472, %s473
      %p482 = scmp.eq.s32.totalorder %s84, 0
      %p483 = por %p481, %p482
      %p484 = scmp.ne.s32.totalorder %s472, %s473
      %p485 = scmp.eq.s32.totalorder %s85, 1
      %p486 = por %p484, %p485
      %p488 = scmp.ne.s32.totalorder %s473, %s487
      %p489 = scmp.eq.s32.totalorder %s85, 0
      %p490 = por %p488, %p489
      %s492 = sadd.s32 %s491, 1
      %p495 = scmp.eq.s32.totalorder %s79, 1
      %p496 = scmp.ne.s32.totalorder %s491, %s493
      %p497 = scmp.eq.s32.totalorder %s79, 0
      %p498 = por %p496, %p497
      %p499 = scmp.ne.s32.totalorder %s491, %s493
      %p500 = scmp.eq.s32.totalorder %s84, 1
      %p501 = por %p499, %p500
      %p502 = scmp.ne.s32.totalorder %s493, %s494
      %p503 = scmp.eq.s32.totalorder %s84, 0
      %p504 = por %p502, %p503
      %p505 = scmp.ne.s32.totalorder %s493, %s494
      %p506 = scmp.eq.s32.totalorder %s85, 1
      %p507 = por %p505, %p506
      %p509 = scmp.ne.s32.totalorder %s494, %s508
      %p510 = scmp.eq.s32.totalorder %s85, 0
      %p511 = por %p509, %p510
      %s513 = sadd.s32 %s512, 1
      %p516 = scmp.eq.s32.totalorder %s79, 1
      %p517 = scmp.ne.s32.totalorder %s512, %s514
      %p518 = scmp.eq.s32.totalorder %s79, 0
      %p519 = por %p517, %p518
      %p520 = scmp.ne.s32.totalorder %s512, %s514
      %p521 = scmp.eq.s32.totalorder %s84, 1
      %p522 = por %p520, %p521
      %p523 = scmp.ne.s32.totalorder %s514, %s515
      %p524 = scmp.eq.s32.totalorder %s84, 0
      %p525 = por %p523, %p524
      %p526 = scmp.ne.s32.totalorder %s514, %s515
      %p527 = scmp.eq.s32.totalorder %s85, 1
      %p528 = por %p526, %p527
      %p530 = scmp.ne.s32.totalorder %s515, %s529
      %p531 = scmp.eq.s32.totalorder %s85, 0
      %p532 = por %p530, %p531
      %s534 = sadd.s32 %s533, 1
      %p537 = scmp.eq.s32.totalorder %s79, 1
      %p538 = scmp.ne.s32.totalorder %s533, %s535
      %p539 = scmp.eq.s32.totalorder %s79, 0
      %p540 = por %p538, %p539
      %p541 = scmp.ne.s32.totalorder %s533, %s535
      %p542 = scmp.eq.s32.totalorder %s84, 1
      %p543 = por %p541, %p542
      %p544 = scmp.ne.s32.totalorder %s535, %s536
      %p545 = scmp.eq.s32.totalorder %s84, 0
      %p546 = por %p544, %p545
      %p547 = scmp.ne.s32.totalorder %s535, %s536
      %p548 = scmp.eq.s32.totalorder %s85, 1
      %p549 = por %p547, %p548
      %p551 = scmp.ne.s32.totalorder %s536, %s550
      %p552 = scmp.eq.s32.totalorder %s85, 0
      %p553 = por %p551, %p552
      %s555 = sadd.s32 %s554, 1
      %p558 = scmp.eq.s32.totalorder %s79, 1
      %p559 = scmp.ne.s32.totalorder %s554, %s556
      %p560 = scmp.eq.s32.totalorder %s79, 0
      %p561 = por %p559, %p560
      %p562 = scmp.ne.s32.totalorder %s554, %s556
      %p563 = scmp.eq.s32.totalorder %s84, 1
      %p564 = por %p562, %p563
      %p565 = scmp.ne.s32.totalorder %s556, %s557
      %p566 = scmp.eq.s32.totalorder %s84, 0
      %p567 = por %p565, %p566
      %p568 = scmp.ne.s32.totalorder %s556, %s557
      %p569 = scmp.eq.s32.totalorder %s85, 1
      %p570 = por %p568, %p569
      %p572 = scmp.ne.s32.totalorder %s557, %s571
      %p573 = scmp.eq.s32.totalorder %s85, 0
      %p574 = por %p572, %p573
      %s576 = sadd.s32 %s575, 1
      %p579 = scmp.eq.s32.totalorder %s79, 1
      %p580 = scmp.ne.s32.totalorder %s575, %s577
      %p581 = scmp.eq.s32.totalorder %s79, 0
      %p582 = por %p580, %p581
      %p583 = scmp.ne.s32.totalorder %s575, %s577
      %p584 = scmp.eq.s32.totalorder %s84, 1
      %p585 = por %p583, %p584
      %p586 = scmp.ne.s32.totalorder %s577, %s578
      %p587 = scmp.eq.s32.totalorder %s84, 0
      %p588 = por %p586, %p587
      %p589 = scmp.ne.s32.totalorder %s577, %s578
      %p590 = scmp.eq.s32.totalorder %s85, 1
      %p591 = por %p589, %p590
      %p593 = scmp.ne.s32.totalorder %s578, %s592
      %p594 = scmp.eq.s32.totalorder %s85, 0
      %p595 = por %p593, %p594
      %s597 = sadd.s32 %s596, 1
      %p600 = scmp.eq.s32.totalorder %s79, 1
      %p601 = scmp.ne.s32.totalorder %s596, %s598
      %p602 = scmp.eq.s32.totalorder %s79, 0
      %p603 = por %p601, %p602
      %p604 = scmp.ne.s32.totalorder %s596, %s598
      %p605 = scmp.eq.s32.totalorder %s84, 1
      %p606 = por %p604, %p605
      %p607 = scmp.ne.s32.totalorder %s598, %s599
      %p608 = scmp.eq.s32.totalorder %s84, 0
      %p609 = por %p607, %p608
      %p610 = scmp.ne.s32.totalorder %s598, %s599
      %p611 = scmp.eq.s32.totalorder %s85, 1
      %p612 = por %p610, %p611
      %p614 = scmp.ne.s32.totalorder %s599, %s613
      %p615 = scmp.eq.s32.totalorder %s85, 0
      %p616 = por %p614, %p615
      %s618 = sadd.s32 %s617, 1
      %p621 = scmp.eq.s32.totalorder %s79, 1
      %p622 = scmp.ne.s32.totalorder %s617, %s619
      %p623 = scmp.eq.s32.totalorder %s79, 0
      %p624 = por %p622, %p623
      %p625 = scmp.ne.s32.totalorder %s617, %s619
      %p626 = scmp.eq.s32.totalorder %s84, 1
      %p627 = por %p625, %p626
      %p628 = scmp.ne.s32.totalorder %s619, %s620
      %p629 = scmp.eq.s32.totalorder %s84, 0
      %p630 = por %p628, %p629
      %p631 = scmp.ne.s32.totalorder %s619, %s620
      %p632 = scmp.eq.s32.totalorder %s85, 1
      %p633 = por %p631, %p632
      %p635 = scmp.ne.s32.totalorder %s620, %s634
      %p636 = scmp.eq.s32.totalorder %s85, 0
      %p637 = por %p635, %p636
      %s639 = sadd.s32 %s638, 1
      %p642 = scmp.eq.s32.totalorder %s79, 1
      %p643 = scmp.ne.s32.totalorder %s638, %s640
      %p644 = scmp.eq.s32.totalorder %s79, 0
      %p645 = por %p643, %p644
      %p646 = scmp.ne.s32.totalorder %s638, %s640
      %p647 = scmp.eq.s32.totalorder %s84, 1
      %p648 = por %p646, %p647
      %p649 = scmp.ne.s32.totalorder %s640, %s641
      %p650 = scmp.eq.s32.totalorder %s84, 0
      %p651 = por %p649, %p650
      %p652 = scmp.ne.s32.totalorder %s640, %s641
      %p653 = scmp.eq.s32.totalorder %s85, 1
      %p654 = por %p652, %p653
      %p656 = scmp.ne.s32.totalorder %s641, %s655
      %p657 = scmp.eq.s32.totalorder %s85, 0
      %p658 = por %p656, %p657
      %s660 = sadd.s32 %s659, 1
      %p663 = scmp.eq.s32.totalorder %s79, 1
      %p664 = scmp.ne.s32.totalorder %s659, %s661
      %p665 = scmp.eq.s32.totalorder %s79, 0
      %p666 = por %p664, %p665
      %p667 = scmp.ne.s32.totalorder %s659, %s661
      %p668 = scmp.eq.s32.totalorder %s84, 1
      %p669 = por %p667, %p668
      %p670 = scmp.ne.s32.totalorder %s661, %s662
      %p671 = scmp.eq.s32.totalorder %s84, 0
      %p672 = por %p670, %p671
      %p673 = scmp.ne.s32.totalorder %s661, %s662
      %p674 = scmp.eq.s32.totalorder %s85, 1
      %p675 = por %p673, %p674
      %p677 = scmp.ne.s32.totalorder %s662, %s676
      %p678 = scmp.eq.s32.totalorder %s85, 0
      %p679 = por %p677, %p678
      %s681 = sadd.s32 %s680, 1
      %p684 = scmp.eq.s32.totalorder %s79, 1
      %p685 = scmp.ne.s32.totalorder %s680, %s682
      %p686 = scmp.eq.s32.totalorder %s79, 0
      %p687 = por %p685, %p686
      %p688 = scmp.ne.s32.totalorder %s680, %s682
      %p689 = scmp.eq.s32.totalorder %s84, 1
      %p690 = por %p688, %p689
      %p691 = scmp.ne.s32.totalorder %s682, %s683
      %p692 = scmp.eq.s32.totalorder %s84, 0
      %p693 = por %p691, %p692
      %p694 = scmp.ne.s32.totalorder %s682, %s683
      %p695 = scmp.eq.s32.totalorder %s85, 1
      %p696 = por %p694, %p695
      %p698 = scmp.ne.s32.totalorder %s683, %s697
      %p699 = scmp.eq.s32.totalorder %s85, 0
      %p700 = por %p698, %p699
      %s702 = sadd.s32 %s701, 1
      %p705 = scmp.eq.s32.totalorder %s79, 1
      %p706 = scmp.ne.s32.totalorder %s701, %s703
      %p707 = scmp.eq.s32.totalorder %s79, 0
      %p708 = por %p706, %p707
      %p709 = scmp.ne.s32.totalorder %s701, %s703
      %p710 = scmp.eq.s32.totalorder %s84, 1
      %p711 = por %p709, %p710
      %p712 = scmp.ne.s32.totalorder %s703, %s704
      %p713 = scmp.eq.s32.totalorder %s84, 0
      %p714 = por %p712, %p713
      %p715 = scmp.ne.s32.totalorder %s703, %s704
      %p716 = scmp.eq.s32.totalorder %s85, 1
      %p717 = por %p715, %p716
      %p719 = scmp.ne.s32.totalorder %s704, %s718
      %p720 = scmp.eq.s32.totalorder %s85, 0
      %p721 = por %p719, %p720
      %s723 = sadd.s32 %s722, 1
      %p726 = scmp.eq.s32.totalorder %s79, 1
      %p727 = scmp.ne.s32.totalorder %s722, %s724
      %p728 = scmp.eq.s32.totalorder %s79, 0
      %p729 = por %p727, %p728
      %p730 = scmp.ne.s32.totalorder %s722, %s724
      %p731 = scmp.eq.s32.totalorder %s84, 1
      %p732 = por %p730, %p731
      %p733 = scmp.ne.s32.totalorder %s724, %s725
      %p734 = scmp.eq.s32.totalorder %s84, 0
      %p735 = por %p733, %p734
      %p736 = scmp.ne.s32.totalorder %s724, %s725
      %p737 = scmp.eq.s32.totalorder %s85, 1
      %p738 = por %p736, %p737
      %p740 = scmp.ne.s32.totalorder %s725, %s739
      %p741 = scmp.eq.s32.totalorder %s85, 0
      %p742 = por %p740, %p741
      %s744 = sadd.s32 %s743, 1
      %p747 = scmp.eq.s32.totalorder %s79, 1
      %p748 = scmp.ne.s32.totalorder %s743, %s745
      %p749 = scmp.eq.s32.totalorder %s79, 0
      %p750 = por %p748, %p749
      %p751 = scmp.ne.s32.totalorder %s743, %s745
      %p752 = scmp.eq.s32.totalorder %s84, 1
      %p753 = por %p751, %p752
      %p754 = scmp.ne.s32.totalorder %s745, %s746
      %p755 = scmp.eq.s32.totalorder %s84, 0
      %p756 = por %p754, %p755
      %p757 = scmp.ne.s32.totalorder %s745, %s746
      %p758 = scmp.eq.s32.totalorder %s85, 1
      %p759 = por %p757, %p758
      %p761 = scmp.ne.s32.totalorder %s746, %s760
      %p762 = scmp.eq.s32.totalorder %s85, 0
      %p763 = por %p761, %p762
      %s765 = sadd.s32 %s764, 1
      %p768 = scmp.eq.s32.totalorder %s79, 1
      %p769 = scmp.ne.s32.totalorder %s764, %s766
      %p770 = scmp.eq.s32.totalorder %s79, 0
      %p771 = por %p769, %p770
      %p772 = scmp.ne.s32.totalorder %s764, %s766
      %p773 = scmp.eq.s32.totalorder %s84, 1
      %p774 = por %p772, %p773
      %p775 = scmp.ne.s32.totalorder %s766, %s767
      %p776 = scmp.eq.s32.totalorder %s84, 0
      %p777 = por %p775, %p776
      %p778 = scmp.ne.s32.totalorder %s766, %s767
      %p779 = scmp.eq.s32.totalorder %s85, 1
      %p780 = por %p778, %p779
      %p782 = scmp.ne.s32.totalorder %s767, %s781
      %p783 = scmp.eq.s32.totalorder %s85, 0
      %p784 = por %p782, %p783
      %s786 = sadd.s32 %s785, 1
      %p789 = scmp.eq.s32.totalorder %s79, 1
      %p790 = scmp.ne.s32.totalorder %s785, %s787
      %p791 = scmp.eq.s32.totalorder %s79, 0
      %p792 = por %p790, %p791
      %p793 = scmp.ne.s32.totalorder %s785, %s787
      %p794 = scmp.eq.s32.totalorder %s84, 1
      %p795 = por %p793, %p794
      %p796 = scmp.ne.s32.totalorder %s787, %s788
      %p797 = scmp.eq.s32.totalorder %s84, 0
      %p798 = por %p796, %p797
      %p799 = scmp.ne.s32.totalorder %s787, %s788
      %p800 = scmp.eq.s32.totalorder %s85, 1
      %p801 = por %p799, %p800
      %p803 = scmp.ne.s32.totalorder %s788, %s802
      %p804 = scmp.eq.s32.totalorder %s85, 0
      %p805 = por %p803, %p804
      %s806 = ssub.s32 %s79, %s86
      %p807 = scmp.eq.s32.totalorder %s806, 0
      %s809 = sadd.s32 %s808, 1
      %s810 = scalar_select %p807, %s808, %s809
      %p813 = pneg %p807
      %p814 = scmp.eq.s32.totalorder %s79, 1
      %p815 = por %p813, %p814
      %p816 = scmp.ne.s32.totalorder %s808, %s811
      %p817 = scmp.eq.s32.totalorder %s79, 0
      %p818 = por %p816, %p817
      %p819 = scmp.ne.s32.totalorder %s808, %s811
      %p820 = scmp.eq.s32.totalorder %s84, 1
      %p821 = por %p819, %p820
      %p822 = scmp.ne.s32.totalorder %s811, %s812
      %p823 = scmp.eq.s32.totalorder %s84, 0
      %p824 = por %p822, %p823
      %p825 = scmp.ne.s32.totalorder %s811, %s812
      %p826 = scmp.eq.s32.totalorder %s85, 1
      %p827 = por %p825, %p826
      %p829 = scmp.ne.s32.totalorder %s812, %s828
      %p830 = scmp.eq.s32.totalorder %s85, 0
      %p831 = por %p829, %p830
      %p832 = scmp.le.s32.totalorder 1, %s79
      %p833 = scmp.lt.s32.totalorder %s79, 3
      %p834 = pnand %p832, %p833
      %p835 = pneg %p834
      // Predicated region
      $region9: #{vit_forward.1} parent=5 // pred_check
        _
      $region10: #{vit_forward.1} parent=5 // pred_check_branch
        %837 = sbr.rel (%p834) target = $region12
      $region11: #{vit_forward.1} parent=5 // pred_region
        %s838 = ssub.s32 %s79, 1
        // Predicated region
        $region13: #{vit_forward.1} parent=11 // pred_check
          %p839 = pneg %p126
        $region14: #{vit_forward.1} parent=11 // pred_check_branch
          %841 = sbr.rel (%p839) target = $region16
        $region15: #{vit_forward.1} parent=11 // pred_region
          _
        $region16: #{vit_forward.1} parent=11 // pred_fallthru
          _
        // Predicated region
        $region17: #{vit_forward.1} parent=11 // pred_check
          %p842 = pneg %p147
        $region18: #{vit_forward.1} parent=11 // pred_check_branch
          %844 = sbr.rel (%p842) target = $region20
        $region19: #{vit_forward.1} parent=11 // pred_region
          _
        $region20: #{vit_forward.1} parent=11 // pred_fallthru
          _
        // Predicated region
        $region21: #{vit_forward.1} parent=11 // pred_check
          %p845 = pneg %p168
        $region22: #{vit_forward.1} parent=11 // pred_check_branch
          %847 = sbr.rel (%p845) target = $region24
        $region23: #{vit_forward.1} parent=11 // pred_region
          _
        $region24: #{vit_forward.1} parent=11 // pred_fallthru
          _
        // Predicated region
        $region25: #{vit_forward.1} parent=11 // pred_check
          %p848 = pneg %p189
        $region26: #{vit_forward.1} parent=11 // pred_check_branch
          %850 = sbr.rel (%p848) target = $region28
        $region27: #{vit_forward.1} parent=11 // pred_region
          _
        $region28: #{vit_forward.1} parent=11 // pred_fallthru
          _
        // Predicated region
        $region29: #{vit_forward.1} parent=11 // pred_check
          %p851 = pneg %p210
        $region30: #{vit_forward.1} parent=11 // pred_check_branch
          %853 = sbr.rel (%p851) target = $region32
        $region31: #{vit_forward.1} parent=11 // pred_region
          _
        $region32: #{vit_forward.1} parent=11 // pred_fallthru
          _
        // Predicated region
        $region33: #{vit_forward.1} parent=11 // pred_check
          %p854 = pneg %p231
        $region34: #{vit_forward.1} parent=11 // pred_check_branch
          %856 = sbr.rel (%p854) target = $region36
        $region35: #{vit_forward.1} parent=11 // pred_region
          _
        $region36: #{vit_forward.1} parent=11 // pred_fallthru
          _
        // Predicated region
        $region37: #{vit_forward.1} parent=11 // pred_check
          %p857 = pneg %p252
        $region38: #{vit_forward.1} parent=11 // pred_check_branch
          %859 = sbr.rel (%p857) target = $region40
        $region39: #{vit_forward.1} parent=11 // pred_region
          _
        $region40: #{vit_forward.1} parent=11 // pred_fallthru
          _
        // Predicated region
        $region41: #{vit_forward.1} parent=11 // pred_check
          %p860 = pneg %p273
        $region42: #{vit_forward.1} parent=11 // pred_check_branch
          %862 = sbr.rel (%p860) target = $region44
        $region43: #{vit_forward.1} parent=11 // pred_region
          _
        $region44: #{vit_forward.1} parent=11 // pred_fallthru
          _
        // Predicated region
        $region45: #{vit_forward.1} parent=11 // pred_check
          %p863 = pneg %p294
        $region46: #{vit_forward.1} parent=11 // pred_check_branch
          %865 = sbr.rel (%p863) target = $region48
        $region47: #{vit_forward.1} parent=11 // pred_region
          _
        $region48: #{vit_forward.1} parent=11 // pred_fallthru
          _
        // Predicated region
        $region49: #{vit_forward.1} parent=11 // pred_check
          %p866 = pneg %p315
        $region50: #{vit_forward.1} parent=11 // pred_check_branch
          %868 = sbr.rel (%p866) target = $region52
        $region51: #{vit_forward.1} parent=11 // pred_region
          _
        $region52: #{vit_forward.1} parent=11 // pred_fallthru
          _
        // Predicated region
        $region53: #{vit_forward.1} parent=11 // pred_check
          %p869 = pneg %p336
        $region54: #{vit_forward.1} parent=11 // pred_check_branch
          %871 = sbr.rel (%p869) target = $region56
        $region55: #{vit_forward.1} parent=11 // pred_region
          _
        $region56: #{vit_forward.1} parent=11 // pred_fallthru
          _
        // Predicated region
        $region57: #{vit_forward.1} parent=11 // pred_check
          %p872 = pneg %p357
        $region58: #{vit_forward.1} parent=11 // pred_check_branch
          %874 = sbr.rel (%p872) target = $region60
        $region59: #{vit_forward.1} parent=11 // pred_region
          _
        $region60: #{vit_forward.1} parent=11 // pred_fallthru
          _
        // Predicated region
        $region61: #{vit_forward.1} parent=11 // pred_check
          %p875 = pneg %p378
        $region62: #{vit_forward.1} parent=11 // pred_check_branch
          %877 = sbr.rel (%p875) target = $region64
        $region63: #{vit_forward.1} parent=11 // pred_region
          _
        $region64: #{vit_forward.1} parent=11 // pred_fallthru
          _
        // Predicated region
        $region65: #{vit_forward.1} parent=11 // pred_check
          %p878 = pneg %p399
        $region66: #{vit_forward.1} parent=11 // pred_check_branch
          %880 = sbr.rel (%p878) target = $region68
        $region67: #{vit_forward.1} parent=11 // pred_region
          _
        $region68: #{vit_forward.1} parent=11 // pred_fallthru
          _
        // Predicated region
        $region69: #{vit_forward.1} parent=11 // pred_check
          %p881 = pneg %p420
        $region70: #{vit_forward.1} parent=11 // pred_check_branch
          %883 = sbr.rel (%p881) target = $region72
        $region71: #{vit_forward.1} parent=11 // pred_region
          _
        $region72: #{vit_forward.1} parent=11 // pred_fallthru
          _
        // Predicated region
        $region73: #{vit_forward.1} parent=11 // pred_check
          %p884 = pneg %p441
        $region74: #{vit_forward.1} parent=11 // pred_check_branch
          %886 = sbr.rel (%p884) target = $region76
        $region75: #{vit_forward.1} parent=11 // pred_region
          _
        $region76: #{vit_forward.1} parent=11 // pred_fallthru
          _
        // Predicated region
        $region77: #{vit_forward.1} parent=11 // pred_check
          %p887 = pneg %p462
        $region78: #{vit_forward.1} parent=11 // pred_check_branch
          %889 = sbr.rel (%p887) target = $region80
        $region79: #{vit_forward.1} parent=11 // pred_region
          _
        $region80: #{vit_forward.1} parent=11 // pred_fallthru
          _
        // Predicated region
        $region81: #{vit_forward.1} parent=11 // pred_check
          %p890 = pneg %p483
        $region82: #{vit_forward.1} parent=11 // pred_check_branch
          %892 = sbr.rel (%p890) target = $region84
        $region83: #{vit_forward.1} parent=11 // pred_region
          _
        $region84: #{vit_forward.1} parent=11 // pred_fallthru
          _
        // Predicated region
        $region85: #{vit_forward.1} parent=11 // pred_check
          %p893 = pneg %p504
        $region86: #{vit_forward.1} parent=11 // pred_check_branch
          %895 = sbr.rel (%p893) target = $region88
        $region87: #{vit_forward.1} parent=11 // pred_region
          _
        $region88: #{vit_forward.1} parent=11 // pred_fallthru
          _
        // Predicated region
        $region89: #{vit_forward.1} parent=11 // pred_check
          %p896 = pneg %p525
        $region90: #{vit_forward.1} parent=11 // pred_check_branch
          %898 = sbr.rel (%p896) target = $region92
        $region91: #{vit_forward.1} parent=11 // pred_region
          _
        $region92: #{vit_forward.1} parent=11 // pred_fallthru
          _
        // Predicated region
        $region93: #{vit_forward.1} parent=11 // pred_check
          %p899 = pneg %p546
        $region94: #{vit_forward.1} parent=11 // pred_check_branch
          %901 = sbr.rel (%p899) target = $region96
        $region95: #{vit_forward.1} parent=11 // pred_region
          _
        $region96: #{vit_forward.1} parent=11 // pred_fallthru
          _
        // Predicated region
        $region97: #{vit_forward.1} parent=11 // pred_check
          %p902 = pneg %p567
        $region98: #{vit_forward.1} parent=11 // pred_check_branch
          %904 = sbr.rel (%p902) target = $region100
        $region99: #{vit_forward.1} parent=11 // pred_region
          _
        $region100: #{vit_forward.1} parent=11 // pred_fallthru
          _
        // Predicated region
        $region101: #{vit_forward.1} parent=11 // pred_check
          %p905 = pneg %p588
        $region102: #{vit_forward.1} parent=11 // pred_check_branch
          %907 = sbr.rel (%p905) target = $region104
        $region103: #{vit_forward.1} parent=11 // pred_region
          _
        $region104: #{vit_forward.1} parent=11 // pred_fallthru
          _
        // Predicated region
        $region105: #{vit_forward.1} parent=11 // pred_check
          %p908 = pneg %p609
        $region106: #{vit_forward.1} parent=11 // pred_check_branch
          %910 = sbr.rel (%p908) target = $region108
        $region107: #{vit_forward.1} parent=11 // pred_region
          _
        $region108: #{vit_forward.1} parent=11 // pred_fallthru
          _
        // Predicated region
        $region109: #{vit_forward.1} parent=11 // pred_check
          %p911 = pneg %p630
        $region110: #{vit_forward.1} parent=11 // pred_check_branch
          %913 = sbr.rel (%p911) target = $region112
        $region111: #{vit_forward.1} parent=11 // pred_region
          _
        $region112: #{vit_forward.1} parent=11 // pred_fallthru
          _
        // Predicated region
        $region113: #{vit_forward.1} parent=11 // pred_check
          %p914 = pneg %p651
        $region114: #{vit_forward.1} parent=11 // pred_check_branch
          %916 = sbr.rel (%p914) target = $region116
        $region115: #{vit_forward.1} parent=11 // pred_region
          _
        $region116: #{vit_forward.1} parent=11 // pred_fallthru
          _
        // Predicated region
        $region117: #{vit_forward.1} parent=11 // pred_check
          %p917 = pneg %p672
        $region118: #{vit_forward.1} parent=11 // pred_check_branch
          %919 = sbr.rel (%p917) target = $region120
        $region119: #{vit_forward.1} parent=11 // pred_region
          _
        $region120: #{vit_forward.1} parent=11 // pred_fallthru
          _
        // Predicated region
        $region121: #{vit_forward.1} parent=11 // pred_check
          %p920 = pneg %p693
        $region122: #{vit_forward.1} parent=11 // pred_check_branch
          %922 = sbr.rel (%p920) target = $region124
        $region123: #{vit_forward.1} parent=11 // pred_region
          _
        $region124: #{vit_forward.1} parent=11 // pred_fallthru
          _
        // Predicated region
        $region125: #{vit_forward.1} parent=11 // pred_check
          %p923 = pneg %p714
        $region126: #{vit_forward.1} parent=11 // pred_check_branch
          %925 = sbr.rel (%p923) target = $region128
        $region127: #{vit_forward.1} parent=11 // pred_region
          _
        $region128: #{vit_forward.1} parent=11 // pred_fallthru
          _
        // Predicated region
        $region129: #{vit_forward.1} parent=11 // pred_check
          %p926 = pneg %p735
        $region130: #{vit_forward.1} parent=11 // pred_check_branch
          %928 = sbr.rel (%p926) target = $region132
        $region131: #{vit_forward.1} parent=11 // pred_region
          _
        $region132: #{vit_forward.1} parent=11 // pred_fallthru
          _
        // Predicated region
        $region133: #{vit_forward.1} parent=11 // pred_check
          %p929 = pneg %p756
        $region134: #{vit_forward.1} parent=11 // pred_check_branch
          %931 = sbr.rel (%p929) target = $region136
        $region135: #{vit_forward.1} parent=11 // pred_region
          _
        $region136: #{vit_forward.1} parent=11 // pred_fallthru
          _
        // Predicated region
        $region137: #{vit_forward.1} parent=11 // pred_check
          %p932 = pneg %p777
        $region138: #{vit_forward.1} parent=11 // pred_check_branch
          %934 = sbr.rel (%p932) target = $region140
        $region139: #{vit_forward.1} parent=11 // pred_region
          _
        $region140: #{vit_forward.1} parent=11 // pred_fallthru
          _
        // Predicated region
        $region141: #{vit_forward.1} parent=11 // pred_check
          %p935 = pneg %p798
        $region142: #{vit_forward.1} parent=11 // pred_check_branch
          %937 = sbr.rel (%p935) target = $region144
        $region143: #{vit_forward.1} parent=11 // pred_region
          %s939 = ssub.s32 16, 16
          %940 = vsyncadd [#allocation4], %s939
          %s942 = sshll.u32 %s67, 4
          %s943 = int_to_ptr.vmem [resolvable:$true] %s942
          %945 = dma.vmem_to_smem %s943, 16, [#allocation2], [#allocation4]
        $region144: #{vit_forward.1} parent=11 // pred_fallthru
          _
      $region12: #{vit_forward.1} parent=5 // pred_fallthru
        _
      %p946 = scmp.lt.s32.totalorder %s79, 2
      // Predicated region
      $region145: #{vit_forward.1} parent=5 // pred_check
        %p947 = pneg %p946
      $region146: #{vit_forward.1} parent=5 // pred_check_branch
        %949 = sbr.rel (%p947) target = $region148
      $region147: #{vit_forward.1} parent=5 // pred_region
        // Predicated region
        $region149: #{vit_forward.1} parent=147 // pred_check
          %p950 = pneg %p99
        $region150: #{vit_forward.1} parent=147 // pred_check_branch
          %952 = sbr.rel (%p950) target = $region152
        $region151: #{vit_forward.1} parent=147 // pred_region
          %p953 = scmp.lt.s32.totalorder %s79, 1
          %s954 = scalar_select %p953, %s79, 1
          %s955 = smul.addr %s954, 4
          %s956 = smul.addr %s955, 8
          %s957 = scalar_lea.vmem %s1, %s956
        $region152: #{vit_forward.1} parent=147 // pred_fallthru
          _
      $region148: #{vit_forward.1} parent=5 // pred_fallthru
        _
      %p958 = scmp.le.s32.totalorder 1, %s79
      %p959 = scmp.lt.s32.totalorder %s79, 3
      %p960 = pnand %p958, %p959
      %p961 = pneg %p960
      // Predicated region
      $region153: #{vit_forward.1} parent=5 // pred_check
        _
      $region154: #{vit_forward.1} parent=5 // pred_check_branch
        %963 = sbr.rel (%p960) target = $region156
      $region155: #{vit_forward.1} parent=5 // pred_region
        %s964 = ssub.s32 %s79, 1
        // Predicated region
        $region157: #{vit_forward.1} parent=155 // pred_check
          %p965 = pneg %p798
        $region158: #{vit_forward.1} parent=155 // pred_check_branch
          %967 = sbr.rel (%p965) target = $region160
        $region159: #{vit_forward.1} parent=155 // pred_region
          %968 = dma.done [#allocation4], 16
        $region160: #{vit_forward.1} parent=155 // pred_fallthru
          _
        %969 = sfence
        %p970 = scmp.lt.s32.totalorder %s84, 1
        %s971 = scalar_select %p970, %s84, 1
        %s972 = smul.addr %s971, 4
        %s973 = smul.addr %s972, 8
        %s974 = scalar_lea.vmem %s1, %s973
        %p975 = pneg %p105
        %p976 = pneg %p102
        %p977 = pneg %p126
        %p978 = pneg %p123
        %p979 = pneg %p147
        %p980 = pneg %p144
        %p981 = pneg %p168
        %p982 = pneg %p165
        %p983 = pneg %p189
        %p984 = pneg %p186
        %p985 = pneg %p210
        %p986 = pneg %p207
        %p987 = pneg %p231
        %p988 = pneg %p228
        %p989 = pneg %p252
        %p990 = pneg %p249
        %p991 = pneg %p273
        %p992 = pneg %p270
        %p993 = pneg %p294
        %p994 = pneg %p291
        %p995 = pneg %p315
        %p996 = pneg %p312
        %p997 = pneg %p336
        %p998 = pneg %p333
        %p999 = pneg %p357
        %p1000 = pneg %p354
        %p1001 = pneg %p378
        %p1002 = pneg %p375
        %p1003 = pneg %p399
        %p1004 = pneg %p396
        %p1005 = pneg %p420
        %p1006 = pneg %p417
        %p1007 = pneg %p441
        %p1008 = pneg %p438
        %p1009 = pneg %p462
        %p1010 = pneg %p459
        %p1011 = pneg %p483
        %p1012 = pneg %p480
        %p1013 = pneg %p504
        %p1014 = pneg %p501
        %p1015 = pneg %p525
        %p1016 = pneg %p522
        %p1017 = pneg %p546
        %p1018 = pneg %p543
        %p1019 = pneg %p567
        %p1020 = pneg %p564
        %p1021 = pneg %p588
        %p1022 = pneg %p585
        %p1023 = pneg %p609
        %p1024 = pneg %p606
        %p1025 = pneg %p630
        %p1026 = pneg %p627
        %p1027 = pneg %p651
        %p1028 = pneg %p648
        %p1029 = pneg %p672
        %p1030 = pneg %p669
        %p1031 = pneg %p693
        %p1032 = pneg %p690
        %p1033 = pneg %p714
        %p1034 = pneg %p711
        %p1035 = pneg %p735
        %p1036 = pneg %p732
        %p1037 = pneg %p756
        %p1038 = pneg %p753
        %p1039 = pneg %p777
        %p1040 = pneg %p774
        %p1041 = pneg %p798
        %p1042 = pneg %p795
        %p1043 = pneg %p824
        %p1044 = pneg %p821
        %s1045 = sand.u32 %s811, 1
        %s1046 = scalar_lea.sflag [#allocation3], %s1045
        %s1047 = sand.u32 %s811, 1
        %s1048 = scalar_lea.vmem [#allocation5], %s1047
        %p1049 = scmp.lt.s32.totalorder %s84, 1
        %s1050 = scalar_select %p1049, %s84, 1
        %s1051 = smul.addr %s1050, 4
        %s1052 = smul.addr %s1051, 8
        %s1053 = scalar_lea.vmem %s1, %s1052
        %v1054 = vld [vmem:[%s1053] sm:$0xff]
        %v1055 = vld [vmem:[%s1053 + $0x8] sm:$0xff]
        %v1056 = vld [vmem:[%s1053 + $0x10] sm:$0xff]
        %v1057 = vld [vmem:[%s1053 + $0x18] sm:$0xff]
        %v1058 = vld [vmem:[%s7] sm:$0x3]
        %v1059 = vld [vmem:[%s9] sm:$0x3]
        %vm1060 = vcmask 916480
        %v1061 = vsel %vm1060, %v1055, 0.0
        %v1062 = vadd.f32 %v1054, %v1061
        %1063 = vadd.xlane.f32.xlu0 %v1062
        %v1064 = vpop.xlane.xlu0 %1063
        %v1065 = vsel %vm1060, %v1057, 0.0
        %v1066 = vadd.f32 %v1056, %v1065
        %1067 = vadd.xlane.f32.xlu0 %v1066
        %v1068 = vpop.xlane.xlu0 %1067
        %v1069 = vrcp.pop 240.0
        %v1070 = vmul.f32 %v1064, %v1069
        %v1071 = vmul.f32 %v1068, %v1069
        %v1072 = vsub.f32 %v1054, %v1070
        %v1073 = vsub.f32 %v1055, %v1070
        %v1074 = vsub.f32 %v1056, %v1071
        %v1075 = vsub.f32 %v1057, %v1071
        %v1076 = vmul.f32 %v1072, %v1072
        %v1077 = vmul.f32 %v1073, %v1073
        %v1078 = vmul.f32 %v1074, %v1074
        %v1079 = vmul.f32 %v1075, %v1075
        %v1080 = vsel %vm1060, %v1077, 0.0
        %v1081 = vadd.f32 %v1076, %v1080
        %1082 = vadd.xlane.f32.xlu0 %v1081
        %v1083 = vpop.xlane.xlu0 %1082
        %v1084 = vsel %vm1060, %v1079, 0.0
        %v1085 = vadd.f32 %v1078, %v1084
        %1086 = vadd.xlane.f32.xlu0 %v1085
        %v1087 = vpop.xlane.xlu0 %1086
        %v1088 = vmul.f32 %v1083, %v1069
        %v1089 = vmul.f32 %v1087, %v1069
        %v1090 = vadd.f32 %v1088, 1e-05
        %v1091 = vadd.f32 %v1089, 1e-05
        %v1092 = vrsqrt.pop %v1090
        %v1093 = vrsqrt.pop %v1091
        %v1094 = vmul.f32 %v1072, %v1092
        %v1095 = vmul.f32 %v1073, %v1092
        %v1096 = vmul.f32 %v1074, %v1093
        %v1097 = vmul.f32 %v1075, %v1093
        %v1099 = vlaneseq
        %v1100 = vshrl.u32 %v1099, 7
        %v1101 = vsub.s32 0, %v1100
        %v1102 = vrot.slane %v1058, %v1101
        %v1103 = vlaneseq
        %v1104 = vshrl.u32 %v1103, 7
        %v1105 = vsub.s32 1, %v1104
        %v1106 = vrot.slane %v1058, %v1105
        %v1109 = vmul.f32 %v1094, %v1102
        %v1110 = vmul.f32 %v1095, %v1106
        %v1111 = vmul.f32 %v1096, %v1102
        %v1112 = vmul.f32 %v1097, %v1106
        %v1114 = vlaneseq
        %v1115 = vshrl.u32 %v1114, 7
        %v1116 = vsub.s32 0, %v1115
        %v1117 = vrot.slane %v1059, %v1116
        %v1118 = vlaneseq
        %v1119 = vshrl.u32 %v1118, 7
        %v1120 = vsub.s32 1, %v1119
        %v1121 = vrot.slane %v1059, %v1120
        %v1124 = vadd.f32 %v1109, %v1117
        %v1125 = vadd.f32 %v1110, %v1121
        %v1126 = vadd.f32 %v1111, %v1117
        %v1127 = vadd.f32 %v1112, %v1121
        %v1128 = vld [vmem:[%s11] sm:$0xff]
        %v1129 = vld [vmem:[%s11 + $0x8] sm:$0xff]
        %v1130 = vld [vmem:[%s11 + $0x10] sm:$0xff]
        %v1131 = vld [vmem:[%s11 + $0x18] sm:$0xff]
        %v1132 = vld [vmem:[%s11 + $0x20] sm:$0xff]
        %v1133 = vld [vmem:[%s11 + $0x28] sm:$0xff]
        %v1134 = vld [vmem:[%s11 + $0x30] sm:$0xff]
        %v1135 = vld [vmem:[%s11 + $0x38] sm:$0xff]
        %v1136 = vld [vmem:[%s11 + $0x40] sm:$0xff]
        %v1137 = vld [vmem:[%s11 + $0x48] sm:$0xff]
        %v1138 = vld [vmem:[%s11 + $0x50] sm:$0xff]
        %v1139 = vld [vmem:[%s11 + $0x58] sm:$0xff]
        %v1140 = vld [vmem:[%s11 + $0x60] sm:$0xff]
        %v1141 = vld [vmem:[%s11 + $0x68] sm:$0xff]
        %v1142 = vld [vmem:[%s11 + $0x70] sm:$0xff]
        %v1143 = vld [vmem:[%s11 + $0x78] sm:$0xff]
        %v1144 = vld [vmem:[%s11 + $0x80] sm:$0xff]
        %v1145 = vld [vmem:[%s11 + $0x88] sm:$0xff]
        %v1146 = vld [vmem:[%s11 + $0x90] sm:$0xff]
        %v1147 = vld [vmem:[%s11 + $0x98] sm:$0xff]
        %v1148 = vld [vmem:[%s11 + $0xa0] sm:$0xff]
        %v1149 = vld [vmem:[%s11 + $0xa8] sm:$0xff]
        %v1150 = vld [vmem:[%s11 + $0xb0] sm:$0xff]
        %v1151 = vld [vmem:[%s11 + $0xb8] sm:$0xff]
        %v1152 = vld [vmem:[%s11 + $0xc0] sm:$0xff]
        %v1153 = vld [vmem:[%s11 + $0xc8] sm:$0xff]
        %v1154 = vld [vmem:[%s11 + $0xd0] sm:$0xff]
        %v1155 = vld [vmem:[%s11 + $0xd8] sm:$0xff]
        %v1156 = vld [vmem:[%s11 + $0xe0] sm:$0xff]
        %v1157 = vld [vmem:[%s11 + $0xe8] sm:$0xff]
        %v1158 = vld [vmem:[%s13] sm:$0x1]
        %v1160 = vlaneseq
        %v1161 = vshrl.u32 %v1160, 7
        %v1162 = vsub.s32 0, %v1161
        %v1163 = vrot.slane %v1158, %v1162
        %v1166 = vsel %vm1060, %v1125, 0
        %v1169 = vsel %vm1060, %v1127, 0
        %1171 = vmatprep.subr.mxu0 0.0
        %1172 = vmatpush1.msra.mxu0 %v1128
        %1173 = vmatprep.subr.mxu0 0.0
        %1174 = vmatpush1.msra.mxu0 %v1129
        %1175 = vmatprep.subr.mxu0 0.0
        %1176 = vmatpush1.msra.mxu0 %v1130
        %1177 = vmatprep.subr.mxu0 0.0
        %1178 = vmatpush1.msra.mxu0 %v1131
        %1179 = vmatprep.subr.mxu0 0.0
        %1180 = vmatpush1.msra.mxu0 %v1132
        %1181 = vmatprep.subr.mxu0 0.0
        %1182 = vmatpush1.msra.mxu0 %v1133
        %1183 = vmatprep.subr.mxu0 0.0
        %1184 = vmatpush1.msra.mxu0 %v1134
        %1185 = vmatprep.subr.mxu0 0.0
        %1186 = vmatpush1.msra.mxu0 %v1135
        %1187 = vmatprep.subr.mxu0 0.0
        %1188 = vmatpush1.msra.mxu0 %v1136
        %1189 = vmatprep.subr.mxu0 0.0
        %1190 = vmatpush1.msra.mxu0 %v1137
        %1191 = vmatprep.subr.mxu0 0.0
        %1192 = vmatpush1.msra.mxu0 %v1138
        %1193 = vmatprep.subr.mxu0 0.0
        %1194 = vmatpush1.msra.mxu0 %v1139
        %1195 = vmatprep.subr.mxu0 0.0
        %1196 = vmatpush1.msra.mxu0 %v1140
        %1197 = vmatprep.subr.mxu0 0.0
        %1198 = vmatpush1.msra.mxu0 %v1141
        %1199 = vmatprep.subr.mxu0 0.0
        %1200 = vmatpush1.msra.mxu0 %v1142
        %1201 = vmatprep.subr.mxu0 0.0
        %1202 = vmatpush1.msra.mxu0 %v1143
        %1203 = vmatprep.subr.mxu0 0.0
        %1204 = vmatpush1.msra.mxu0 %v1144
        %1205 = vmatprep.subr.mxu0 0.0
        %1206 = vmatpush1.msra.mxu0 %v1145
        %1207 = vmatprep.subr.mxu0 0.0
        %1208 = vmatpush1.msra.mxu0 %v1146
        %1209 = vmatprep.subr.mxu0 0.0
        %1210 = vmatpush1.msra.mxu0 %v1147
        %1211 = vmatprep.subr.mxu0 0.0
        %1212 = vmatpush1.msra.mxu0 %v1148
        %1213 = vmatprep.subr.mxu0 0.0
        %1214 = vmatpush1.msra.mxu0 %v1149
        %1215 = vmatprep.subr.mxu0 0.0
        %1216 = vmatpush1.msra.mxu0 %v1150
        %1217 = vmatprep.subr.mxu0 0.0
        %1218 = vmatpush1.msra.mxu0 %v1151
        %1219 = vmatprep.subr.mxu0 0.0
        %1220 = vmatpush1.msra.mxu0 %v1152
        %1221 = vmatprep.subr.mxu0 0.0
        %1222 = vmatpush1.msra.mxu0 %v1153
        %1223 = vmatprep.subr.mxu0 0.0
        %1224 = vmatpush1.msra.mxu0 %v1154
        %1225 = vmatprep.subr.mxu0 0.0
        %1226 = vmatpush1.msra.mxu0 %v1155
        %1227 = vmatprep.subr.mxu0 0.0
        %1228 = vmatpush1.msra.mxu0 %v1156
        %1229 = vmatprep.subr.mxu0 0.0
        %1230 = vmatpush1.msra.mxu0 %v1157
        %1231 = vmatprep.subr.mxu0 0.0
        %1232 = vmatpush1.msra.mxu0 0.0
        %1233 = vmatprep.subr.mxu0 0.0
        %1234 = vmatpush1.msra.mxu0 0.0
        %1235 = vmatprep.mubr.f32.mxu0 %v1166
        %1236 = vmatmul.mubr.f32.gmra.mrb[0].mxu0 %v1124
        %v1237 = vpop.f32.mrb[0].mxu0
        %v1238 = vadd.f32 %v1163, %v1237
        %v1239 = vpop.f32.mrb[0].mxu0
        %1240 = vmatprep.mubr.f32.mxu0 %v1169
        %1241 = vmatmul.mubr.f32.gmra.mrb[0].mxu0 %v1126
        %v1242 = vpop.f32.mrb[0].mxu0
        %v1243 = vadd.f32 %v1163, %v1242
        %v1244 = vpop.f32.mrb[0].mxu0
        %1245 = vdwg.mxu0
        %v1246 = vld [vmem:[%s3] sm:$0x1]
        %vm1249 = vcmask 1040384
        %v1250 = vrot.slane %v1238, 7
        %v1251 = vrot.slane %v1243, 7
        %v1252 = vsel %vm1249, %v1250, %v1251
        %v1256 = vsel %vm1249, %v1246, %v1250
        %v1257 = vld [vmem:[%s5] sm:$0xff]
        %v1258 = vld [vmem:[%s5 + $0x8] sm:$0xff]
        %v1259 = vld [vmem:[%s5 + $0x10] sm:$0x1]
        %v1260 = vadd.f32 %v1256, %v1257
        %v1261 = vadd.f32 %v1252, %v1258
        %v1262 = vadd.f32 %v1251, %v1259
        %v1263 = vlaneseq
        %v1264 = vshrl.u32 %v1263, 7
        %v1265 = vadd.s32 %v1264, 8
        %v1266 = vadd.s32 %v1264, 16
        %v1267 = vlaneseq
        %v1268 = vand.u32 %v1267, 127
        %vm1269 = vcmp.eq.s32.totalorder %v1264, %v1268
        %vm1270 = vcmp.eq.s32.totalorder %v1265, %v1268
        %vm1271 = vcmp.eq.s32.totalorder %v1266, %v1268
        %s1272 = sld [smem:[#allocation2]]
        %v1273 = vld [vmem:[%s15] sm:$0x1]
        %v1274 = vld [vmem:[%s17] sm:$0x1]
        %vm1275 = vcmask 261120
        %v1276 = vsel %vm1275, %v1260, 0.0
        %1277 = vadd.xlane.f32.xlu0 %v1276
        %v1278 = vpop.xlane.xlu0 %1277
        %v1279 = vsel %vm1275, %v1261, 0.0
        %1280 = vadd.xlane.f32.xlu0 %v1279
        %v1281 = vpop.xlane.xlu0 %1280
        %vm1282 = vcmask 253952
        %v1283 = vsel %vm1282, %v1262, 0.0
        %1284 = vadd.xlane.f32.xlu0 %v1283
        %v1285 = vpop.xlane.xlu0 %1284
        %v1286 = vrcp.pop 32.0
        %v1287 = vmul.f32 %v1278, %v1286
        %v1288 = vmul.f32 %v1281, %v1286
        %v1289 = vmul.f32 %v1285, %v1286
        %v1290 = vsub.f32 %v1260, %v1287
        %v1291 = vsub.f32 %v1261, %v1288
        %v1292 = vsub.f32 %v1262, %v1289
        %v1293 = vmul.f32 %v1290, %v1290
        %v1294 = vmul.f32 %v1291, %v1291
        %v1295 = vmul.f32 %v1292, %v1292
        %v1296 = vsel %vm1275, %v1293, 0.0
        %1297 = vadd.xlane.f32.xlu0 %v1296
        %v1298 = vpop.xlane.xlu0 %1297
        %v1299 = vsel %vm1275, %v1294, 0.0
        %1300 = vadd.xlane.f32.xlu0 %v1299
        %v1301 = vpop.xlane.xlu0 %1300
        %v1302 = vsel %vm1282, %v1295, 0.0
        %1303 = vadd.xlane.f32.xlu0 %v1302
        %v1304 = vpop.xlane.xlu0 %1303
        %v1305 = vmul.f32 %v1298, %v1286
        %v1306 = vmul.f32 %v1301, %v1286
        %v1307 = vmul.f32 %v1304, %v1286
        %v1308 = vadd.f32 %v1305, 1e-05
        %v1309 = vadd.f32 %v1306, 1e-05
        %v1310 = vadd.f32 %v1307, 1e-05
        %v1311 = vrsqrt.pop %v1308
        %v1312 = vrsqrt.pop %v1309
        %v1313 = vrsqrt.pop %v1310
        %v1314 = vmul.f32 %v1290, %v1311
        %v1315 = vmul.f32 %v1291, %v1312
        %v1316 = vmul.f32 %v1292, %v1313
        %v1318 = vlaneseq
        %v1319 = vshrl.u32 %v1318, 7
        %v1320 = vsub.s32 0, %v1319
        %v1321 = vrot.slane %v1273, %v1320
        %v1323 = vmul.f32 %v1314, %v1321
        %v1324 = vmul.f32 %v1315, %v1321
        %v1325 = vmul.f32 %v1316, %v1321
        %v1327 = vlaneseq
        %v1328 = vshrl.u32 %v1327, 7
        %v1329 = vsub.s32 0, %v1328
        %v1330 = vrot.slane %v1274, %v1329
        %v1332 = vadd.f32 %v1323, %v1330
        %v1333 = vadd.f32 %v1324, %v1330
        %v1334 = vadd.f32 %v1325, %v1330
        %v1335 = vld [vmem:[%s19] sm:$0xff]
        %v1336 = vld [vmem:[%s19 + $0x8] sm:$0xff]
        %v1337 = vld [vmem:[%s19 + $0x10] sm:$0xff]
        %v1338 = vld [vmem:[%s19 + $0x18] sm:$0xff]
        %v1340 = vsel %vm1275, %v1332, 0
        %v1343 = vsel %vm1275, %v1333, 0
        %v1346 = vsel %vm1275, %v1334, 0
        %1348 = vmatprep.subr.mxu0 0.0
        %1349 = vmatpush1.msra.mxu0 %v1335
        %1350 = vmatprep.subr.mxu0 0.0
        %1351 = vmatpush1.msra.mxu0 %v1336
        %1352 = vmatprep.subr.mxu0 0.0
        %1353 = vmatpush1.msra.mxu0 %v1337
        %1354 = vmatprep.subr.mxu0 0.0
        %1355 = vmatpush1.msra.mxu0 %v1338
        %1356 = vmatprep.subr.mxu0 0.0
        %1357 = vmatpush1.msra.mxu0 0.0
        %1358 = vmatprep.subr.mxu0 0.0
        %1359 = vmatpush1.msra.mxu0 0.0
        %1360 = vmatprep.subr.mxu0 0.0
        %1361 = vmatpush1.msra.mxu0 0.0
        %1362 = vmatprep.subr.mxu0 0.0
        %1363 = vmatpush1.msra.mxu0 0.0
        %1364 = vmatprep.subr.mxu0 0.0
        %1365 = vmatpush1.msra.mxu0 0.0
        %1366 = vmatprep.subr.mxu0 0.0
        %1367 = vmatpush1.msra.mxu0 0.0
        %1368 = vmatprep.subr.mxu0 0.0
        %1369 = vmatpush1.msra.mxu0 0.0
        %1370 = vmatprep.subr.mxu0 0.0
        %1371 = vmatpush1.msra.mxu0 0.0
        %1372 = vmatprep.subr.mxu0 0.0
        %1373 = vmatpush1.msra.mxu0 0.0
        %1374 = vmatprep.subr.mxu0 0.0
        %1375 = vmatpush1.msra.mxu0 0.0
        %1376 = vmatprep.subr.mxu0 0.0
        %1377 = vmatpush1.msra.mxu0 0.0
        %1378 = vmatprep.subr.mxu0 0.0
        %1379 = vmatpush1.msra.mxu0 0.0
        %1380 = vmatprep.subr.mxu0 0.0
        %1381 = vmatpush1.msra.mxu0 0.0
        %1382 = vmatprep.subr.mxu0 0.0
        %1383 = vmatpush1.msra.mxu0 0.0
        %1384 = vmatprep.subr.mxu0 0.0
        %1385 = vmatpush1.msra.mxu0 0.0
        %1386 = vmatprep.subr.mxu0 0.0
        %1387 = vmatpush1.msra.mxu0 0.0
        %1388 = vmatprep.subr.mxu0 0.0
        %1389 = vmatpush1.msra.mxu0 0.0
        %1390 = vmatprep.subr.mxu0 0.0
        %1391 = vmatpush1.msra.mxu0 0.0
        %1392 = vmatprep.subr.mxu0 0.0
        %1393 = vmatpush1.msra.mxu0 0.0
        %1394 = vmatprep.subr.mxu0 0.0
        %1395 = vmatpush1.msra.mxu0 0.0
        %1396 = vmatprep.subr.mxu0 0.0
        %1397 = vmatpush1.msra.mxu0 0.0
        %1398 = vmatprep.subr.mxu0 0.0
        %1399 = vmatpush1.msra.mxu0 0.0
        %1400 = vmatprep.subr.mxu0 0.0
        %1401 = vmatpush1.msra.mxu0 0.0
        %1402 = vmatprep.subr.mxu0 0.0
        %1403 = vmatpush1.msra.mxu0 0.0
        %1404 = vmatprep.subr.mxu0 0.0
        %1405 = vmatpush1.msra.mxu0 0.0
        %1406 = vmatprep.subr.mxu0 0.0
        %1407 = vmatpush1.msra.mxu0 0.0
        %1408 = vmatprep.subr.mxu0 0.0
        %1409 = vmatpush1.msra.mxu0 0.0
        %1410 = vmatprep.subr.mxu0 0.0
        %1411 = vmatpush1.msra.mxu0 0.0
        %1412 = vmatprep.mubr.f32.mxu0 0.0
        %1413 = vmatmul.mubr.f32.gmra.mrb[0].mxu0 %v1340
        %v1414 = vpop.f32.mrb[0].mxu0
        %v1415 = vadd.f32 0.0, %v1414
        %v1416 = vpop.f32.mrb[0].mxu0
        %1417 = vmatprep.mubr.f32.mxu0 0.0
        %1418 = vmatmul.mubr.f32.gmra.mrb[0].mxu0 %v1343
        %v1419 = vpop.f32.mrb[0].mxu0
        %v1420 = vadd.f32 0.0, %v1419
        %v1421 = vpop.f32.mrb[0].mxu0
        %1422 = vmatprep.mubr.f32.mxu0 0.0
        %1423 = vmatmul.mubr.f32.gmra.mrb[0].mxu0 %v1346
        %v1424 = vpop.f32.mrb[0].mxu0
        %v1425 = vadd.f32 0.0, %v1424
        %v1426 = vpop.f32.mrb[0].mxu0
        %1427 = vdwg.mxu0
        %1431 = vrot.lane.b32.xlu0 %v1415, 96
        %v1432 = vpop.permute.xlu0 %1431
        %1433 = vrot.lane.b32.xlu0 %v1420, 96
        %v1434 = vpop.permute.xlu0 %1433
        %1435 = vrot.lane.b32.xlu0 %v1425, 96
        %v1436 = vpop.permute.xlu0 %1435
        %vm1437 = vcmask 64512
        %v1438 = vsel %vm1437, %v1415, 0
        %v1440 = vsel %vm1437, %v1420, 0
        %v1442 = vsel %vm1437, %v1425, 0
        %v1444 = vsel %vm1437, %v1432, 0
        %v1446 = vsel %vm1437, %v1434, 0
        %v1448 = vsel %vm1437, %v1436, 0
        %1450 = vmatprep.subr.mxu0 0.0
        %1451 = vmatpush1.xpose.msra.mxu0 %v1444
        %1452 = vmatprep.subr.mxu0 0.0
        %1453 = vmatpush1.xpose.msra.mxu0 %v1446
        %1454 = vmatprep.subr.mxu0 0.0
        %1455 = vmatpush1.xpose.msra.mxu0 %v1448
        %1456 = vmatprep.subr.mxu0 0.0
        %1457 = vmatpush1.xpose.msra.mxu0 0.0
        %1458 = vmatprep.subr.mxu0 0.0
        %1459 = vmatpush1.xpose.msra.mxu0 0.0
        %1460 = vmatprep.subr.mxu0 0.0
        %1461 = vmatpush1.xpose.msra.mxu0 0.0
        %1462 = vmatprep.subr.mxu0 0.0
        %1463 = vmatpush1.xpose.msra.mxu0 0.0
        %1464 = vmatprep.subr.mxu0 0.0
        %1465 = vmatpush1.xpose.msra.mxu0 0.0
        %1466 = vmatprep.subr.mxu0 0.0
        %1467 = vmatpush1.xpose.msra.mxu0 0.0
        %1468 = vmatprep.subr.mxu0 0.0
        %1469 = vmatpush1.xpose.msra.mxu0 0.0
        %1470 = vmatprep.subr.mxu0 0.0
        %1471 = vmatpush1.xpose.msra.mxu0 0.0
        %1472 = vmatprep.subr.mxu0 0.0
        %1473 = vmatpush1.xpose.msra.mxu0 0.0
        %1474 = vmatprep.subr.mxu0 0.0
        %1475 = vmatpush1.xpose.msra.mxu0 0.0
        %1476 = vmatprep.subr.mxu0 0.0
        %1477 = vmatpush1.xpose.msra.mxu0 0.0
        %1478 = vmatprep.subr.mxu0 0.0
        %1479 = vmatpush1.xpose.msra.mxu0 0.0
        %1480 = vmatprep.subr.mxu0 0.0
        %1481 = vmatpush1.xpose.msra.mxu0 0.0
        %1482 = vmatprep.subr.mxu0 0.0
        %1483 = vmatpush1.xpose.msra.mxu0 0.0
        %1484 = vmatprep.subr.mxu0 0.0
        %1485 = vmatpush1.xpose.msra.mxu0 0.0
        %1486 = vmatprep.subr.mxu0 0.0
        %1487 = vmatpush1.xpose.msra.mxu0 0.0
        %1488 = vmatprep.subr.mxu0 0.0
        %1489 = vmatpush1.xpose.msra.mxu0 0.0
        %1490 = vmatprep.subr.mxu0 0.0
        %1491 = vmatpush1.xpose.msra.mxu0 0.0
        %1492 = vmatprep.subr.mxu0 0.0
        %1493 = vmatpush1.xpose.msra.mxu0 0.0
        %1494 = vmatprep.subr.mxu0 0.0
        %1495 = vmatpush1.xpose.msra.mxu0 0.0
        %1496 = vmatprep.subr.mxu0 0.0
        %1497 = vmatpush1.xpose.msra.mxu0 0.0
        %1498 = vmatprep.subr.mxu0 0.0
        %1499 = vmatpush1.xpose.msra.mxu0 0.0
        %1500 = vmatprep.subr.mxu0 0.0
        %1501 = vmatpush1.xpose.msra.mxu0 0.0
        %1502 = vmatprep.subr.mxu0 0.0
        %1503 = vmatpush1.xpose.msra.mxu0 0.0
        %1504 = vmatprep.subr.mxu0 0.0
        %1505 = vmatpush1.xpose.msra.mxu0 0.0
        %1506 = vmatprep.subr.mxu0 0.0
        %1507 = vmatpush1.xpose.msra.mxu0 0.0
        %1508 = vmatprep.subr.mxu0 0.0
        %1509 = vmatpush1.xpose.msra.mxu0 0.0
        %1510 = vmatprep.subr.mxu0 0.0
        %1511 = vmatpush1.xpose.msra.mxu0 0.0
        %1512 = vmatprep.subr.mxu0 0.0
        %1513 = vmatpush1.xpose.msra.mxu0 0.0
        %1514 = vmatprep.mubr.f32.mxu0 0.0
        %1515 = vmatmul.mubr.f32.gmra.mrb[0].mxu0 %v1438
        %v1516 = vpop.f32.mrb[0].mxu0
        %v1517 = vadd.f32 0.0, %v1516
        %v1518 = vpop.f32.mrb[0].mxu0
        %1519 = vmatprep.mubr.f32.mxu0 0.0
        %1520 = vmatmul.mubr.f32.gmra.mrb[0].mxu0 %v1440
        %v1521 = vpop.f32.mrb[0].mxu0
        %v1522 = vadd.f32 0.0, %v1521
        %v1523 = vpop.f32.mrb[0].mxu0
        %1524 = vmatprep.mubr.f32.mxu0 0.0
        %1525 = vmatmul.mubr.f32.gmra.mrb[0].mxu0 %v1442
        %v1526 = vpop.f32.mrb[0].mxu0
        %v1527 = vadd.f32 0.0, %v1526
        %v1528 = vpop.f32.mrb[0].mxu0
        %1529 = vdwg.mxu0
        %v1530 = vstv %s1272
        %v1531 = vmul.f32 %v1517, %v1530
        %v1532 = vmul.f32 %v1522, %v1530
        %v1533 = vmul.f32 %v1527, %v1530
        %v1534 = vsel %vm1269, -1e+30, %v1531
        %v1535 = vsel %vm1270, -1e+30, %v1532
        %v1536 = vsel %vm1271, -1e+30, %v1533
        %vm1537 = vcmask 138240
        %v1538 = vsel %vm1537, %v1534, -inf
        %1539 = vmax.xlane.f32.xlu0 %v1538
        %v1540 = vpop.xlane.xlu0 %1539
        %v1541 = vsel %vm1537, %v1535, -inf
        %1542 = vmax.xlane.f32.xlu0 %v1541
        %v1543 = vpop.xlane.xlu0 %1542
        %vm1544 = vcmask 131072
        %v1545 = vsel %vm1544, %v1536, -inf
        %1546 = vmax.xlane.f32.xlu0 %v1545
        %v1547 = vpop.xlane.xlu0 %1546
        %v1548 = vsub.f32 %v1534, %v1540
        %v1549 = vsub.f32 %v1535, %v1543
        %v1550 = vsub.f32 %v1536, %v1547
        %v1551 = vmul.f32 %v1548, 1.442695
        %v1552 = vpow.pop %v1551
        %v1553 = vmul.f32 %v1549, 1.442695
        %v1554 = vpow.pop %v1553
        %v1555 = vmul.f32 %v1550, 1.442695
        %v1556 = vpow.pop %v1555
        %v1557 = vsel %vm1537, %v1552, 0.0
        %1558 = vadd.xlane.f32.xlu0 %v1557
        %v1559 = vpop.xlane.xlu0 %1558
        %v1560 = vsel %vm1537, %v1554, 0.0
        %1561 = vadd.xlane.f32.xlu0 %v1560
        %v1562 = vpop.xlane.xlu0 %1561
        %v1563 = vsel %vm1544, %v1556, 0.0
        %1564 = vadd.xlane.f32.xlu0 %v1563
        %v1565 = vpop.xlane.xlu0 %1564
        %v1566 = vrcp.pop %v1559
        %v1567 = vrcp.pop %v1562
        %v1568 = vrcp.pop %v1565
        %v1569 = vmul.f32 %v1552, %v1566
        %v1570 = vmul.f32 %v1554, %v1567
        %v1571 = vmul.f32 %v1556, %v1568
        %1572 = vrot.lane.b32.xlu0 %v1415, 64
        %v1573 = vpop.permute.xlu0 %1572
        %1574 = vrot.lane.b32.xlu0 %v1420, 64
        %v1575 = vpop.permute.xlu0 %1574
        %1576 = vrot.lane.b32.xlu0 %v1425, 64
        %v1577 = vpop.permute.xlu0 %1576
        %v1581 = vsel %vm1537, %v1569, 0
        %v1584 = vsel %vm1537, %v1570, 0
        %v1587 = vsel %vm1537, %v1571, 0
        %v1589 = vsel %vm1249, %v1577, 0
        %1591 = vmatprep.subr.mxu0 0.0
        %1592 = vmatpush1.msra.mxu0 %v1573
        %1593 = vmatprep.subr.mxu0 0.0
        %1594 = vmatpush1.msra.mxu0 %v1575
        %1595 = vmatprep.subr.mxu0 0.0
        %1596 = vmatpush1.msra.mxu0 %v1589
        %1597 = vmatprep.subr.mxu0 0.0
        %1598 = vmatpush1.msra.mxu0 0.0
        %1599 = vmatprep.subr.mxu0 0.0
        %1600 = vmatpush1.msra.mxu0 0.0
        %1601 = vmatprep.subr.mxu0 0.0
        %1602 = vmatpush1.msra.mxu0 0.0
        %1603 = vmatprep.subr.mxu0 0.0
        %1604 = vmatpush1.msra.mxu0 0.0
        %1605 = vmatprep.subr.mxu0 0.0
        %1606 = vmatpush1.msra.mxu0 0.0
        %1607 = vmatprep.subr.mxu0 0.0
        %1608 = vmatpush1.msra.mxu0 0.0
        %1609 = vmatprep.subr.mxu0 0.0
        %1610 = vmatpush1.msra.mxu0 0.0
        %1611 = vmatprep.subr.mxu0 0.0
        %1612 = vmatpush1.msra.mxu0 0.0
        %1613 = vmatprep.subr.mxu0 0.0
        %1614 = vmatpush1.msra.mxu0 0.0
        %1615 = vmatprep.subr.mxu0 0.0
        %1616 = vmatpush1.msra.mxu0 0.0
        %1617 = vmatprep.subr.mxu0 0.0
        %1618 = vmatpush1.msra.mxu0 0.0
        %1619 = vmatprep.subr.mxu0 0.0
        %1620 = vmatpush1.msra.mxu0 0.0
        %1621 = vmatprep.subr.mxu0 0.0
        %1622 = vmatpush1.msra.mxu0 0.0
        %1623 = vmatprep.subr.mxu0 0.0
        %1624 = vmatpush1.msra.mxu0 0.0
        %1625 = vmatprep.subr.mxu0 0.0
        %1626 = vmatpush1.msra.mxu0 0.0
        %1627 = vmatprep.subr.mxu0 0.0
        %1628 = vmatpush1.msra.mxu0 0.0
        %1629 = vmatprep.subr.mxu0 0.0
        %1630 = vmatpush1.msra.mxu0 0.0
        %1631 = vmatprep.subr.mxu0 0.0
        %1632 = vmatpush1.msra.mxu0 0.0
        %1633 = vmatprep.subr.mxu0 0.0
        %1634 = vmatpush1.msra.mxu0 0.0
        %1635 = vmatprep.subr.mxu0 0.0
        %1636 = vmatpush1.msra.mxu0 0.0
        %1637 = vmatprep.subr.mxu0 0.0
        %1638 = vmatpush1.msra.mxu0 0.0
        %1639 = vmatprep.subr.mxu0 0.0
        %1640 = vmatpush1.msra.mxu0 0.0
        %1641 = vmatprep.subr.mxu0 0.0
        %1642 = vmatpush1.msra.mxu0 0.0
        %1643 = vmatprep.subr.mxu0 0.0
        %1644 = vmatpush1.msra.mxu0 0.0
        %1645 = vmatprep.subr.mxu0 0.0
        %1646 = vmatpush1.msra.mxu0 0.0
        %1647 = vmatprep.subr.mxu0 0.0
        %1648 = vmatpush1.msra.mxu0 0.0
        %1649 = vmatprep.subr.mxu0 0.0
        %1650 = vmatpush1.msra.mxu0 0.0
        %1651 = vmatprep.subr.mxu0 0.0
        %1652 = vmatpush1.msra.mxu0 0.0
        %1653 = vmatprep.subr.mxu0 0.0
        %1654 = vmatpush1.msra.mxu0 0.0
        %1655 = vmatprep.mubr.f32.mxu0 0.0
        %1656 = vmatmul.mubr.f32.gmra.mrb[0].mxu0 %v1581
        %v1657 = vpop.f32.mrb[0].mxu0
        %v1658 = vadd.f32 0.0, %v1657
        %v1659 = vpop.f32.mrb[0].mxu0
        %1660 = vmatprep.mubr.f32.mxu0 0.0
        %1661 = vmatmul.mubr.f32.gmra.mrb[0].mxu0 %v1584
        %v1662 = vpop.f32.mrb[0].mxu0
        %v1663 = vadd.f32 0.0, %v1662
        %v1664 = vpop.f32.mrb[0].mxu0
        %1665 = vmatprep.mubr.f32.mxu0 0.0
        %1666 = vmatmul.mubr.f32.gmra.mrb[0].mxu0 %v1587
        %v1667 = vpop.f32.mrb[0].mxu0
        %v1668 = vadd.f32 0.0, %v1667
        %v1669 = vpop.f32.mrb[0].mxu0
        %1670 = vdwg.mxu0
        %1671 = vrot.lane.b32.xlu0 %v1415, 120
        %v1672 = vpop.permute.xlu0 %1671
        %1673 = vrot.lane.b32.xlu0 %v1420, 120
        %v1674 = vpop.permute.xlu0 %1673
        %1675 = vrot.lane.b32.xlu0 %v1425, 120
        %v1676 = vpop.permute.xlu0 %1675
        %1677 = vrot.lane.b32.xlu0 %v1415, 88
        %v1678 = vpop.permute.xlu0 %1677
        %1679 = vrot.lane.b32.xlu0 %v1420, 88
        %v1680 = vpop.permute.xlu0 %1679
        %1681 = vrot.lane.b32.xlu0 %v1425, 88
        %v1682 = vpop.permute.xlu0 %1681
        %v1683 = vsel %vm1437, %v1672, 0
        %v1685 = vsel %vm1437, %v1674, 0
        %v1687 = vsel %vm1437, %v1676, 0
        %v1689 = vsel %vm1437, %v1678, 0
        %v1691 = vsel %vm1437, %v1680, 0
        %v1693 = vsel %vm1437, %v1682, 0
        %1695 = vmatprep.subr.mxu0 0.0
        %1696 = vmatpush1.xpose.msra.mxu0 %v1689
        %1697 = vmatprep.subr.mxu0 0.0
        %1698 = vmatpush1.xpose.msra.mxu0 %v1691
        %1699 = vmatprep.subr.mxu0 0.0
        %1700 = vmatpush1.xpose.msra.mxu0 %v1693
        %1701 = vmatprep.subr.mxu0 0.0
        %1702 = vmatpush1.xpose.msra.mxu0 0.0
        %1703 = vmatprep.subr.mxu0 0.0
        %1704 = vmatpush1.xpose.msra.mxu0 0.0
        %1705 = vmatprep.subr.mxu0 0.0
        %1706 = vmatpush1.xpose.msra.mxu0 0.0
        %1707 = vmatprep.subr.mxu0 0.0
        %1708 = vmatpush1.xpose.msra.mxu0 0.0
        %1709 = vmatprep.subr.mxu0 0.0
        %1710 = vmatpush1.xpose.msra.mxu0 0.0
        %1711 = vmatprep.subr.mxu0 0.0
        %1712 = vmatpush1.xpose.msra.mxu0 0.0
        %1713 = vmatprep.subr.mxu0 0.0
        %1714 = vmatpush1.xpose.msra.mxu0 0.0
        %1715 = vmatprep.subr.mxu0 0.0
        %1716 = vmatpush1.xpose.msra.mxu0 0.0
        %1717 = vmatprep.subr.mxu0 0.0
        %1718 = vmatpush1.xpose.msra.mxu0 0.0
        %1719 = vmatprep.subr.mxu0 0.0
        %1720 = vmatpush1.xpose.msra.mxu0 0.0
        %1721 = vmatprep.subr.mxu0 0.0
        %1722 = vmatpush1.xpose.msra.mxu0 0.0
        %1723 = vmatprep.subr.mxu0 0.0
        %1724 = vmatpush1.xpose.msra.mxu0 0.0
        %1725 = vmatprep.subr.mxu0 0.0
        %1726 = vmatpush1.xpose.msra.mxu0 0.0
        %1727 = vmatprep.subr.mxu0 0.0
        %1728 = vmatpush1.xpose.msra.mxu0 0.0
        %1729 = vmatprep.subr.mxu0 0.0
        %1730 = vmatpush1.xpose.msra.mxu0 0.0
        %1731 = vmatprep.subr.mxu0 0.0
        %1732 = vmatpush1.xpose.msra.mxu0 0.0
        %1733 = vmatprep.subr.mxu0 0.0
        %1734 = vmatpush1.xpose.msra.mxu0 0.0
        %1735 = vmatprep.subr.mxu0 0.0
        %1736 = vmatpush1.xpose.msra.mxu0 0.0
        %1737 = vmatprep.subr.mxu0 0.0
        %1738 = vmatpush1.xpose.msra.mxu0 0.0
        %1739 = vmatprep.subr.mxu0 0.0
        %1740 = vmatpush1.xpose.msra.mxu0 0.0
        %1741 = vmatprep.subr.mxu0 0.0
        %1742 = vmatpush1.xpose.msra.mxu0 0.0
        %1743 = vmatprep.subr.mxu0 0.0
        %1744 = vmatpush1.xpose.msra.mxu0 0.0
        %1745 = vmatprep.subr.mxu0 0.0
        %1746 = vmatpush1.xpose.msra.mxu0 0.0
        %1747 = vmatprep.subr.mxu0 0.0
        %1748 = vmatpush1.xpose.msra.mxu0 0.0
        %1749 = vmatprep.subr.mxu0 0.0
        %1750 = vmatpush1.xpose.msra.mxu0 0.0
        %1751 = vmatprep.subr.mxu0 0.0
        %1752 = vmatpush1.xpose.msra.mxu0 0.0
        %1753 = vmatprep.subr.mxu0 0.0
        %1754 = vmatpush1.xpose.msra.mxu0 0.0
        %1755 = vmatprep.subr.mxu0 0.0
        %1756 = vmatpush1.xpose.msra.mxu0 0.0
        %1757 = vmatprep.subr.mxu0 0.0
        %1758 = vmatpush1.xpose.msra.mxu0 0.0
        %1759 = vmatprep.mubr.f32.mxu0 0.0
        %1760 = vmatmul.mubr.f32.gmra.mrb[0].mxu0 %v1683
        %v1761 = vpop.f32.mrb[0].mxu0
        %v1762 = vadd.f32 0.0, %v1761
        %v1763 = vpop.f32.mrb[0].mxu0
        %1764 = vmatprep.mubr.f32.mxu0 0.0
        %1765 = vmatmul.mubr.f32.gmra.mrb[0].mxu0 %v1685
        %v1766 = vpop.f32.mrb[0].mxu0
        %v1767 = vadd.f32 0.0, %v1766
        %v1768 = vpop.f32.mrb[0].mxu0
        %1769 = vmatprep.mubr.f32.mxu0 0.0
        %1770 = vmatmul.mubr.f32.gmra.mrb[0].mxu0 %v1687
        %v1771 = vpop.f32.mrb[0].mxu0
        %v1772 = vadd.f32 0.0, %v1771
        %v1773 = vpop.f32.mrb[0].mxu0
        %1774 = vdwg.mxu0
        %v1775 = vmul.f32 %v1762, %v1530
        %v1776 = vmul.f32 %v1767, %v1530
        %v1777 = vmul.f32 %v1772, %v1530
        %v1778 = vsel %vm1269, -1e+30, %v1775
        %v1779 = vsel %vm1270, -1e+30, %v1776
        %v1780 = vsel %vm1271, -1e+30, %v1777
        %v1781 = vsel %vm1537, %v1778, -inf
        %1782 = vmax.xlane.f32.xlu0 %v1781
        %v1783 = vpop.xlane.xlu0 %1782
        %v1784 = vsel %vm1537, %v1779, -inf
        %1785 = vmax.xlane.f32.xlu0 %v1784
        %v1786 = vpop.xlane.xlu0 %1785
        %v1787 = vsel %vm1544, %v1780, -inf
        %1788 = vmax.xlane.f32.xlu0 %v1787
        %v1789 = vpop.xlane.xlu0 %1788
        %v1790 = vsub.f32 %v1778, %v1783
        %v1791 = vsub.f32 %v1779, %v1786
        %v1792 = vsub.f32 %v1780, %v1789
        %v1793 = vmul.f32 %v1790, 1.442695
        %v1794 = vpow.pop %v1793
        %v1795 = vmul.f32 %v1791, 1.442695
        %v1796 = vpow.pop %v1795
        %v1797 = vmul.f32 %v1792, 1.442695
        %v1798 = vpow.pop %v1797
        %v1799 = vsel %vm1537, %v1794, 0.0
        %1800 = vadd.xlane.f32.xlu0 %v1799
        %v1801 = vpop.xlane.xlu0 %1800
        %v1802 = vsel %vm1537, %v1796, 0.0
        %1803 = vadd.xlane.f32.xlu0 %v1802
        %v1804 = vpop.xlane.xlu0 %1803
        %v1805 = vsel %vm1544, %v1798, 0.0
        %1806 = vadd.xlane.f32.xlu0 %v1805
        %v1807 = vpop.xlane.xlu0 %1806
        %v1808 = vrcp.pop %v1801
        %v1809 = vrcp.pop %v1804
        %v1810 = vrcp.pop %v1807
        %v1811 = vmul.f32 %v1794, %v1808
        %v1812 = vmul.f32 %v1796, %v1809
        %v1813 = vmul.f32 %v1798, %v1810
        %1814 = vrot.lane.b32.xlu0 %v1415, 56
        %v1815 = vpop.permute.xlu0 %1814
        %1816 = vrot.lane.b32.xlu0 %v1420, 56
        %v1817 = vpop.permute.xlu0 %1816
        %1818 = vrot.lane.b32.xlu0 %v1425, 56
        %v1819 = vpop.permute.xlu0 %1818
        %v1823 = vsel %vm1537, %v1811, 0
        %v1826 = vsel %vm1537, %v1812, 0
        %v1829 = vsel %vm1537, %v1813, 0
        %v1831 = vsel %vm1249, %v1819, 0
        %1833 = vmatprep.subr.mxu0 0.0
        %1834 = vmatpush1.msra.mxu0 %v1815
        %1835 = vmatprep.subr.mxu0 0.0
        %1836 = vmatpush1.msra.mxu0 %v1817
        %1837 = vmatprep.subr.mxu0 0.0
        %1838 = vmatpush1.msra.mxu0 %v1831
        %1839 = vmatprep.subr.mxu0 0.0
        %1840 = vmatpush1.msra.mxu0 0.0
        %1841 = vmatprep.subr.mxu0 0.0
        %1842 = vmatpush1.msra.mxu0 0.0
        %1843 = vmatprep.subr.mxu0 0.0
        %1844 = vmatpush1.msra.mxu0 0.0
        %1845 = vmatprep.subr.mxu0 0.0
        %1846 = vmatpush1.msra.mxu0 0.0
        %1847 = vmatprep.subr.mxu0 0.0
        %1848 = vmatpush1.msra.mxu0 0.0
        %1849 = vmatprep.subr.mxu0 0.0
        %1850 = vmatpush1.msra.mxu0 0.0
        %1851 = vmatprep.subr.mxu0 0.0
        %1852 = vmatpush1.msra.mxu0 0.0
        %1853 = vmatprep.subr.mxu0 0.0
        %1854 = vmatpush1.msra.mxu0 0.0
        %1855 = vmatprep.subr.mxu0 0.0
        %1856 = vmatpush1.msra.mxu0 0.0
        %1857 = vmatprep.subr.mxu0 0.0
        %1858 = vmatpush1.msra.mxu0 0.0
        %1859 = vmatprep.subr.mxu0 0.0
        %1860 = vmatpush1.msra.mxu0 0.0
        %1861 = vmatprep.subr.mxu0 0.0
        %1862 = vmatpush1.msra.mxu0 0.0
        %1863 = vmatprep.subr.mxu0 0.0
        %1864 = vmatpush1.msra.mxu0 0.0
        %1865 = vmatprep.subr.mxu0 0.0
        %1866 = vmatpush1.msra.mxu0 0.0
        %1867 = vmatprep.subr.mxu0 0.0
        %1868 = vmatpush1.msra.mxu0 0.0
        %1869 = vmatprep.subr.mxu0 0.0
        %1870 = vmatpush1.msra.mxu0 0.0
        %1871 = vmatprep.subr.mxu0 0.0
        %1872 = vmatpush1.msra.mxu0 0.0
        %1873 = vmatprep.subr.mxu0 0.0
        %1874 = vmatpush1.msra.mxu0 0.0
        %1875 = vmatprep.subr.mxu0 0.0
        %1876 = vmatpush1.msra.mxu0 0.0
        %1877 = vmatprep.subr.mxu0 0.0
        %1878 = vmatpush1.msra.mxu0 0.0
        %1879 = vmatprep.subr.mxu0 0.0
        %1880 = vmatpush1.msra.mxu0 0.0
        %1881 = vmatprep.subr.mxu0 0.0
        %1882 = vmatpush1.msra.mxu0 0.0
        %1883 = vmatprep.subr.mxu0 0.0
        %1884 = vmatpush1.msra.mxu0 0.0
        %1885 = vmatprep.subr.mxu0 0.0
        %1886 = vmatpush1.msra.mxu0 0.0
        %1887 = vmatprep.subr.mxu0 0.0
        %1888 = vmatpush1.msra.mxu0 0.0
        %1889 = vmatprep.subr.mxu0 0.0
        %1890 = vmatpush1.msra.mxu0 0.0
        %1891 = vmatprep.subr.mxu0 0.0
        %1892 = vmatpush1.msra.mxu0 0.0
        %1893 = vmatprep.subr.mxu0 0.0
        %1894 = vmatpush1.msra.mxu0 0.0
        %1895 = vmatprep.subr.mxu0 0.0
        %1896 = vmatpush1.msra.mxu0 0.0
        %1897 = vmatprep.mubr.f32.mxu0 0.0
        %1898 = vmatmul.mubr.f32.gmra.mrb[0].mxu0 %v1823
        %v1899 = vpop.f32.mrb[0].mxu0
        %v1900 = vadd.f32 0.0, %v1899
        %v1901 = vpop.f32.mrb[0].mxu0
        %1902 = vmatprep.mubr.f32.mxu0 0.0
        %1903 = vmatmul.mubr.f32.gmra.mrb[0].mxu0 %v1826
        %v1904 = vpop.f32.mrb[0].mxu0
        %v1905 = vadd.f32 0.0, %v1904
        %v1906 = vpop.f32.mrb[0].mxu0
        %1907 = vmatprep.mubr.f32.mxu0 0.0
        %1908 = vmatmul.mubr.f32.gmra.mrb[0].mxu0 %v1829
        %v1909 = vpop.f32.mrb[0].mxu0
        %v1910 = vadd.f32 0.0, %v1909
        %v1911 = vpop.f32.mrb[0].mxu0
        %1912 = vdwg.mxu0
        %1913 = vrot.lane.b32.xlu0 %v1415, 112
        %v1914 = vpop.permute.xlu0 %1913
        %1915 = vrot.lane.b32.xlu0 %v1420, 112
        %v1916 = vpop.permute.xlu0 %1915
        %1917 = vrot.lane.b32.xlu0 %v1425, 112
        %v1918 = vpop.permute.xlu0 %1917
        %1919 = vrot.lane.b32.xlu0 %v1415, 80
        %v1920 = vpop.permute.xlu0 %1919
        %1921 = vrot.lane.b32.xlu0 %v1420, 80
        %v1922 = vpop.permute.xlu0 %1921
        %1923 = vrot.lane.b32.xlu0 %v1425, 80
        %v1924 = vpop.permute.xlu0 %1923
        %v1925 = vsel %vm1437, %v1914, 0
        %v1927 = vsel %vm1437, %v1916, 0
        %v1929 = vsel %vm1437, %v1918, 0
        %v1931 = vsel %vm1437, %v1920, 0
        %v1933 = vsel %vm1437, %v1922, 0
        %v1935 = vsel %vm1437, %v1924, 0
        %1937 = vmatprep.subr.mxu0 0.0
        %1938 = vmatpush1.xpose.msra.mxu0 %v1931
        %1939 = vmatprep.subr.mxu0 0.0
        %1940 = vmatpush1.xpose.msra.mxu0 %v1933
        %1941 = vmatprep.subr.mxu0 0.0
        %1942 = vmatpush1.xpose.msra.mxu0 %v1935
        %1943 = vmatprep.subr.mxu0 0.0
        %1944 = vmatpush1.xpose.msra.mxu0 0.0
        %1945 = vmatprep.subr.mxu0 0.0
        %1946 = vmatpush1.xpose.msra.mxu0 0.0
        %1947 = vmatprep.subr.mxu0 0.0
        %1948 = vmatpush1.xpose.msra.mxu0 0.0
        %1949 = vmatprep.subr.mxu0 0.0
        %1950 = vmatpush1.xpose.msra.mxu0 0.0
        %1951 = vmatprep.subr.mxu0 0.0
        %1952 = vmatpush1.xpose.msra.mxu0 0.0
        %1953 = vmatprep.subr.mxu0 0.0
        %1954 = vmatpush1.xpose.msra.mxu0 0.0
        %1955 = vmatprep.subr.mxu0 0.0
        %1956 = vmatpush1.xpose.msra.mxu0 0.0
        %1957 = vmatprep.subr.mxu0 0.0
        %1958 = vmatpush1.xpose.msra.mxu0 0.0
        %1959 = vmatprep.subr.mxu0 0.0
        %1960 = vmatpush1.xpose.msra.mxu0 0.0
        %1961 = vmatprep.subr.mxu0 0.0
        %1962 = vmatpush1.xpose.msra.mxu0 0.0
        %1963 = vmatprep.subr.mxu0 0.0
        %1964 = vmatpush1.xpose.msra.mxu0 0.0
        %1965 = vmatprep.subr.mxu0 0.0
        %1966 = vmatpush1.xpose.msra.mxu0 0.0
        %1967 = vmatprep.subr.mxu0 0.0
        %1968 = vmatpush1.xpose.msra.mxu0 0.0
        %1969 = vmatprep.subr.mxu0 0.0
        %1970 = vmatpush1.xpose.msra.mxu0 0.0
        %1971 = vmatprep.subr.mxu0 0.0
        %1972 = vmatpush1.xpose.msra.mxu0 0.0
        %1973 = vmatprep.subr.mxu0 0.0
        %1974 = vmatpush1.xpose.msra.mxu0 0.0
        %1975 = vmatprep.subr.mxu0 0.0
        %1976 = vmatpush1.xpose.msra.mxu0 0.0
        %1977 = vmatprep.subr.mxu0 0.0
        %1978 = vmatpush1.xpose.msra.mxu0 0.0
        %1979 = vmatprep.subr.mxu0 0.0
        %1980 = vmatpush1.xpose.msra.mxu0 0.0
        %1981 = vmatprep.subr.mxu0 0.0
        %1982 = vmatpush1.xpose.msra.mxu0 0.0
        %1983 = vmatprep.subr.mxu0 0.0
        %1984 = vmatpush1.xpose.msra.mxu0 0.0
        %1985 = vmatprep.subr.mxu0 0.0
        %1986 = vmatpush1.xpose.msra.mxu0 0.0
        %1987 = vmatprep.subr.mxu0 0.0
        %1988 = vmatpush1.xpose.msra.mxu0 0.0
        %1989 = vmatprep.subr.mxu0 0.0
        %1990 = vmatpush1.xpose.msra.mxu0 0.0
        %1991 = vmatprep.subr.mxu0 0.0
        %1992 = vmatpush1.xpose.msra.mxu0 0.0
        %1993 = vmatprep.subr.mxu0 0.0
        %1994 = vmatpush1.xpose.msra.mxu0 0.0
        %1995 = vmatprep.subr.mxu0 0.0
        %1996 = vmatpush1.xpose.msra.mxu0 0.0
        %1997 = vmatprep.subr.mxu0 0.0
        %1998 = vmatpush1.xpose.msra.mxu0 0.0
        %1999 = vmatprep.subr.mxu0 0.0
        %2000 = vmatpush1.xpose.msra.mxu0 0.0
        %2001 = vmatprep.mubr.f32.mxu0 0.0
        %2002 = vmatmul.mubr.f32.gmra.mrb[0].mxu0 %v1925
        %v2003 = vpop.f32.mrb[0].mxu0
        %v2004 = vadd.f32 0.0, %v2003
        %v2005 = vpop.f32.mrb[0].mxu0
        %2006 = vmatprep.mubr.f32.mxu0 0.0
        %2007 = vmatmul.mubr.f32.gmra.mrb[0].mxu0 %v1927
        %v2008 = vpop.f32.mrb[0].mxu0
        %v2009 = vadd.f32 0.0, %v2008
        %v2010 = vpop.f32.mrb[0].mxu0
        %2011 = vmatprep.mubr.f32.mxu0 0.0
        %2012 = vmatmul.mubr.f32.gmra.mrb[0].mxu0 %v1929
        %v2013 = vpop.f32.mrb[0].mxu0
        %v2014 = vadd.f32 0.0, %v2013
        %v2015 = vpop.f32.mrb[0].mxu0
        %2016 = vdwg.mxu0
        %v2017 = vmul.f32 %v2004, %v1530
        %v2018 = vmul.f32 %v2009, %v1530
        %v2019 = vmul.f32 %v2014, %v1530
        %v2020 = vsel %vm1269, -1e+30, %v2017
        %v2021 = vsel %vm1270, -1e+30, %v2018
        %v2022 = vsel %vm1271, -1e+30, %v2019
        %v2023 = vsel %vm1537, %v2020, -inf
        %2024 = vmax.xlane.f32.xlu0 %v2023
        %v2025 = vpop.xlane.xlu0 %2024
        %v2026 = vsel %vm1537, %v2021, -inf
        %2027 = vmax.xlane.f32.xlu0 %v2026
        %v2028 = vpop.xlane.xlu0 %2027
        %v2029 = vsel %vm1544, %v2022, -inf
        %2030 = vmax.xlane.f32.xlu0 %v2029
        %v2031 = vpop.xlane.xlu0 %2030
        %v2032 = vsub.f32 %v2020, %v2025
        %v2033 = vsub.f32 %v2021, %v2028
        %v2034 = vsub.f32 %v2022, %v2031
        %v2035 = vmul.f32 %v2032, 1.442695
        %v2036 = vpow.pop %v2035
        %v2037 = vmul.f32 %v2033, 1.442695
        %v2038 = vpow.pop %v2037
        %v2039 = vmul.f32 %v2034, 1.442695
        %v2040 = vpow.pop %v2039
        %v2041 = vsel %vm1537, %v2036, 0.0
        %2042 = vadd.xlane.f32.xlu0 %v2041
        %v2043 = vpop.xlane.xlu0 %2042
        %v2044 = vsel %vm1537, %v2038, 0.0
        %2045 = vadd.xlane.f32.xlu0 %v2044
        %v2046 = vpop.xlane.xlu0 %2045
        %v2047 = vsel %vm1544, %v2040, 0.0
        %2048 = vadd.xlane.f32.xlu0 %v2047
        %v2049 = vpop.xlane.xlu0 %2048
        %v2050 = vrcp.pop %v2043
        %v2051 = vrcp.pop %v2046
        %v2052 = vrcp.pop %v2049
        %v2053 = vmul.f32 %v2036, %v2050
        %v2054 = vmul.f32 %v2038, %v2051
        %v2055 = vmul.f32 %v2040, %v2052
        %2056 = vrot.lane.b32.xlu0 %v1415, 48
        %v2057 = vpop.permute.xlu0 %2056
        %2058 = vrot.lane.b32.xlu0 %v1420, 48
        %v2059 = vpop.permute.xlu0 %2058
        %2060 = vrot.lane.b32.xlu0 %v1425, 48
        %v2061 = vpop.permute.xlu0 %2060
        %v2065 = vsel %vm1537, %v2053, 0
        %v2068 = vsel %vm1537, %v2054, 0
        %v2071 = vsel %vm1537, %v2055, 0
        %v2073 = vsel %vm1249, %v2061, 0
        %2075 = vmatprep.subr.mxu0 0.0
        %2076 = vmatpush1.msra.mxu0 %v2057
        %2077 = vmatprep.subr.mxu0 0.0
        %2078 = vmatpush1.msra.mxu0 %v2059
        %2079 = vmatprep.subr.mxu0 0.0
        %2080 = vmatpush1.msra.mxu0 %v2073
        %2081 = vmatprep.subr.mxu0 0.0
        %2082 = vmatpush1.msra.mxu0 0.0
        %2083 = vmatprep.subr.mxu0 0.0
        %2084 = vmatpush1.msra.mxu0 0.0
        %2085 = vmatprep.subr.mxu0 0.0
        %2086 = vmatpush1.msra.mxu0 0.0
        %2087 = vmatprep.subr.mxu0 0.0
        %2088 = vmatpush1.msra.mxu0 0.0
        %2089 = vmatprep.subr.mxu0 0.0
        %2090 = vmatpush1.msra.mxu0 0.0
        %2091 = vmatprep.subr.mxu0 0.0
        %2092 = vmatpush1.msra.mxu0 0.0
        %2093 = vmatprep.subr.mxu0 0.0
        %2094 = vmatpush1.msra.mxu0 0.0
        %2095 = vmatprep.subr.mxu0 0.0
        %2096 = vmatpush1.msra.mxu0 0.0
        %2097 = vmatprep.subr.mxu0 0.0
        %2098 = vmatpush1.msra.mxu0 0.0
        %2099 = vmatprep.subr.mxu0 0.0
        %2100 = vmatpush1.msra.mxu0 0.0
        %2101 = vmatprep.subr.mxu0 0.0
        %2102 = vmatpush1.msra.mxu0 0.0
        %2103 = vmatprep.subr.mxu0 0.0
        %2104 = vmatpush1.msra.mxu0 0.0
        %2105 = vmatprep.subr.mxu0 0.0
        %2106 = vmatpush1.msra.mxu0 0.0
        %2107 = vmatprep.subr.mxu0 0.0
        %2108 = vmatpush1.msra.mxu0 0.0
        %2109 = vmatprep.subr.mxu0 0.0
        %2110 = vmatpush1.msra.mxu0 0.0
        %2111 = vmatprep.subr.mxu0 0.0
        %2112 = vmatpush1.msra.mxu0 0.0
        %2113 = vmatprep.subr.mxu0 0.0
        %2114 = vmatpush1.msra.mxu0 0.0
        %2115 = vmatprep.subr.mxu0 0.0
        %2116 = vmatpush1.msra.mxu0 0.0
        %2117 = vmatprep.subr.mxu0 0.0
        %2118 = vmatpush1.msra.mxu0 0.0
        %2119 = vmatprep.subr.mxu0 0.0
        %2120 = vmatpush1.msra.mxu0 0.0
        %2121 = vmatprep.subr.mxu0 0.0
        %2122 = vmatpush1.msra.mxu0 0.0
        %2123 = vmatprep.subr.mxu0 0.0
        %2124 = vmatpush1.msra.mxu0 0.0
        %2125 = vmatprep.subr.mxu0 0.0
        %2126 = vmatpush1.msra.mxu0 0.0
        %2127 = vmatprep.subr.mxu0 0.0
        %2128 = vmatpush1.msra.mxu0 0.0
        %2129 = vmatprep.subr.mxu0 0.0
        %2130 = vmatpush1.msra.mxu0 0.0
        %2131 = vmatprep.subr.mxu0 0.0
        %2132 = vmatpush1.msra.mxu0 0.0
        %2133 = vmatprep.subr.mxu0 0.0
        %2134 = vmatpush1.msra.mxu0 0.0
        %2135 = vmatprep.subr.mxu0 0.0
        %2136 = vmatpush1.msra.mxu0 0.0
        %2137 = vmatprep.subr.mxu0 0.0
        %2138 = vmatpush1.msra.mxu0 0.0
        %2139 = vmatprep.mubr.f32.mxu0 0.0
        %2140 = vmatmul.mubr.f32.gmra.mrb[0].mxu0 %v2065
        %v2141 = vpop.f32.mrb[0].mxu0
        %v2142 = vadd.f32 0.0, %v2141
        %v2143 = vpop.f32.mrb[0].mxu0
        %2144 = vmatprep.mubr.f32.mxu0 0.0
        %2145 = vmatmul.mubr.f32.gmra.mrb[0].mxu0 %v2068
        %v2146 = vpop.f32.mrb[0].mxu0
        %v2147 = vadd.f32 0.0, %v2146
        %v2148 = vpop.f32.mrb[0].mxu0
        %2149 = vmatprep.mubr.f32.mxu0 0.0
        %2150 = vmatmul.mubr.f32.gmra.mrb[0].mxu0 %v2071
        %v2151 = vpop.f32.mrb[0].mxu0
        %v2152 = vadd.f32 0.0, %v2151
        %v2153 = vpop.f32.mrb[0].mxu0
        %2154 = vdwg.mxu0
        %2155 = vrot.lane.b32.xlu0 %v1415, 104
        %v2156 = vpop.permute.xlu0 %2155
        %2157 = vrot.lane.b32.xlu0 %v1420, 104
        %v2158 = vpop.permute.xlu0 %2157
        %2159 = vrot.lane.b32.xlu0 %v1425, 104
        %v2160 = vpop.permute.xlu0 %2159
        %2161 = vrot.lane.b32.xlu0 %v1415, 72
        %v2162 = vpop.permute.xlu0 %2161
        %2163 = vrot.lane.b32.xlu0 %v1420, 72
        %v2164 = vpop.permute.xlu0 %2163
        %2165 = vrot.lane.b32.xlu0 %v1425, 72
        %v2166 = vpop.permute.xlu0 %2165
        %v2167 = vsel %vm1437, %v2156, 0
        %v2169 = vsel %vm1437, %v2158, 0
        %v2171 = vsel %vm1437, %v2160, 0
        %v2173 = vsel %vm1437, %v2162, 0
        %v2175 = vsel %vm1437, %v2164, 0
        %v2177 = vsel %vm1437, %v2166, 0
        %2179 = vmatprep.subr.mxu0 0.0
        %2180 = vmatpush1.xpose.msra.mxu0 %v2173
        %2181 = vmatprep.subr.mxu0 0.0
        %2182 = vmatpush1.xpose.msra.mxu0 %v2175
        %2183 = vmatprep.subr.mxu0 0.0
        %2184 = vmatpush1.xpose.msra.mxu0 %v2177
        %2185 = vmatprep.subr.mxu0 0.0
        %2186 = vmatpush1.xpose.msra.mxu0 0.0
        %2187 = vmatprep.subr.mxu0 0.0
        %2188 = vmatpush1.xpose.msra.mxu0 0.0
        %2189 = vmatprep.subr.mxu0 0.0
        %2190 = vmatpush1.xpose.msra.mxu0 0.0
        %2191 = vmatprep.subr.mxu0 0.0
        %2192 = vmatpush1.xpose.msra.mxu0 0.0
        %2193 = vmatprep.subr.mxu0 0.0
        %2194 = vmatpush1.xpose.msra.mxu0 0.0
        %2195 = vmatprep.subr.mxu0 0.0
        %2196 = vmatpush1.xpose.msra.mxu0 0.0
        %2197 = vmatprep.subr.mxu0 0.0
        %2198 = vmatpush1.xpose.msra.mxu0 0.0
        %2199 = vmatprep.subr.mxu0 0.0
        %2200 = vmatpush1.xpose.msra.mxu0 0.0
        %2201 = vmatprep.subr.mxu0 0.0
        %2202 = vmatpush1.xpose.msra.mxu0 0.0
        %2203 = vmatprep.subr.mxu0 0.0
        %2204 = vmatpush1.xpose.msra.mxu0 0.0
        %2205 = vmatprep.subr.mxu0 0.0
        %2206 = vmatpush1.xpose.msra.mxu0 0.0
        %2207 = vmatprep.subr.mxu0 0.0
        %2208 = vmatpush1.xpose.msra.mxu0 0.0
        %2209 = vmatprep.subr.mxu0 0.0
        %2210 = vmatpush1.xpose.msra.mxu0 0.0
        %2211 = vmatprep.subr.mxu0 0.0
        %2212 = vmatpush1.xpose.msra.mxu0 0.0
        %2213 = vmatprep.subr.mxu0 0.0
        %2214 = vmatpush1.xpose.msra.mxu0 0.0
        %2215 = vmatprep.subr.mxu0 0.0
        %2216 = vmatpush1.xpose.msra.mxu0 0.0
        %2217 = vmatprep.subr.mxu0 0.0
        %2218 = vmatpush1.xpose.msra.mxu0 0.0
        %2219 = vmatprep.subr.mxu0 0.0
        %2220 = vmatpush1.xpose.msra.mxu0 0.0
        %2221 = vmatprep.subr.mxu0 0.0
        %2222 = vmatpush1.xpose.msra.mxu0 0.0
        %2223 = vmatprep.subr.mxu0 0.0
        %2224 = vmatpush1.xpose.msra.mxu0 0.0
        %2225 = vmatprep.subr.mxu0 0.0
        %2226 = vmatpush1.xpose.msra.mxu0 0.0
        %2227 = vmatprep.subr.mxu0 0.0
        %2228 = vmatpush1.xpose.msra.mxu0 0.0
        %2229 = vmatprep.subr.mxu0 0.0
        %2230 = vmatpush1.xpose.msra.mxu0 0.0
        %2231 = vmatprep.subr.mxu0 0.0
        %2232 = vmatpush1.xpose.msra.mxu0 0.0
        %2233 = vmatprep.subr.mxu0 0.0
        %2234 = vmatpush1.xpose.msra.mxu0 0.0
        %2235 = vmatprep.subr.mxu0 0.0
        %2236 = vmatpush1.xpose.msra.mxu0 0.0
        %2237 = vmatprep.subr.mxu0 0.0
        %2238 = vmatpush1.xpose.msra.mxu0 0.0
        %2239 = vmatprep.subr.mxu0 0.0
        %2240 = vmatpush1.xpose.msra.mxu0 0.0
        %2241 = vmatprep.subr.mxu0 0.0
        %2242 = vmatpush1.xpose.msra.mxu0 0.0
        %2243 = vmatprep.mubr.f32.mxu0 0.0
        %2244 = vmatmul.mubr.f32.gmra.mrb[0].mxu0 %v2167
        %v2245 = vpop.f32.mrb[0].mxu0
        %v2246 = vadd.f32 0.0, %v2245
        %v2247 = vpop.f32.mrb[0].mxu0
        %2248 = vmatprep.mubr.f32.mxu0 0.0
        %2249 = vmatmul.mubr.f32.gmra.mrb[0].mxu0 %v2169
        %v2250 = vpop.f32.mrb[0].mxu0
        %v2251 = vadd.f32 0.0, %v2250
        %v2252 = vpop.f32.mrb[0].mxu0
        %2253 = vmatprep.mubr.f32.mxu0 0.0
        %2254 = vmatmul.mubr.f32.gmra.mrb[0].mxu0 %v2171
        %v2255 = vpop.f32.mrb[0].mxu0
        %v2256 = vadd.f32 0.0, %v2255
        %v2257 = vpop.f32.mrb[0].mxu0
        %2258 = vdwg.mxu0
        %v2259 = vmul.f32 %v2246, %v1530
        %v2260 = vmul.f32 %v2251, %v1530
        %v2261 = vmul.f32 %v2256, %v1530
        %v2262 = vsel %vm1269, -1e+30, %v2259
        %v2263 = vsel %vm1270, -1e+30, %v2260
        %v2264 = vsel %vm1271, -1e+30, %v2261
        %v2265 = vsel %vm1537, %v2262, -inf
        %2266 = vmax.xlane.f32.xlu0 %v2265
        %v2267 = vpop.xlane.xlu0 %2266
        %v2268 = vsel %vm1537, %v2263, -inf
        %2269 = vmax.xlane.f32.xlu0 %v2268
        %v2270 = vpop.xlane.xlu0 %2269
        %v2271 = vsel %vm1544, %v2264, -inf
        %2272 = vmax.xlane.f32.xlu0 %v2271
        %v2273 = vpop.xlane.xlu0 %2272
        %v2274 = vsub.f32 %v2262, %v2267
        %v2275 = vsub.f32 %v2263, %v2270
        %v2276 = vsub.f32 %v2264, %v2273
        %v2277 = vmul.f32 %v2274, 1.442695
        %v2278 = vpow.pop %v2277
        %v2279 = vmul.f32 %v2275, 1.442695
        %v2280 = vpow.pop %v2279
        %v2281 = vmul.f32 %v2276, 1.442695
        %v2282 = vpow.pop %v2281
        %v2283 = vsel %vm1537, %v2278, 0.0
        %2284 = vadd.xlane.f32.xlu0 %v2283
        %v2285 = vpop.xlane.xlu0 %2284
        %v2286 = vsel %vm1537, %v2280, 0.0
        %2287 = vadd.xlane.f32.xlu0 %v2286
        %v2288 = vpop.xlane.xlu0 %2287
        %v2289 = vsel %vm1544, %v2282, 0.0
        %2290 = vadd.xlane.f32.xlu0 %v2289
        %v2291 = vpop.xlane.xlu0 %2290
        %v2292 = vrcp.pop %v2285
        %v2293 = vrcp.pop %v2288
        %v2294 = vrcp.pop %v2291
        %v2295 = vmul.f32 %v2278, %v2292
        %v2296 = vmul.f32 %v2280, %v2293
        %v2297 = vmul.f32 %v2282, %v2294
        %2298 = vrot.lane.b32.xlu0 %v1415, 40
        %v2299 = vpop.permute.xlu0 %2298
        %2300 = vrot.lane.b32.xlu0 %v1420, 40
        %v2301 = vpop.permute.xlu0 %2300
        %2302 = vrot.lane.b32.xlu0 %v1425, 40
        %v2303 = vpop.permute.xlu0 %2302
        %v2307 = vsel %vm1537, %v2295, 0
        %v2310 = vsel %vm1537, %v2296, 0
        %v2313 = vsel %vm1537, %v2297, 0
        %v2315 = vsel %vm1249, %v2303, 0
        %2317 = vmatprep.subr.mxu0 0.0
        %2318 = vmatpush1.msra.mxu0 %v2299
        %2319 = vmatprep.subr.mxu0 0.0
        %2320 = vmatpush1.msra.mxu0 %v2301
        %2321 = vmatprep.subr.mxu0 0.0
        %2322 = vmatpush1.msra.mxu0 %v2315
        %2323 = vmatprep.subr.mxu0 0.0
        %2324 = vmatpush1.msra.mxu0 0.0
        %2325 = vmatprep.subr.mxu0 0.0
        %2326 = vmatpush1.msra.mxu0 0.0
        %2327 = vmatprep.subr.mxu0 0.0
        %2328 = vmatpush1.msra.mxu0 0.0
        %2329 = vmatprep.subr.mxu0 0.0
        %2330 = vmatpush1.msra.mxu0 0.0
        %2331 = vmatprep.subr.mxu0 0.0
        %2332 = vmatpush1.msra.mxu0 0.0
        %2333 = vmatprep.subr.mxu0 0.0
        %2334 = vmatpush1.msra.mxu0 0.0
        %2335 = vmatprep.subr.mxu0 0.0
        %2336 = vmatpush1.msra.mxu0 0.0
        %2337 = vmatprep.subr.mxu0 0.0
        %2338 = vmatpush1.msra.mxu0 0.0
        %2339 = vmatprep.subr.mxu0 0.0
        %2340 = vmatpush1.msra.mxu0 0.0
        %2341 = vmatprep.subr.mxu0 0.0
        %2342 = vmatpush1.msra.mxu0 0.0
        %2343 = vmatprep.subr.mxu0 0.0
        %2344 = vmatpush1.msra.mxu0 0.0
        %2345 = vmatprep.subr.mxu0 0.0
        %2346 = vmatpush1.msra.mxu0 0.0
        %2347 = vmatprep.subr.mxu0 0.0
        %2348 = vmatpush1.msra.mxu0 0.0
        %2349 = vmatprep.subr.mxu0 0.0
        %2350 = vmatpush1.msra.mxu0 0.0
        %2351 = vmatprep.subr.mxu0 0.0
        %2352 = vmatpush1.msra.mxu0 0.0
        %2353 = vmatprep.subr.mxu0 0.0
        %2354 = vmatpush1.msra.mxu0 0.0
        %2355 = vmatprep.subr.mxu0 0.0
        %2356 = vmatpush1.msra.mxu0 0.0
        %2357 = vmatprep.subr.mxu0 0.0
        %2358 = vmatpush1.msra.mxu0 0.0
        %2359 = vmatprep.subr.mxu0 0.0
        %2360 = vmatpush1.msra.mxu0 0.0
        %2361 = vmatprep.subr.mxu0 0.0
        %2362 = vmatpush1.msra.mxu0 0.0
        %2363 = vmatprep.subr.mxu0 0.0
        %2364 = vmatpush1.msra.mxu0 0.0
        %2365 = vmatprep.subr.mxu0 0.0
        %2366 = vmatpush1.msra.mxu0 0.0
        %2367 = vmatprep.subr.mxu0 0.0
        %2368 = vmatpush1.msra.mxu0 0.0
        %2369 = vmatprep.subr.mxu0 0.0
        %2370 = vmatpush1.msra.mxu0 0.0
        %2371 = vmatprep.subr.mxu0 0.0
        %2372 = vmatpush1.msra.mxu0 0.0
        %2373 = vmatprep.subr.mxu0 0.0
        %2374 = vmatpush1.msra.mxu0 0.0
        %2375 = vmatprep.subr.mxu0 0.0
        %2376 = vmatpush1.msra.mxu0 0.0
        %2377 = vmatprep.subr.mxu0 0.0
        %2378 = vmatpush1.msra.mxu0 0.0
        %2379 = vmatprep.subr.mxu0 0.0
        %2380 = vmatpush1.msra.mxu0 0.0
        %2381 = vmatprep.mubr.f32.mxu0 0.0
        %2382 = vmatmul.mubr.f32.gmra.mrb[0].mxu0 %v2307
        %v2383 = vpop.f32.mrb[0].mxu0
        %v2384 = vadd.f32 0.0, %v2383
        %v2385 = vpop.f32.mrb[0].mxu0
        %2386 = vmatprep.mubr.f32.mxu0 0.0
        %2387 = vmatmul.mubr.f32.gmra.mrb[0].mxu0 %v2310
        %v2388 = vpop.f32.mrb[0].mxu0
        %v2389 = vadd.f32 0.0, %v2388
        %v2390 = vpop.f32.mrb[0].mxu0
        %2391 = vmatprep.mubr.f32.mxu0 0.0
        %2392 = vmatmul.mubr.f32.gmra.mrb[0].mxu0 %v2313
        %v2393 = vpop.f32.mrb[0].mxu0
        %v2394 = vadd.f32 0.0, %v2393
        %v2395 = vpop.f32.mrb[0].mxu0
        %2396 = vdwg.mxu0
        %2400 = vrot.lane.b32.xlu0 %v1900, 8
        %v2401 = vpop.permute.xlu0 %2400
        %2402 = vrot.lane.b32.xlu0 %v1905, 8
        %v2403 = vpop.permute.xlu0 %2402
        %2404 = vrot.lane.b32.xlu0 %v1910, 8
        %v2405 = vpop.permute.xlu0 %2404
        %2412 = vrot.lane.b32.xlu0 %v2142, 16
        %v2413 = vpop.permute.xlu0 %2412
        %2414 = vrot.lane.b32.xlu0 %v2147, 16
        %v2415 = vpop.permute.xlu0 %2414
        %2416 = vrot.lane.b32.xlu0 %v2152, 16
        %v2417 = vpop.permute.xlu0 %2416
        %2424 = vrot.lane.b32.xlu0 %v2384, 24
        %v2425 = vpop.permute.xlu0 %2424
        %2426 = vrot.lane.b32.xlu0 %v2389, 24
        %v2427 = vpop.permute.xlu0 %2426
        %2428 = vrot.lane.b32.xlu0 %v2394, 24
        %v2429 = vpop.permute.xlu0 %2428
        %v2433 = vsel %vm1437, %v1658, %v2401
        %v2434 = vsel %vm1437, %v1663, %v2403
        %v2435 = vsel %vm1437, %v1668, %v2405
        %vm2436 = vcmask 130048
        %v2437 = vsel %vm2436, %v2433, %v2413
        %v2438 = vsel %vm2436, %v2434, %v2415
        %v2439 = vsel %vm2436, %v2435, %v2417
        %vm2440 = vcmask 195584
        %v2441 = vsel %vm2440, %v2437, %v2425
        %v2442 = vsel %vm2440, %v2438, %v2427
        %v2443 = vsel %vm2440, %v2439, %v2429
        %v2444 = vld [vmem:[%s21] sm:$0xff]
        %v2445 = vld [vmem:[%s21 + $0x8] sm:$0xff]
        %v2446 = vld [vmem:[%s21 + $0x10] sm:$0xff]
        %v2447 = vld [vmem:[%s21 + $0x18] sm:$0xff]
        %v2448 = vld [vmem:[%s23] sm:$0x1]
        %v2450 = vlaneseq
        %v2451 = vshrl.u32 %v2450, 7
        %v2452 = vsub.s32 0, %v2451
        %v2453 = vrot.slane %v2448, %v2452
        %v2456 = vsel %vm1275, %v2441, 0
        %v2459 = vsel %vm1275, %v2442, 0
        %v2462 = vsel %vm1275, %v2443, 0
        %2464 = vmatprep.subr.mxu0 0.0
        %2465 = vmatpush1.msra.mxu0 %v2444
        %2466 = vmatprep.subr.mxu0 0.0
        %2467 = vmatpush1.msra.mxu0 %v2445
        %2468 = vmatprep.subr.mxu0 0.0
        %2469 = vmatpush1.msra.mxu0 %v2446
        %2470 = vmatprep.subr.mxu0 0.0
        %2471 = vmatpush1.msra.mxu0 %v2447
        %2472 = vmatprep.subr.mxu0 0.0
        %2473 = vmatpush1.msra.mxu0 0.0
        %2474 = vmatprep.subr.mxu0 0.0
        %2475 = vmatpush1.msra.mxu0 0.0
        %2476 = vmatprep.subr.mxu0 0.0
        %2477 = vmatpush1.msra.mxu0 0.0
        %2478 = vmatprep.subr.mxu0 0.0
        %2479 = vmatpush1.msra.mxu0 0.0
        %2480 = vmatprep.subr.mxu0 0.0
        %2481 = vmatpush1.msra.mxu0 0.0
        %2482 = vmatprep.subr.mxu0 0.0
        %2483 = vmatpush1.msra.mxu0 0.0
        %2484 = vmatprep.subr.mxu0 0.0
        %2485 = vmatpush1.msra.mxu0 0.0
        %2486 = vmatprep.subr.mxu0 0.0
        %2487 = vmatpush1.msra.mxu0 0.0
        %2488 = vmatprep.subr.mxu0 0.0
        %2489 = vmatpush1.msra.mxu0 0.0
        %2490 = vmatprep.subr.mxu0 0.0
        %2491 = vmatpush1.msra.mxu0 0.0
        %2492 = vmatprep.subr.mxu0 0.0
        %2493 = vmatpush1.msra.mxu0 0.0
        %2494 = vmatprep.subr.mxu0 0.0
        %2495 = vmatpush1.msra.mxu0 0.0
        %2496 = vmatprep.subr.mxu0 0.0
        %2497 = vmatpush1.msra.mxu0 0.0
        %2498 = vmatprep.subr.mxu0 0.0
        %2499 = vmatpush1.msra.mxu0 0.0
        %2500 = vmatprep.subr.mxu0 0.0
        %2501 = vmatpush1.msra.mxu0 0.0
        %2502 = vmatprep.subr.mxu0 0.0
        %2503 = vmatpush1.msra.mxu0 0.0
        %2504 = vmatprep.subr.mxu0 0.0
        %2505 = vmatpush1.msra.mxu0 0.0
        %2506 = vmatprep.subr.mxu0 0.0
        %2507 = vmatpush1.msra.mxu0 0.0
        %2508 = vmatprep.subr.mxu0 0.0
        %2509 = vmatpush1.msra.mxu0 0.0
        %2510 = vmatprep.subr.mxu0 0.0
        %2511 = vmatpush1.msra.mxu0 0.0
        %2512 = vmatprep.subr.mxu0 0.0
        %2513 = vmatpush1.msra.mxu0 0.0
        %2514 = vmatprep.subr.mxu0 0.0
        %2515 = vmatpush1.msra.mxu0 0.0
        %2516 = vmatprep.subr.mxu0 0.0
        %2517 = vmatpush1.msra.mxu0 0.0
        %2518 = vmatprep.subr.mxu0 0.0
        %2519 = vmatpush1.msra.mxu0 0.0
        %2520 = vmatprep.subr.mxu0 0.0
        %2521 = vmatpush1.msra.mxu0 0.0
        %2522 = vmatprep.subr.mxu0 0.0
        %2523 = vmatpush1.msra.mxu0 0.0
        %2524 = vmatprep.subr.mxu0 0.0
        %2525 = vmatpush1.msra.mxu0 0.0
        %2526 = vmatprep.subr.mxu0 0.0
        %2527 = vmatpush1.msra.mxu0 0.0
        %2528 = vmatprep.mubr.f32.mxu0 0.0
        %2529 = vmatmul.mubr.f32.gmra.mrb[0].mxu0 %v2456
        %v2530 = vpop.f32.mrb[0].mxu0
        %v2531 = vadd.f32 %v2453, %v2530
        %v2532 = vpop.f32.mrb[0].mxu0
        %2533 = vmatprep.mubr.f32.mxu0 0.0
        %2534 = vmatmul.mubr.f32.gmra.mrb[0].mxu0 %v2459
        %v2535 = vpop.f32.mrb[0].mxu0
        %v2536 = vadd.f32 %v2453, %v2535
        %v2537 = vpop.f32.mrb[0].mxu0
        %2538 = vmatprep.mubr.f32.mxu0 0.0
        %2539 = vmatmul.mubr.f32.gmra.mrb[0].mxu0 %v2462
        %v2540 = vpop.f32.mrb[0].mxu0
        %v2541 = vadd.f32 %v2453, %v2540
        %v2542 = vpop.f32.mrb[0].mxu0
        %2543 = vdwg.mxu0
        %v2544 = vadd.f32 %v1260, %v2531
        %v2545 = vadd.f32 %v1261, %v2536
        %v2546 = vadd.f32 %v1262, %v2541
        %v2547 = vld [vmem:[%s25] sm:$0x1]
        %v2548 = vld [vmem:[%s27] sm:$0x1]
        %v2549 = vsel %vm1275, %v2544, 0.0
        %2550 = vadd.xlane.f32.xlu0 %v2549
        %v2551 = vpop.xlane.xlu0 %2550
        %v2552 = vsel %vm1275, %v2545, 0.0
        %2553 = vadd.xlane.f32.xlu0 %v2552
        %v2554 = vpop.xlane.xlu0 %2553
        %v2555 = vsel %vm1282, %v2546, 0.0
        %2556 = vadd.xlane.f32.xlu0 %v2555
        %v2557 = vpop.xlane.xlu0 %2556
        %v2558 = vmul.f32 %v2551, %v1286
        %v2559 = vmul.f32 %v2554, %v1286
        %v2560 = vmul.f32 %v2557, %v1286
        %v2561 = vsub.f32 %v2544, %v2558
        %v2562 = vsub.f32 %v2545, %v2559
        %v2563 = vsub.f32 %v2546, %v2560
        %v2564 = vmul.f32 %v2561, %v2561
        %v2565 = vmul.f32 %v2562, %v2562
        %v2566 = vmul.f32 %v2563, %v2563
        %v2567 = vsel %vm1275, %v2564, 0.0
        %2568 = vadd.xlane.f32.xlu0 %v2567
        %v2569 = vpop.xlane.xlu0 %2568
        %v2570 = vsel %vm1275, %v2565, 0.0
        %2571 = vadd.xlane.f32.xlu0 %v2570
        %v2572 = vpop.xlane.xlu0 %2571
        %v2573 = vsel %vm1282, %v2566, 0.0
        %2574 = vadd.xlane.f32.xlu0 %v2573
        %v2575 = vpop.xlane.xlu0 %2574
        %v2576 = vmul.f32 %v2569, %v1286
        %v2577 = vmul.f32 %v2572, %v1286
        %v2578 = vmul.f32 %v2575, %v1286
        %v2579 = vadd.f32 %v2576, 1e-05
        %v2580 = vadd.f32 %v2577, 1e-05
        %v2581 = vadd.f32 %v2578, 1e-05
        %v2582 = vrsqrt.pop %v2579
        %v2583 = vrsqrt.pop %v2580
        %v2584 = vrsqrt.pop %v2581
        %v2585 = vmul.f32 %v2561, %v2582
        %v2586 = vmul.f32 %v2562, %v2583
        %v2587 = vmul.f32 %v2563, %v2584
        %v2589 = vlaneseq
        %v2590 = vshrl.u32 %v2589, 7
        %v2591 = vsub.s32 0, %v2590
        %v2592 = vrot.slane %v2547, %v2591
        %v2594 = vmul.f32 %v2585, %v2592
        %v2595 = vmul.f32 %v2586, %v2592
        %v2596 = vmul.f32 %v2587, %v2592
        %v2598 = vlaneseq
        %v2599 = vshrl.u32 %v2598, 7
        %v2600 = vsub.s32 0, %v2599
        %v2601 = vrot.slane %v2548, %v2600
        %v2603 = vadd.f32 %v2594, %v2601
        %v2604 = vadd.f32 %v2595, %v2601
        %v2605 = vadd.f32 %v2596, %v2601
        %v2606 = vld [vmem:[%s29] sm:$0xff]
        %v2607 = vld [vmem:[%s29 + $0x8] sm:$0xff]
        %v2608 = vld [vmem:[%s29 + $0x10] sm:$0xff]
        %v2609 = vld [vmem:[%s29 + $0x18] sm:$0xff]
        %v2610 = vld [vmem:[%s31] sm:$0x1]
        %v2612 = vlaneseq
        %v2613 = vshrl.u32 %v2612, 7
        %v2614 = vsub.s32 0, %v2613
        %v2615 = vrot.slane %v2610, %v2614
        %v2618 = vsel %vm1275, %v2603, 0
        %v2621 = vsel %vm1275, %v2604, 0
        %v2624 = vsel %vm1275, %v2605, 0
        %2626 = vmatprep.subr.mxu0 0.0
        %2627 = vmatpush1.msra.mxu0 %v2606
        %2628 = vmatprep.subr.mxu0 0.0
        %2629 = vmatpush1.msra.mxu0 %v2607
        %2630 = vmatprep.subr.mxu0 0.0
        %2631 = vmatpush1.msra.mxu0 %v2608
        %2632 = vmatprep.subr.mxu0 0.0
        %2633 = vmatpush1.msra.mxu0 %v2609
        %2634 = vmatprep.subr.mxu0 0.0
        %2635 = vmatpush1.msra.mxu0 0.0
        %2636 = vmatprep.subr.mxu0 0.0
        %2637 = vmatpush1.msra.mxu0 0.0
        %2638 = vmatprep.subr.mxu0 0.0
        %2639 = vmatpush1.msra.mxu0 0.0
        %2640 = vmatprep.subr.mxu0 0.0
        %2641 = vmatpush1.msra.mxu0 0.0
        %2642 = vmatprep.subr.mxu0 0.0
        %2643 = vmatpush1.msra.mxu0 0.0
        %2644 = vmatprep.subr.mxu0 0.0
        %2645 = vmatpush1.msra.mxu0 0.0
        %2646 = vmatprep.subr.mxu0 0.0
        %2647 = vmatpush1.msra.mxu0 0.0
        %2648 = vmatprep.subr.mxu0 0.0
        %2649 = vmatpush1.msra.mxu0 0.0
        %2650 = vmatprep.subr.mxu0 0.0
        %2651 = vmatpush1.msra.mxu0 0.0
        %2652 = vmatprep.subr.mxu0 0.0
        %2653 = vmatpush1.msra.mxu0 0.0
        %2654 = vmatprep.subr.mxu0 0.0
        %2655 = vmatpush1.msra.mxu0 0.0
        %2656 = vmatprep.subr.mxu0 0.0
        %2657 = vmatpush1.msra.mxu0 0.0
        %2658 = vmatprep.subr.mxu0 0.0
        %2659 = vmatpush1.msra.mxu0 0.0
        %2660 = vmatprep.subr.mxu0 0.0
        %2661 = vmatpush1.msra.mxu0 0.0
        %2662 = vmatprep.subr.mxu0 0.0
        %2663 = vmatpush1.msra.mxu0 0.0
        %2664 = vmatprep.subr.mxu0 0.0
        %2665 = vmatpush1.msra.mxu0 0.0
        %2666 = vmatprep.subr.mxu0 0.0
        %2667 = vmatpush1.msra.mxu0 0.0
        %2668 = vmatprep.subr.mxu0 0.0
        %2669 = vmatpush1.msra.mxu0 0.0
        %2670 = vmatprep.subr.mxu0 0.0
        %2671 = vmatpush1.msra.mxu0 0.0
        %2672 = vmatprep.subr.mxu0 0.0
        %2673 = vmatpush1.msra.mxu0 0.0
        %2674 = vmatprep.subr.mxu0 0.0
        %2675 = vmatpush1.msra.mxu0 0.0
        %2676 = vmatprep.subr.mxu0 0.0
        %2677 = vmatpush1.msra.mxu0 0.0
        %2678 = vmatprep.subr.mxu0 0.0
        %2679 = vmatpush1.msra.mxu0 0.0
        %2680 = vmatprep.subr.mxu0 0.0
        %2681 = vmatpush1.msra.mxu0 0.0
        %2682 = vmatprep.subr.mxu0 0.0
        %2683 = vmatpush1.msra.mxu0 0.0
        %2684 = vmatprep.subr.mxu0 0.0
        %2685 = vmatpush1.msra.mxu0 0.0
        %2686 = vmatprep.subr.mxu0 0.0
        %2687 = vmatpush1.msra.mxu0 0.0
        %2688 = vmatprep.subr.mxu0 0.0
        %2689 = vmatpush1.msra.mxu0 0.0
        %2690 = vmatprep.mubr.f32.mxu0 0.0
        %2691 = vmatmul.mubr.f32.gmra.mrb[0].mxu0 %v2618
        %v2692 = vpop.f32.mrb[0].mxu0
        %v2693 = vadd.f32 %v2615, %v2692
        %v2694 = vpop.f32.mrb[0].mxu0
        %2695 = vmatprep.mubr.f32.mxu0 0.0
        %2696 = vmatmul.mubr.f32.gmra.mrb[0].mxu0 %v2621
        %v2697 = vpop.f32.mrb[0].mxu0
        %v2698 = vadd.f32 %v2615, %v2697
        %v2699 = vpop.f32.mrb[0].mxu0
        %2700 = vmatprep.mubr.f32.mxu0 0.0
        %2701 = vmatmul.mubr.f32.gmra.mrb[0].mxu0 %v2624
        %v2702 = vpop.f32.mrb[0].mxu0
        %v2703 = vadd.f32 %v2615, %v2702
        %v2704 = vpop.f32.mrb[0].mxu0
        %2705 = vdwg.mxu0
        %v2706 = vmul.f32 %v2693, 0.5
        %v2707 = vmul.f32 %v2698, 0.5
        %v2708 = vmul.f32 %v2703, 0.5
        %v2709 = vmul.f32 %v2693, 0.70710677
        %v2710 = vmul.f32 %v2698, 0.70710677
        %v2711 = vmul.f32 %v2703, 0.70710677
        %v2712 = verf.f32.pop %v2709
        %v2713 = verf.f32.pop %v2710
        %v2714 = verf.f32.pop %v2711
        %v2715 = vadd.f32 %v2712, 1.0
        %v2716 = vadd.f32 %v2713, 1.0
        %v2717 = vadd.f32 %v2714, 1.0
        %v2718 = vmul.f32 %v2706, %v2715
        %v2719 = vmul.f32 %v2707, %v2716
        %v2720 = vmul.f32 %v2708, %v2717
        %v2721 = vld [vmem:[%s33] sm:$0xff]
        %v2722 = vld [vmem:[%s33 + $0x8] sm:$0xff]
        %v2723 = vld [vmem:[%s33 + $0x10] sm:$0xff]
        %v2724 = vld [vmem:[%s33 + $0x18] sm:$0xff]
        %v2725 = vld [vmem:[%s33 + $0x20] sm:$0xff]
        %v2726 = vld [vmem:[%s33 + $0x28] sm:$0xff]
        %v2727 = vld [vmem:[%s33 + $0x30] sm:$0xff]
        %v2728 = vld [vmem:[%s33 + $0x38] sm:$0xff]
        %v2729 = vld [vmem:[%s35] sm:$0x1]
        %v2731 = vlaneseq
        %v2732 = vshrl.u32 %v2731, 7
        %v2733 = vsub.s32 0, %v2732
        %v2734 = vrot.slane %v2729, %v2733
        %vm2736 = vcmask 523264
        %v2738 = vsel %vm2736, %v2718, 0
        %v2741 = vsel %vm2736, %v2719, 0
        %v2744 = vsel %vm2736, %v2720, 0
        %2746 = vmatprep.subr.mxu0 0.0
        %2747 = vmatpush1.msra.mxu0 %v2721
        %2748 = vmatprep.subr.mxu0 0.0
        %2749 = vmatpush1.msra.mxu0 %v2722
        %2750 = vmatprep.subr.mxu0 0.0
        %2751 = vmatpush1.msra.mxu0 %v2723
        %2752 = vmatprep.subr.mxu0 0.0
        %2753 = vmatpush1.msra.mxu0 %v2724
        %2754 = vmatprep.subr.mxu0 0.0
        %2755 = vmatpush1.msra.mxu0 %v2725
        %2756 = vmatprep.subr.mxu0 0.0
        %2757 = vmatpush1.msra.mxu0 %v2726
        %2758 = vmatprep.subr.mxu0 0.0
        %2759 = vmatpush1.msra.mxu0 %v2727
        %2760 = vmatprep.subr.mxu0 0.0
        %2761 = vmatpush1.msra.mxu0 %v2728
        %2762 = vmatprep.subr.mxu0 0.0
        %2763 = vmatpush1.msra.mxu0 0.0
        %2764 = vmatprep.subr.mxu0 0.0
        %2765 = vmatpush1.msra.mxu0 0.0
        %2766 = vmatprep.subr.mxu0 0.0
        %2767 = vmatpush1.msra.mxu0 0.0
        %2768 = vmatprep.subr.mxu0 0.0
        %2769 = vmatpush1.msra.mxu0 0.0
        %2770 = vmatprep.subr.mxu0 0.0
        %2771 = vmatpush1.msra.mxu0 0.0
        %2772 = vmatprep.subr.mxu0 0.0
        %2773 = vmatpush1.msra.mxu0 0.0
        %2774 = vmatprep.subr.mxu0 0.0
        %2775 = vmatpush1.msra.mxu0 0.0
        %2776 = vmatprep.subr.mxu0 0.0
        %2777 = vmatpush1.msra.mxu0 0.0
        %2778 = vmatprep.subr.mxu0 0.0
        %2779 = vmatpush1.msra.mxu0 0.0
        %2780 = vmatprep.subr.mxu0 0.0
        %2781 = vmatpush1.msra.mxu0 0.0
        %2782 = vmatprep.subr.mxu0 0.0
        %2783 = vmatpush1.msra.mxu0 0.0
        %2784 = vmatprep.subr.mxu0 0.0
        %2785 = vmatpush1.msra.mxu0 0.0
        %2786 = vmatprep.subr.mxu0 0.0
        %2787 = vmatpush1.msra.mxu0 0.0
        %2788 = vmatprep.subr.mxu0 0.0
        %2789 = vmatpush1.msra.mxu0 0.0
        %2790 = vmatprep.subr.mxu0 0.0
        %2791 = vmatpush1.msra.mxu0 0.0
        %2792 = vmatprep.subr.mxu0 0.0
        %2793 = vmatpush1.msra.mxu0 0.0
        %2794 = vmatprep.subr.mxu0 0.0
        %2795 = vmatpush1.msra.mxu0 0.0
        %2796 = vmatprep.subr.mxu0 0.0
        %2797 = vmatpush1.msra.mxu0 0.0
        %2798 = vmatprep.subr.mxu0 0.0
        %2799 = vmatpush1.msra.mxu0 0.0
        %2800 = vmatprep.subr.mxu0 0.0
        %2801 = vmatpush1.msra.mxu0 0.0
        %2802 = vmatprep.subr.mxu0 0.0
        %2803 = vmatpush1.msra.mxu0 0.0
        %2804 = vmatprep.subr.mxu0 0.0
        %2805 = vmatpush1.msra.mxu0 0.0
        %2806 = vmatprep.subr.mxu0 0.0
        %2807 = vmatpush1.msra.mxu0 0.0
        %2808 = vmatprep.subr.mxu0 0.0
        %2809 = vmatpush1.msra.mxu0 0.0
        %2810 = vmatprep.mubr.f32.mxu0 0.0
        %2811 = vmatmul.mubr.f32.gmra.mrb[0].mxu0 %v2738
        %v2812 = vpop.f32.mrb[0].mxu0
        %v2813 = vadd.f32 %v2734, %v2812
        %v2814 = vpop.f32.mrb[0].mxu0
        %2815 = vmatprep.mubr.f32.mxu0 0.0
        %2816 = vmatmul.mubr.f32.gmra.mrb[0].mxu0 %v2741
        %v2817 = vpop.f32.mrb[0].mxu0
        %v2818 = vadd.f32 %v2734, %v2817
        %v2819 = vpop.f32.mrb[0].mxu0
        %2820 = vmatprep.mubr.f32.mxu0 0.0
        %2821 = vmatmul.mubr.f32.gmra.mrb[0].mxu0 %v2744
        %v2822 = vpop.f32.mrb[0].mxu0
        %v2823 = vadd.f32 %v2734, %v2822
        %v2824 = vpop.f32.mrb[0].mxu0
        %2825 = vdwg.mxu0
        %v2826 = vadd.f32 %v2544, %v2813
        %v2827 = vadd.f32 %v2545, %v2818
        %v2828 = vadd.f32 %v2546, %v2823
        %s2829 = sld [smem:[#allocation2 + $0x1]]
        %v2830 = vld [vmem:[%s37] sm:$0x1]
        %v2831 = vld [vmem:[%s39] sm:$0x1]
        %v2832 = vsel %vm1275, %v2826, 0.0
        %2833 = vadd.xlane.f32.xlu0 %v2832
        %v2834 = vpop.xlane.xlu0 %2833
        %v2835 = vsel %vm1275, %v2827, 0.0
        %2836 = vadd.xlane.f32.xlu0 %v2835
        %v2837 = vpop.xlane.xlu0 %2836
        %v2838 = vsel %vm1282, %v2828, 0.0
        %2839 = vadd.xlane.f32.xlu0 %v2838
        %v2840 = vpop.xlane.xlu0 %2839
        %v2841 = vmul.f32 %v2834, %v1286
        %v2842 = vmul.f32 %v2837, %v1286
        %v2843 = vmul.f32 %v2840, %v1286
        %v2844 = vsub.f32 %v2826, %v2841
        %v2845 = vsub.f32 %v2827, %v2842
        %v2846 = vsub.f32 %v2828, %v2843
        %v2847 = vmul.f32 %v2844, %v2844
        %v2848 = vmul.f32 %v2845, %v2845
        %v2849 = vmul.f32 %v2846, %v2846
        %v2850 = vsel %vm1275, %v2847, 0.0
        %2851 = vadd.xlane.f32.xlu0 %v2850
        %v2852 = vpop.xlane.xlu0 %2851
        %v2853 = vsel %vm1275, %v2848, 0.0
        %2854 = vadd.xlane.f32.xlu0 %v2853
        %v2855 = vpop.xlane.xlu0 %2854
        %v2856 = vsel %vm1282, %v2849, 0.0
        %2857 = vadd.xlane.f32.xlu0 %v2856
        %v2858 = vpop.xlane.xlu0 %2857
        %v2859 = vmul.f32 %v2852, %v1286
        %v2860 = vmul.f32 %v2855, %v1286
        %v2861 = vmul.f32 %v2858, %v1286
        %v2862 = vadd.f32 %v2859, 1e-05
        %v2863 = vadd.f32 %v2860, 1e-05
        %v2864 = vadd.f32 %v2861, 1e-05
        %v2865 = vrsqrt.pop %v2862
        %v2866 = vrsqrt.pop %v2863
        %v2867 = vrsqrt.pop %v2864
        %v2868 = vmul.f32 %v2844, %v2865
        %v2869 = vmul.f32 %v2845, %v2866
        %v2870 = vmul.f32 %v2846, %v2867
        %v2872 = vlaneseq
        %v2873 = vshrl.u32 %v2872, 7
        %v2874 = vsub.s32 0, %v2873
        %v2875 = vrot.slane %v2830, %v2874
        %v2877 = vmul.f32 %v2868, %v2875
        %v2878 = vmul.f32 %v2869, %v2875
        %v2879 = vmul.f32 %v2870, %v2875
        %v2881 = vlaneseq
        %v2882 = vshrl.u32 %v2881, 7
        %v2883 = vsub.s32 0, %v2882
        %v2884 = vrot.slane %v2831, %v2883
        %v2886 = vadd.f32 %v2877, %v2884
        %v2887 = vadd.f32 %v2878, %v2884
        %v2888 = vadd.f32 %v2879, %v2884
        %v2889 = vld [vmem:[%s41] sm:$0xff]
        %v2890 = vld [vmem:[%s41 + $0x8] sm:$0xff]
        %v2891 = vld [vmem:[%s41 + $0x10] sm:$0xff]
        %v2892 = vld [vmem:[%s41 + $0x18] sm:$0xff]
        %v2894 = vsel %vm1275, %v2886, 0
        %v2897 = vsel %vm1275, %v2887, 0
        %v2900 = vsel %vm1275, %v2888, 0
        %2902 = vmatprep.subr.mxu0 0.0
        %2903 = vmatpush1.msra.mxu0 %v2889
        %2904 = vmatprep.subr.mxu0 0.0
        %2905 = vmatpush1.msra.mxu0 %v2890
        %2906 = vmatprep.subr.mxu0 0.0
        %2907 = vmatpush1.msra.mxu0 %v2891
        %2908 = vmatprep.subr.mxu0 0.0
        %2909 = vmatpush1.msra.mxu0 %v2892
        %2910 = vmatprep.subr.mxu0 0.0
        %2911 = vmatpush1.msra.mxu0 0.0
        %2912 = vmatprep.subr.mxu0 0.0
        %2913 = vmatpush1.msra.mxu0 0.0
        %2914 = vmatprep.subr.mxu0 0.0
        %2915 = vmatpush1.msra.mxu0 0.0
        %2916 = vmatprep.subr.mxu0 0.0
        %2917 = vmatpush1.msra.mxu0 0.0
        %2918 = vmatprep.subr.mxu0 0.0
        %2919 = vmatpush1.msra.mxu0 0.0
        %2920 = vmatprep.subr.mxu0 0.0
        %2921 = vmatpush1.msra.mxu0 0.0
        %2922 = vmatprep.subr.mxu0 0.0
        %2923 = vmatpush1.msra.mxu0 0.0
        %2924 = vmatprep.subr.mxu0 0.0
        %2925 = vmatpush1.msra.mxu0 0.0
        %2926 = vmatprep.subr.mxu0 0.0
        %2927 = vmatpush1.msra.mxu0 0.0
        %2928 = vmatprep.subr.mxu0 0.0
        %2929 = vmatpush1.msra.mxu0 0.0
        %2930 = vmatprep.subr.mxu0 0.0
        %2931 = vmatpush1.msra.mxu0 0.0
        %2932 = vmatprep.subr.mxu0 0.0
        %2933 = vmatpush1.msra.mxu0 0.0
        %2934 = vmatprep.subr.mxu0 0.0
        %2935 = vmatpush1.msra.mxu0 0.0
        %2936 = vmatprep.subr.mxu0 0.0
        %2937 = vmatpush1.msra.mxu0 0.0
        %2938 = vmatprep.subr.mxu0 0.0
        %2939 = vmatpush1.msra.mxu0 0.0
        %2940 = vmatprep.subr.mxu0 0.0
        %2941 = vmatpush1.msra.mxu0 0.0
        %2942 = vmatprep.subr.mxu0 0.0
        %2943 = vmatpush1.msra.mxu0 0.0
        %2944 = vmatprep.subr.mxu0 0.0
        %2945 = vmatpush1.msra.mxu0 0.0
        %2946 = vmatprep.subr.mxu0 0.0
        %2947 = vmatpush1.msra.mxu0 0.0
        %2948 = vmatprep.subr.mxu0 0.0
        %2949 = vmatpush1.msra.mxu0 0.0
        %2950 = vmatprep.subr.mxu0 0.0
        %2951 = vmatpush1.msra.mxu0 0.0
        %2952 = vmatprep.subr.mxu0 0.0
        %2953 = vmatpush1.msra.mxu0 0.0
        %2954 = vmatprep.subr.mxu0 0.0
        %2955 = vmatpush1.msra.mxu0 0.0
        %2956 = vmatprep.subr.mxu0 0.0
        %2957 = vmatpush1.msra.mxu0 0.0
        %2958 = vmatprep.subr.mxu0 0.0
        %2959 = vmatpush1.msra.mxu0 0.0
        %2960 = vmatprep.subr.mxu0 0.0
        %2961 = vmatpush1.msra.mxu0 0.0
        %2962 = vmatprep.subr.mxu0 0.0
        %2963 = vmatpush1.msra.mxu0 0.0
        %2964 = vmatprep.subr.mxu0 0.0
        %2965 = vmatpush1.msra.mxu0 0.0
        %2966 = vmatprep.mubr.f32.mxu0 0.0
        %2967 = vmatmul.mubr.f32.gmra.mrb[0].mxu0 %v2894
        %v2968 = vpop.f32.mrb[0].mxu0
        %v2969 = vadd.f32 0.0, %v2968
        %v2970 = vpop.f32.mrb[0].mxu0
        %2971 = vmatprep.mubr.f32.mxu0 0.0
        %2972 = vmatmul.mubr.f32.gmra.mrb[0].mxu0 %v2897
        %v2973 = vpop.f32.mrb[0].mxu0
        %v2974 = vadd.f32 0.0, %v2973
        %v2975 = vpop.f32.mrb[0].mxu0
        %2976 = vmatprep.mubr.f32.mxu0 0.0
        %2977 = vmatmul.mubr.f32.gmra.mrb[0].mxu0 %v2900
        %v2978 = vpop.f32.mrb[0].mxu0
        %v2979 = vadd.f32 0.0, %v2978
        %v2980 = vpop.f32.mrb[0].mxu0
        %2981 = vdwg.mxu0
        %2985 = vrot.lane.b32.xlu0 %v2969, 96
        %v2986 = vpop.permute.xlu0 %2985
        %2987 = vrot.lane.b32.xlu0 %v2974, 96
        %v2988 = vpop.permute.xlu0 %2987
        %2989 = vrot.lane.b32.xlu0 %v2979, 96
        %v2990 = vpop.permute.xlu0 %2989
        %v2991 = vsel %vm1437, %v2969, 0
        %v2993 = vsel %vm1437, %v2974, 0
        %v2995 = vsel %vm1437, %v2979, 0
        %v2997 = vsel %vm1437, %v2986, 0
        %v2999 = vsel %vm1437, %v2988, 0
        %v3001 = vsel %vm1437, %v2990, 0
        %3003 = vmatprep.subr.mxu0 0.0
        %3004 = vmatpush1.xpose.msra.mxu0 %v2997
        %3005 = vmatprep.subr.mxu0 0.0
        %3006 = vmatpush1.xpose.msra.mxu0 %v2999
        %3007 = vmatprep.subr.mxu0 0.0
        %3008 = vmatpush1.xpose.msra.mxu0 %v3001
        %3009 = vmatprep.subr.mxu0 0.0
        %3010 = vmatpush1.xpose.msra.mxu0 0.0
        %3011 = vmatprep.subr.mxu0 0.0
        %3012 = vmatpush1.xpose.msra.mxu0 0.0
        %3013 = vmatprep.subr.mxu0 0.0
        %3014 = vmatpush1.xpose.msra.mxu0 0.0
        %3015 = vmatprep.subr.mxu0 0.0
        %3016 = vmatpush1.xpose.msra.mxu0 0.0
        %3017 = vmatprep.subr.mxu0 0.0
        %3018 = vmatpush1.xpose.msra.mxu0 0.0
        %3019 = vmatprep.subr.mxu0 0.0
        %3020 = vmatpush1.xpose.msra.mxu0 0.0
        %3021 = vmatprep.subr.mxu0 0.0
        %3022 = vmatpush1.xpose.msra.mxu0 0.0
        %3023 = vmatprep.subr.mxu0 0.0
        %3024 = vmatpush1.xpose.msra.mxu0 0.0
        %3025 = vmatprep.subr.mxu0 0.0
        %3026 = vmatpush1.xpose.msra.mxu0 0.0
        %3027 = vmatprep.subr.mxu0 0.0
        %3028 = vmatpush1.xpose.msra.mxu0 0.0
        %3029 = vmatprep.subr.mxu0 0.0
        %3030 = vmatpush1.xpose.msra.mxu0 0.0
        %3031 = vmatprep.subr.mxu0 0.0
        %3032 = vmatpush1.xpose.msra.mxu0 0.0
        %3033 = vmatprep.subr.mxu0 0.0
        %3034 = vmatpush1.xpose.msra.mxu0 0.0
        %3035 = vmatprep.subr.mxu0 0.0
        %3036 = vmatpush1.xpose.msra.mxu0 0.0
        %3037 = vmatprep.subr.mxu0 0.0
        %3038 = vmatpush1.xpose.msra.mxu0 0.0
        %3039 = vmatprep.subr.mxu0 0.0
        %3040 = vmatpush1.xpose.msra.mxu0 0.0
        %3041 = vmatprep.subr.mxu0 0.0
        %3042 = vmatpush1.xpose.msra.mxu0 0.0
        %3043 = vmatprep.subr.mxu0 0.0
        %3044 = vmatpush1.xpose.msra.mxu0 0.0
        %3045 = vmatprep.subr.mxu0 0.0
        %3046 = vmatpush1.xpose.msra.mxu0 0.0
        %3047 = vmatprep.subr.mxu0 0.0
        %3048 = vmatpush1.xpose.msra.mxu0 0.0
        %3049 = vmatprep.subr.mxu0 0.0
        %3050 = vmatpush1.xpose.msra.mxu0 0.0
        %3051 = vmatprep.subr.mxu0 0.0
        %3052 = vmatpush1.xpose.msra.mxu0 0.0
        %3053 = vmatprep.subr.mxu0 0.0
        %3054 = vmatpush1.xpose.msra.mxu0 0.0
        %3055 = vmatprep.subr.mxu0 0.0
        %3056 = vmatpush1.xpose.msra.mxu0 0.0
        %3057 = vmatprep.subr.mxu0 0.0
        %3058 = vmatpush1.xpose.msra.mxu0 0.0
        %3059 = vmatprep.subr.mxu0 0.0
        %3060 = vmatpush1.xpose.msra.mxu0 0.0
        %3061 = vmatprep.subr.mxu0 0.0
        %3062 = vmatpush1.xpose.msra.mxu0 0.0
        %3063 = vmatprep.subr.mxu0 0.0
        %3064 = vmatpush1.xpose.msra.mxu0 0.0
        %3065 = vmatprep.subr.mxu0 0.0
        %3066 = vmatpush1.xpose.msra.mxu0 0.0
        %3067 = vmatprep.mubr.f32.mxu0 0.0
        %3068 = vmatmul.mubr.f32.gmra.mrb[0].mxu0 %v2991
        %v3069 = vpop.f32.mrb[0].mxu0
        %v3070 = vadd.f32 0.0, %v3069
        %v3071 = vpop.f32.mrb[0].mxu0
        %3072 = vmatprep.mubr.f32.mxu0 0.0
        %3073 = vmatmul.mubr.f32.gmra.mrb[0].mxu0 %v2993
        %v3074 = vpop.f32.mrb[0].mxu0
        %v3075 = vadd.f32 0.0, %v3074
        %v3076 = vpop.f32.mrb[0].mxu0
        %3077 = vmatprep.mubr.f32.mxu0 0.0
        %3078 = vmatmul.mubr.f32.gmra.mrb[0].mxu0 %v2995
        %v3079 = vpop.f32.mrb[0].mxu0
        %v3080 = vadd.f32 0.0, %v3079
        %v3081 = vpop.f32.mrb[0].mxu0
        %3082 = vdwg.mxu0
        %v3083 = vstv %s2829
        %v3084 = vmul.f32 %v3070, %v3083
        %v3085 = vmul.f32 %v3075, %v3083
        %v3086 = vmul.f32 %v3080, %v3083
        %v3087 = vsel %vm1269, -1e+30, %v3084
        %v3088 = vsel %vm1270, -1e+30, %v3085
        %v3089 = vsel %vm1271, -1e+30, %v3086
        %v3090 = vsel %vm1537, %v3087, -inf
        %3091 = vmax.xlane.f32.xlu0 %v3090
        %v3092 = vpop.xlane.xlu0 %3091
        %v3093 = vsel %vm1537, %v3088, -inf
        %3094 = vmax.xlane.f32.xlu0 %v3093
        %v3095 = vpop.xlane.xlu0 %3094
        %v3096 = vsel %vm1544, %v3089, -inf
        %3097 = vmax.xlane.f32.xlu0 %v3096
        %v3098 = vpop.xlane.xlu0 %3097
        %v3099 = vsub.f32 %v3087, %v3092
        %v3100 = vsub.f32 %v3088, %v3095
        %v3101 = vsub.f32 %v3089, %v3098
        %v3102 = vmul.f32 %v3099, 1.442695
        %v3103 = vpow.pop %v3102
        %v3104 = vmul.f32 %v3100, 1.442695
        %v3105 = vpow.pop %v3104
        %v3106 = vmul.f32 %v3101, 1.442695
        %v3107 = vpow.pop %v3106
        %v3108 = vsel %vm1537, %v3103, 0.0
        %3109 = vadd.xlane.f32.xlu0 %v3108
        %v3110 = vpop.xlane.xlu0 %3109
        %v3111 = vsel %vm1537, %v3105, 0.0
        %3112 = vadd.xlane.f32.xlu0 %v3111
        %v3113 = vpop.xlane.xlu0 %3112
        %v3114 = vsel %vm1544, %v3107, 0.0
        %3115 = vadd.xlane.f32.xlu0 %v3114
        %v3116 = vpop.xlane.xlu0 %3115
        %v3117 = vrcp.pop %v3110
        %v3118 = vrcp.pop %v3113
        %v3119 = vrcp.pop %v3116
        %v3120 = vmul.f32 %v3103, %v3117
        %v3121 = vmul.f32 %v3105, %v3118
        %v3122 = vmul.f32 %v3107, %v3119
        %3123 = vrot.lane.b32.xlu0 %v2969, 64
        %v3124 = vpop.permute.xlu0 %3123
        %3125 = vrot.lane.b32.xlu0 %v2974, 64
        %v3126 = vpop.permute.xlu0 %3125
        %3127 = vrot.lane.b32.xlu0 %v2979, 64
        %v3128 = vpop.permute.xlu0 %3127
        %v3132 = vsel %vm1537, %v3120, 0
        %v3135 = vsel %vm1537, %v3121, 0
        %v3138 = vsel %vm1537, %v3122, 0
        %v3140 = vsel %vm1249, %v3128, 0
        %3142 = vmatprep.subr.mxu0 0.0
        %3143 = vmatpush1.msra.mxu0 %v3124
        %3144 = vmatprep.subr.mxu0 0.0
        %3145 = vmatpush1.msra.mxu0 %v3126
        %3146 = vmatprep.subr.mxu0 0.0
        %3147 = vmatpush1.msra.mxu0 %v3140
        %3148 = vmatprep.subr.mxu0 0.0
        %3149 = vmatpush1.msra.mxu0 0.0
        %3150 = vmatprep.subr.mxu0 0.0
        %3151 = vmatpush1.msra.mxu0 0.0
        %3152 = vmatprep.subr.mxu0 0.0
        %3153 = vmatpush1.msra.mxu0 0.0
        %3154 = vmatprep.subr.mxu0 0.0
        %3155 = vmatpush1.msra.mxu0 0.0
        %3156 = vmatprep.subr.mxu0 0.0
        %3157 = vmatpush1.msra.mxu0 0.0
        %3158 = vmatprep.subr.mxu0 0.0
        %3159 = vmatpush1.msra.mxu0 0.0
        %3160 = vmatprep.subr.mxu0 0.0
        %3161 = vmatpush1.msra.mxu0 0.0
        %3162 = vmatprep.subr.mxu0 0.0
        %3163 = vmatpush1.msra.mxu0 0.0
        %3164 = vmatprep.subr.mxu0 0.0
        %3165 = vmatpush1.msra.mxu0 0.0
        %3166 = vmatprep.subr.mxu0 0.0
        %3167 = vmatpush1.msra.mxu0 0.0
        %3168 = vmatprep.subr.mxu0 0.0
        %3169 = vmatpush1.msra.mxu0 0.0
        %3170 = vmatprep.subr.mxu0 0.0
        %3171 = vmatpush1.msra.mxu0 0.0
        %3172 = vmatprep.subr.mxu0 0.0
        %3173 = vmatpush1.msra.mxu0 0.0
        %3174 = vmatprep.subr.mxu0 0.0
        %3175 = vmatpush1.msra.mxu0 0.0
        %3176 = vmatprep.subr.mxu0 0.0
        %3177 = vmatpush1.msra.mxu0 0.0
        %3178 = vmatprep.subr.mxu0 0.0
        %3179 = vmatpush1.msra.mxu0 0.0
        %3180 = vmatprep.subr.mxu0 0.0
        %3181 = vmatpush1.msra.mxu0 0.0
        %3182 = vmatprep.subr.mxu0 0.0
        %3183 = vmatpush1.msra.mxu0 0.0
        %3184 = vmatprep.subr.mxu0 0.0
        %3185 = vmatpush1.msra.mxu0 0.0
        %3186 = vmatprep.subr.mxu0 0.0
        %3187 = vmatpush1.msra.mxu0 0.0
        %3188 = vmatprep.subr.mxu0 0.0
        %3189 = vmatpush1.msra.mxu0 0.0
        %3190 = vmatprep.subr.mxu0 0.0
        %3191 = vmatpush1.msra.mxu0 0.0
        %3192 = vmatprep.subr.mxu0 0.0
        %3193 = vmatpush1.msra.mxu0 0.0
        %3194 = vmatprep.subr.mxu0 0.0
        %3195 = vmatpush1.msra.mxu0 0.0
        %3196 = vmatprep.subr.mxu0 0.0
        %3197 = vmatpush1.msra.mxu0 0.0
        %3198 = vmatprep.subr.mxu0 0.0
        %3199 = vmatpush1.msra.mxu0 0.0
        %3200 = vmatprep.subr.mxu0 0.0
        %3201 = vmatpush1.msra.mxu0 0.0
        %3202 = vmatprep.subr.mxu0 0.0
        %3203 = vmatpush1.msra.mxu0 0.0
        %3204 = vmatprep.subr.mxu0 0.0
        %3205 = vmatpush1.msra.mxu0 0.0
        %3206 = vmatprep.mubr.f32.mxu0 0.0
        %3207 = vmatmul.mubr.f32.gmra.mrb[0].mxu0 %v3132
        %v3208 = vpop.f32.mrb[0].mxu0
        %v3209 = vadd.f32 0.0, %v3208
        %v3210 = vpop.f32.mrb[0].mxu0
        %3211 = vmatprep.mubr.f32.mxu0 0.0
        %3212 = vmatmul.mubr.f32.gmra.mrb[0].mxu0 %v3135
        %v3213 = vpop.f32.mrb[0].mxu0
        %v3214 = vadd.f32 0.0, %v3213
        %v3215 = vpop.f32.mrb[0].mxu0
        %3216 = vmatprep.mubr.f32.mxu0 0.0
        %3217 = vmatmul.mubr.f32.gmra.mrb[0].mxu0 %v3138
        %v3218 = vpop.f32.mrb[0].mxu0
        %v3219 = vadd.f32 0.0, %v3218
        %v3220 = vpop.f32.mrb[0].mxu0
        %3221 = vdwg.mxu0
        %3222 = vrot.lane.b32.xlu0 %v2969, 120
        %v3223 = vpop.permute.xlu0 %3222
        %3224 = vrot.lane.b32.xlu0 %v2974, 120
        %v3225 = vpop.permute.xlu0 %3224
        %3226 = vrot.lane.b32.xlu0 %v2979, 120
        %v3227 = vpop.permute.xlu0 %3226
        %3228 = vrot.lane.b32.xlu0 %v2969, 88
        %v3229 = vpop.permute.xlu0 %3228
        %3230 = vrot.lane.b32.xlu0 %v2974, 88
        %v3231 = vpop.permute.xlu0 %3230
        %3232 = vrot.lane.b32.xlu0 %v2979, 88
        %v3233 = vpop.permute.xlu0 %3232
        %v3234 = vsel %vm1437, %v3223, 0
        %v3236 = vsel %vm1437, %v3225, 0
        %v3238 = vsel %vm1437, %v3227, 0
        %v3240 = vsel %vm1437, %v3229, 0
        %v3242 = vsel %vm1437, %v3231, 0
        %v3244 = vsel %vm1437, %v3233, 0
        %3246 = vmatprep.subr.mxu0 0.0
        %3247 = vmatpush1.xpose.msra.mxu0 %v3240
        %3248 = vmatprep.subr.mxu0 0.0
        %3249 = vmatpush1.xpose.msra.mxu0 %v3242
        %3250 = vmatprep.subr.mxu0 0.0
        %3251 = vmatpush1.xpose.msra.mxu0 %v3244
        %3252 = vmatprep.subr.mxu0 0.0
        %3253 = vmatpush1.xpose.msra.mxu0 0.0
        %3254 = vmatprep.subr.mxu0 0.0
        %3255 = vmatpush1.xpose.msra.mxu0 0.0
        %3256 = vmatprep.subr.mxu0 0.0
        %3257 = vmatpush1.xpose.msra.mxu0 0.0
        %3258 = vmatprep.subr.mxu0 0.0
        %3259 = vmatpush1.xpose.msra.mxu0 0.0
        %3260 = vmatprep.subr.mxu0 0.0
        %3261 = vmatpush1.xpose.msra.mxu0 0.0
        %3262 = vmatprep.subr.mxu0 0.0
        %3263 = vmatpush1.xpose.msra.mxu0 0.0
        %3264 = vmatprep.subr.mxu0 0.0
        %3265 = vmatpush1.xpose.msra.mxu0 0.0
        %3266 = vmatprep.subr.mxu0 0.0
        %3267 = vmatpush1.xpose.msra.mxu0 0.0
        %3268 = vmatprep.subr.mxu0 0.0
        %3269 = vmatpush1.xpose.msra.mxu0 0.0
        %3270 = vmatprep.subr.mxu0 0.0
        %3271 = vmatpush1.xpose.msra.mxu0 0.0
        %3272 = vmatprep.subr.mxu0 0.0
        %3273 = vmatpush1.xpose.msra.mxu0 0.0
        %3274 = vmatprep.subr.mxu0 0.0
        %3275 = vmatpush1.xpose.msra.mxu0 0.0
        %3276 = vmatprep.subr.mxu0 0.0
        %3277 = vmatpush1.xpose.msra.mxu0 0.0
        %3278 = vmatprep.subr.mxu0 0.0
        %3279 = vmatpush1.xpose.msra.mxu0 0.0
        %3280 = vmatprep.subr.mxu0 0.0
        %3281 = vmatpush1.xpose.msra.mxu0 0.0
        %3282 = vmatprep.subr.mxu0 0.0
        %3283 = vmatpush1.xpose.msra.mxu0 0.0
        %3284 = vmatprep.subr.mxu0 0.0
        %3285 = vmatpush1.xpose.msra.mxu0 0.0
        %3286 = vmatprep.subr.mxu0 0.0
        %3287 = vmatpush1.xpose.msra.mxu0 0.0
        %3288 = vmatprep.subr.mxu0 0.0
        %3289 = vmatpush1.xpose.msra.mxu0 0.0
        %3290 = vmatprep.subr.mxu0 0.0
        %3291 = vmatpush1.xpose.msra.mxu0 0.0
        %3292 = vmatprep.subr.mxu0 0.0
        %3293 = vmatpush1.xpose.msra.mxu0 0.0
        %3294 = vmatprep.subr.mxu0 0.0
        %3295 = vmatpush1.xpose.msra.mxu0 0.0
        %3296 = vmatprep.subr.mxu0 0.0
        %3297 = vmatpush1.xpose.msra.mxu0 0.0
        %3298 = vmatprep.subr.mxu0 0.0
        %3299 = vmatpush1.xpose.msra.mxu0 0.0
        %3300 = vmatprep.subr.mxu0 0.0
        %3301 = vmatpush1.xpose.msra.mxu0 0.0
        %3302 = vmatprep.subr.mxu0 0.0
        %3303 = vmatpush1.xpose.msra.mxu0 0.0
        %3304 = vmatprep.subr.mxu0 0.0
        %3305 = vmatpush1.xpose.msra.mxu0 0.0
        %3306 = vmatprep.subr.mxu0 0.0
        %3307 = vmatpush1.xpose.msra.mxu0 0.0
        %3308 = vmatprep.subr.mxu0 0.0
        %3309 = vmatpush1.xpose.msra.mxu0 0.0
        %3310 = vmatprep.mubr.f32.mxu0 0.0
        %3311 = vmatmul.mubr.f32.gmra.mrb[0].mxu0 %v3234
        %v3312 = vpop.f32.mrb[0].mxu0
        %v3313 = vadd.f32 0.0, %v3312
        %v3314 = vpop.f32.mrb[0].mxu0
        %3315 = vmatprep.mubr.f32.mxu0 0.0
        %3316 = vmatmul.mubr.f32.gmra.mrb[0].mxu0 %v3236
        %v3317 = vpop.f32.mrb[0].mxu0
        %v3318 = vadd.f32 0.0, %v3317
        %v3319 = vpop.f32.mrb[0].mxu0
        %3320 = vmatprep.mubr.f32.mxu0 0.0
        %3321 = vmatmul.mubr.f32.gmra.mrb[0].mxu0 %v3238
        %v3322 = vpop.f32.mrb[0].mxu0
        %v3323 = vadd.f32 0.0, %v3322
        %v3324 = vpop.f32.mrb[0].mxu0
        %3325 = vdwg.mxu0
        %v3326 = vmul.f32 %v3313, %v3083
        %v3327 = vmul.f32 %v3318, %v3083
        %v3328 = vmul.f32 %v3323, %v3083
        %v3329 = vsel %vm1269, -1e+30, %v3326
        %v3330 = vsel %vm1270, -1e+30, %v3327
        %v3331 = vsel %vm1271, -1e+30, %v3328
        %v3332 = vsel %vm1537, %v3329, -inf
        %3333 = vmax.xlane.f32.xlu0 %v3332
        %v3334 = vpop.xlane.xlu0 %3333
        %v3335 = vsel %vm1537, %v3330, -inf
        %3336 = vmax.xlane.f32.xlu0 %v3335
        %v3337 = vpop.xlane.xlu0 %3336
        %v3338 = vsel %vm1544, %v3331, -inf
        %3339 = vmax.xlane.f32.xlu0 %v3338
        %v3340 = vpop.xlane.xlu0 %3339
        %v3341 = vsub.f32 %v3329, %v3334
        %v3342 = vsub.f32 %v3330, %v3337
        %v3343 = vsub.f32 %v3331, %v3340
        %v3344 = vmul.f32 %v3341, 1.442695
        %v3345 = vpow.pop %v3344
        %v3346 = vmul.f32 %v3342, 1.442695
        %v3347 = vpow.pop %v3346
        %v3348 = vmul.f32 %v3343, 1.442695
        %v3349 = vpow.pop %v3348
        %v3350 = vsel %vm1537, %v3345, 0.0
        %3351 = vadd.xlane.f32.xlu0 %v3350
        %v3352 = vpop.xlane.xlu0 %3351
        %v3353 = vsel %vm1537, %v3347, 0.0
        %3354 = vadd.xlane.f32.xlu0 %v3353
        %v3355 = vpop.xlane.xlu0 %3354
        %v3356 = vsel %vm1544, %v3349, 0.0
        %3357 = vadd.xlane.f32.xlu0 %v3356
        %v3358 = vpop.xlane.xlu0 %3357
        %v3359 = vrcp.pop %v3352
        %v3360 = vrcp.pop %v3355
        %v3361 = vrcp.pop %v3358
        %v3362 = vmul.f32 %v3345, %v3359
        %v3363 = vmul.f32 %v3347, %v3360
        %v3364 = vmul.f32 %v3349, %v3361
        %3365 = vrot.lane.b32.xlu0 %v2969, 56
        %v3366 = vpop.permute.xlu0 %3365
        %3367 = vrot.lane.b32.xlu0 %v2974, 56
        %v3368 = vpop.permute.xlu0 %3367
        %3369 = vrot.lane.b32.xlu0 %v2979, 56
        %v3370 = vpop.permute.xlu0 %3369
        %v3374 = vsel %vm1537, %v3362, 0
        %v3377 = vsel %vm1537, %v3363, 0
        %v3380 = vsel %vm1537, %v3364, 0
        %v3382 = vsel %vm1249, %v3370, 0
        %3384 = vmatprep.subr.mxu0 0.0
        %3385 = vmatpush1.msra.mxu0 %v3366
        %3386 = vmatprep.subr.mxu0 0.0
        %3387 = vmatpush1.msra.mxu0 %v3368
        %3388 = vmatprep.subr.mxu0 0.0
        %3389 = vmatpush1.msra.mxu0 %v3382
        %3390 = vmatprep.subr.mxu0 0.0
        %3391 = vmatpush1.msra.mxu0 0.0
        %3392 = vmatprep.subr.mxu0 0.0
        %3393 = vmatpush1.msra.mxu0 0.0
        %3394 = vmatprep.subr.mxu0 0.0
        %3395 = vmatpush1.msra.mxu0 0.0
        %3396 = vmatprep.subr.mxu0 0.0
        %3397 = vmatpush1.msra.mxu0 0.0
        %3398 = vmatprep.subr.mxu0 0.0
        %3399 = vmatpush1.msra.mxu0 0.0
        %3400 = vmatprep.subr.mxu0 0.0
        %3401 = vmatpush1.msra.mxu0 0.0
        %3402 = vmatprep.subr.mxu0 0.0
        %3403 = vmatpush1.msra.mxu0 0.0
        %3404 = vmatprep.subr.mxu0 0.0
        %3405 = vmatpush1.msra.mxu0 0.0
        %3406 = vmatprep.subr.mxu0 0.0
        %3407 = vmatpush1.msra.mxu0 0.0
        %3408 = vmatprep.subr.mxu0 0.0
        %3409 = vmatpush1.msra.mxu0 0.0
        %3410 = vmatprep.subr.mxu0 0.0
        %3411 = vmatpush1.msra.mxu0 0.0
        %3412 = vmatprep.subr.mxu0 0.0
        %3413 = vmatpush1.msra.mxu0 0.0
        %3414 = vmatprep.subr.mxu0 0.0
        %3415 = vmatpush1.msra.mxu0 0.0
        %3416 = vmatprep.subr.mxu0 0.0
        %3417 = vmatpush1.msra.mxu0 0.0
        %3418 = vmatprep.subr.mxu0 0.0
        %3419 = vmatpush1.msra.mxu0 0.0
        %3420 = vmatprep.subr.mxu0 0.0
        %3421 = vmatpush1.msra.mxu0 0.0
        %3422 = vmatprep.subr.mxu0 0.0
        %3423 = vmatpush1.msra.mxu0 0.0
        %3424 = vmatprep.subr.mxu0 0.0
        %3425 = vmatpush1.msra.mxu0 0.0
        %3426 = vmatprep.subr.mxu0 0.0
        %3427 = vmatpush1.msra.mxu0 0.0
        %3428 = vmatprep.subr.mxu0 0.0
        %3429 = vmatpush1.msra.mxu0 0.0
        %3430 = vmatprep.subr.mxu0 0.0
        %3431 = vmatpush1.msra.mxu0 0.0
        %3432 = vmatprep.subr.mxu0 0.0
        %3433 = vmatpush1.msra.mxu0 0.0
        %3434 = vmatprep.subr.mxu0 0.0
        %3435 = vmatpush1.msra.mxu0 0.0
        %3436 = vmatprep.subr.mxu0 0.0
        %3437 = vmatpush1.msra.mxu0 0.0
        %3438 = vmatprep.subr.mxu0 0.0
        %3439 = vmatpush1.msra.mxu0 0.0
        %3440 = vmatprep.subr.mxu0 0.0
        %3441 = vmatpush1.msra.mxu0 0.0
        %3442 = vmatprep.subr.mxu0 0.0
        %3443 = vmatpush1.msra.mxu0 0.0
        %3444 = vmatprep.subr.mxu0 0.0
        %3445 = vmatpush1.msra.mxu0 0.0
        %3446 = vmatprep.subr.mxu0 0.0
        %3447 = vmatpush1.msra.mxu0 0.0
        %3448 = vmatprep.mubr.f32.mxu0 0.0
        %3449 = vmatmul.mubr.f32.gmra.mrb[0].mxu0 %v3374
        %v3450 = vpop.f32.mrb[0].mxu0
        %v3451 = vadd.f32 0.0, %v3450
        %v3452 = vpop.f32.mrb[0].mxu0
        %3453 = vmatprep.mubr.f32.mxu0 0.0
        %3454 = vmatmul.mubr.f32.gmra.mrb[0].mxu0 %v3377
        %v3455 = vpop.f32.mrb[0].mxu0
        %v3456 = vadd.f32 0.0, %v3455
        %v3457 = vpop.f32.mrb[0].mxu0
        %3458 = vmatprep.mubr.f32.mxu0 0.0
        %3459 = vmatmul.mubr.f32.gmra.mrb[0].mxu0 %v3380
        %v3460 = vpop.f32.mrb[0].mxu0
        %v3461 = vadd.f32 0.0, %v3460
        %v3462 = vpop.f32.mrb[0].mxu0
        %3463 = vdwg.mxu0
        %3464 = vrot.lane.b32.xlu0 %v2969, 112
        %v3465 = vpop.permute.xlu0 %3464
        %3466 = vrot.lane.b32.xlu0 %v2974, 112
        %v3467 = vpop.permute.xlu0 %3466
        %3468 = vrot.lane.b32.xlu0 %v2979, 112
        %v3469 = vpop.permute.xlu0 %3468
        %3470 = vrot.lane.b32.xlu0 %v2969, 80
        %v3471 = vpop.permute.xlu0 %3470
        %3472 = vrot.lane.b32.xlu0 %v2974, 80
        %v3473 = vpop.permute.xlu0 %3472
        %3474 = vrot.lane.b32.xlu0 %v2979, 80
        %v3475 = vpop.permute.xlu0 %3474
        %v3476 = vsel %vm1437, %v3465, 0
        %v3478 = vsel %vm1437, %v3467, 0
        %v3480 = vsel %vm1437, %v3469, 0
        %v3482 = vsel %vm1437, %v3471, 0
        %v3484 = vsel %vm1437, %v3473, 0
        %v3486 = vsel %vm1437, %v3475, 0
        %3488 = vmatprep.subr.mxu0 0.0
        %3489 = vmatpush1.xpose.msra.mxu0 %v3482
        %3490 = vmatprep.subr.mxu0 0.0
        %3491 = vmatpush1.xpose.msra.mxu0 %v3484
        %3492 = vmatprep.subr.mxu0 0.0
        %3493 = vmatpush1.xpose.msra.mxu0 %v3486
        %3494 = vmatprep.subr.mxu0 0.0
        %3495 = vmatpush1.xpose.msra.mxu0 0.0
        %3496 = vmatprep.subr.mxu0 0.0
        %3497 = vmatpush1.xpose.msra.mxu0 0.0
        %3498 = vmatprep.subr.mxu0 0.0
        %3499 = vmatpush1.xpose.msra.mxu0 0.0
        %3500 = vmatprep.subr.mxu0 0.0
        %3501 = vmatpush1.xpose.msra.mxu0 0.0
        %3502 = vmatprep.subr.mxu0 0.0
        %3503 = vmatpush1.xpose.msra.mxu0 0.0
        %3504 = vmatprep.subr.mxu0 0.0
        %3505 = vmatpush1.xpose.msra.mxu0 0.0
        %3506 = vmatprep.subr.mxu0 0.0
        %3507 = vmatpush1.xpose.msra.mxu0 0.0
        %3508 = vmatprep.subr.mxu0 0.0
        %3509 = vmatpush1.xpose.msra.mxu0 0.0
        %3510 = vmatprep.subr.mxu0 0.0
        %3511 = vmatpush1.xpose.msra.mxu0 0.0
        %3512 = vmatprep.subr.mxu0 0.0
        %3513 = vmatpush1.xpose.msra.mxu0 0.0
        %3514 = vmatprep.subr.mxu0 0.0
        %3515 = vmatpush1.xpose.msra.mxu0 0.0
        %3516 = vmatprep.subr.mxu0 0.0
        %3517 = vmatpush1.xpose.msra.mxu0 0.0
        %3518 = vmatprep.subr.mxu0 0.0
        %3519 = vmatpush1.xpose.msra.mxu0 0.0
        %3520 = vmatprep.subr.mxu0 0.0
        %3521 = vmatpush1.xpose.msra.mxu0 0.0
        %3522 = vmatprep.subr.mxu0 0.0
        %3523 = vmatpush1.xpose.msra.mxu0 0.0
        %3524 = vmatprep.subr.mxu0 0.0
        %3525 = vmatpush1.xpose.msra.mxu0 0.0
        %3526 = vmatprep.subr.mxu0 0.0
        %3527 = vmatpush1.xpose.msra.mxu0 0.0
        %3528 = vmatprep.subr.mxu0 0.0
        %3529 = vmatpush1.xpose.msra.mxu0 0.0
        %3530 = vmatprep.subr.mxu0 0.0
        %3531 = vmatpush1.xpose.msra.mxu0 0.0
        %3532 = vmatprep.subr.mxu0 0.0
        %3533 = vmatpush1.xpose.msra.mxu0 0.0
        %3534 = vmatprep.subr.mxu0 0.0
        %3535 = vmatpush1.xpose.msra.mxu0 0.0
        %3536 = vmatprep.subr.mxu0 0.0
        %3537 = vmatpush1.xpose.msra.mxu0 0.0
        %3538 = vmatprep.subr.mxu0 0.0
        %3539 = vmatpush1.xpose.msra.mxu0 0.0
        %3540 = vmatprep.subr.mxu0 0.0
        %3541 = vmatpush1.xpose.msra.mxu0 0.0
        %3542 = vmatprep.subr.mxu0 0.0
        %3543 = vmatpush1.xpose.msra.mxu0 0.0
        %3544 = vmatprep.subr.mxu0 0.0
        %3545 = vmatpush1.xpose.msra.mxu0 0.0
        %3546 = vmatprep.subr.mxu0 0.0
        %3547 = vmatpush1.xpose.msra.mxu0 0.0
        %3548 = vmatprep.subr.mxu0 0.0
        %3549 = vmatpush1.xpose.msra.mxu0 0.0
        %3550 = vmatprep.subr.mxu0 0.0
        %3551 = vmatpush1.xpose.msra.mxu0 0.0
        %3552 = vmatprep.mubr.f32.mxu0 0.0
        %3553 = vmatmul.mubr.f32.gmra.mrb[0].mxu0 %v3476
        %v3554 = vpop.f32.mrb[0].mxu0
        %v3555 = vadd.f32 0.0, %v3554
        %v3556 = vpop.f32.mrb[0].mxu0
        %3557 = vmatprep.mubr.f32.mxu0 0.0
        %3558 = vmatmul.mubr.f32.gmra.mrb[0].mxu0 %v3478
        %v3559 = vpop.f32.mrb[0].mxu0
        %v3560 = vadd.f32 0.0, %v3559
        %v3561 = vpop.f32.mrb[0].mxu0
        %3562 = vmatprep.mubr.f32.mxu0 0.0
        %3563 = vmatmul.mubr.f32.gmra.mrb[0].mxu0 %v3480
        %v3564 = vpop.f32.mrb[0].mxu0
        %v3565 = vadd.f32 0.0, %v3564
        %v3566 = vpop.f32.mrb[0].mxu0
        %3567 = vdwg.mxu0
        %v3568 = vmul.f32 %v3555, %v3083
        %v3569 = vmul.f32 %v3560, %v3083
        %v3570 = vmul.f32 %v3565, %v3083
        %v3571 = vsel %vm1269, -1e+30, %v3568
        %v3572 = vsel %vm1270, -1e+30, %v3569
        %v3573 = vsel %vm1271, -1e+30, %v3570
        %v3574 = vsel %vm1537, %v3571, -inf
        %3575 = vmax.xlane.f32.xlu0 %v3574
        %v3576 = vpop.xlane.xlu0 %3575
        %v3577 = vsel %vm1537, %v3572, -inf
        %3578 = vmax.xlane.f32.xlu0 %v3577
        %v3579 = vpop.xlane.xlu0 %3578
        %v3580 = vsel %vm1544, %v3573, -inf
        %3581 = vmax.xlane.f32.xlu0 %v3580
        %v3582 = vpop.xlane.xlu0 %3581
        %v3583 = vsub.f32 %v3571, %v3576
        %v3584 = vsub.f32 %v3572, %v3579
        %v3585 = vsub.f32 %v3573, %v3582
        %v3586 = vmul.f32 %v3583, 1.442695
        %v3587 = vpow.pop %v3586
        %v3588 = vmul.f32 %v3584, 1.442695
        %v3589 = vpow.pop %v3588
        %v3590 = vmul.f32 %v3585, 1.442695
        %v3591 = vpow.pop %v3590
        %v3592 = vsel %vm1537, %v3587, 0.0
        %3593 = vadd.xlane.f32.xlu0 %v3592
        %v3594 = vpop.xlane.xlu0 %3593
        %v3595 = vsel %vm1537, %v3589, 0.0
        %3596 = vadd.xlane.f32.xlu0 %v3595
        %v3597 = vpop.xlane.xlu0 %3596
        %v3598 = vsel %vm1544, %v3591, 0.0
        %3599 = vadd.xlane.f32.xlu0 %v3598
        %v3600 = vpop.xlane.xlu0 %3599
        %v3601 = vrcp.pop %v3594
        %v3602 = vrcp.pop %v3597
        %v3603 = vrcp.pop %v3600
        %v3604 = vmul.f32 %v3587, %v3601
        %v3605 = vmul.f32 %v3589, %v3602
        %v3606 = vmul.f32 %v3591, %v3603
        %3607 = vrot.lane.b32.xlu0 %v2969, 48
        %v3608 = vpop.permute.xlu0 %3607
        %3609 = vrot.lane.b32.xlu0 %v2974, 48
        %v3610 = vpop.permute.xlu0 %3609
        %3611 = vrot.lane.b32.xlu0 %v2979, 48
        %v3612 = vpop.permute.xlu0 %3611
        %v3616 = vsel %vm1537, %v3604, 0
        %v3619 = vsel %vm1537, %v3605, 0
        %v3622 = vsel %vm1537, %v3606, 0
        %v3624 = vsel %vm1249, %v3612, 0
        %3626 = vmatprep.subr.mxu0 0.0
        %3627 = vmatpush1.msra.mxu0 %v3608
        %3628 = vmatprep.subr.mxu0 0.0
        %3629 = vmatpush1.msra.mxu0 %v3610
        %3630 = vmatprep.subr.mxu0 0.0
        %3631 = vmatpush1.msra.mxu0 %v3624
        %3632 = vmatprep.subr.mxu0 0.0
        %3633 = vmatpush1.msra.mxu0 0.0
        %3634 = vmatprep.subr.mxu0 0.0
        %3635 = vmatpush1.msra.mxu0 0.0
        %3636 = vmatprep.subr.mxu0 0.0
        %3637 = vmatpush1.msra.mxu0 0.0
        %3638 = vmatprep.subr.mxu0 0.0
        %3639 = vmatpush1.msra.mxu0 0.0
        %3640 = vmatprep.subr.mxu0 0.0
        %3641 = vmatpush1.msra.mxu0 0.0
        %3642 = vmatprep.subr.mxu0 0.0
        %3643 = vmatpush1.msra.mxu0 0.0
        %3644 = vmatprep.subr.mxu0 0.0
        %3645 = vmatpush1.msra.mxu0 0.0
        %3646 = vmatprep.subr.mxu0 0.0
        %3647 = vmatpush1.msra.mxu0 0.0
        %3648 = vmatprep.subr.mxu0 0.0
        %3649 = vmatpush1.msra.mxu0 0.0
        %3650 = vmatprep.subr.mxu0 0.0
        %3651 = vmatpush1.msra.mxu0 0.0
        %3652 = vmatprep.subr.mxu0 0.0
        %3653 = vmatpush1.msra.mxu0 0.0
        %3654 = vmatprep.subr.mxu0 0.0
        %3655 = vmatpush1.msra.mxu0 0.0
        %3656 = vmatprep.subr.mxu0 0.0
        %3657 = vmatpush1.msra.mxu0 0.0
        %3658 = vmatprep.subr.mxu0 0.0
        %3659 = vmatpush1.msra.mxu0 0.0
        %3660 = vmatprep.subr.mxu0 0.0
        %3661 = vmatpush1.msra.mxu0 0.0
        %3662 = vmatprep.subr.mxu0 0.0
        %3663 = vmatpush1.msra.mxu0 0.0
        %3664 = vmatprep.subr.mxu0 0.0
        %3665 = vmatpush1.msra.mxu0 0.0
        %3666 = vmatprep.subr.mxu0 0.0
        %3667 = vmatpush1.msra.mxu0 0.0
        %3668 = vmatprep.subr.mxu0 0.0
        %3669 = vmatpush1.msra.mxu0 0.0
        %3670 = vmatprep.subr.mxu0 0.0
        %3671 = vmatpush1.msra.mxu0 0.0
        %3672 = vmatprep.subr.mxu0 0.0
        %3673 = vmatpush1.msra.mxu0 0.0
        %3674 = vmatprep.subr.mxu0 0.0
        %3675 = vmatpush1.msra.mxu0 0.0
        %3676 = vmatprep.subr.mxu0 0.0
        %3677 = vmatpush1.msra.mxu0 0.0
        %3678 = vmatprep.subr.mxu0 0.0
        %3679 = vmatpush1.msra.mxu0 0.0
        %3680 = vmatprep.subr.mxu0 0.0
        %3681 = vmatpush1.msra.mxu0 0.0
        %3682 = vmatprep.subr.mxu0 0.0
        %3683 = vmatpush1.msra.mxu0 0.0
        %3684 = vmatprep.subr.mxu0 0.0
        %3685 = vmatpush1.msra.mxu0 0.0
        %3686 = vmatprep.subr.mxu0 0.0
        %3687 = vmatpush1.msra.mxu0 0.0
        %3688 = vmatprep.subr.mxu0 0.0
        %3689 = vmatpush1.msra.mxu0 0.0
        %3690 = vmatprep.mubr.f32.mxu0 0.0
        %3691 = vmatmul.mubr.f32.gmra.mrb[0].mxu0 %v3616
        %v3692 = vpop.f32.mrb[0].mxu0
        %v3693 = vadd.f32 0.0, %v3692
        %v3694 = vpop.f32.mrb[0].mxu0
        %3695 = vmatprep.mubr.f32.mxu0 0.0
        %3696 = vmatmul.mubr.f32.gmra.mrb[0].mxu0 %v3619
        %v3697 = vpop.f32.mrb[0].mxu0
        %v3698 = vadd.f32 0.0, %v3697
        %v3699 = vpop.f32.mrb[0].mxu0
        %3700 = vmatprep.mubr.f32.mxu0 0.0
        %3701 = vmatmul.mubr.f32.gmra.mrb[0].mxu0 %v3622
        %v3702 = vpop.f32.mrb[0].mxu0
        %v3703 = vadd.f32 0.0, %v3702
        %v3704 = vpop.f32.mrb[0].mxu0
        %3705 = vdwg.mxu0
        %3706 = vrot.lane.b32.xlu0 %v2969, 104
        %v3707 = vpop.permute.xlu0 %3706
        %3708 = vrot.lane.b32.xlu0 %v2974, 104
        %v3709 = vpop.permute.xlu0 %3708
        %3710 = vrot.lane.b32.xlu0 %v2979, 104
        %v3711 = vpop.permute.xlu0 %3710
        %3712 = vrot.lane.b32.xlu0 %v2969, 72
        %v3713 = vpop.permute.xlu0 %3712
        %3714 = vrot.lane.b32.xlu0 %v2974, 72
        %v3715 = vpop.permute.xlu0 %3714
        %3716 = vrot.lane.b32.xlu0 %v2979, 72
        %v3717 = vpop.permute.xlu0 %3716
        %v3718 = vsel %vm1437, %v3707, 0
        %v3720 = vsel %vm1437, %v3709, 0
        %v3722 = vsel %vm1437, %v3711, 0
        %v3724 = vsel %vm1437, %v3713, 0
        %v3726 = vsel %vm1437, %v3715, 0
        %v3728 = vsel %vm1437, %v3717, 0
        %3730 = vmatprep.subr.mxu0 0.0
        %3731 = vmatpush1.xpose.msra.mxu0 %v3724
        %3732 = vmatprep.subr.mxu0 0.0
        %3733 = vmatpush1.xpose.msra.mxu0 %v3726
        %3734 = vmatprep.subr.mxu0 0.0
        %3735 = vmatpush1.xpose.msra.mxu0 %v3728
        %3736 = vmatprep.subr.mxu0 0.0
        %3737 = vmatpush1.xpose.msra.mxu0 0.0
        %3738 = vmatprep.subr.mxu0 0.0
        %3739 = vmatpush1.xpose.msra.mxu0 0.0
        %3740 = vmatprep.subr.mxu0 0.0
        %3741 = vmatpush1.xpose.msra.mxu0 0.0
        %3742 = vmatprep.subr.mxu0 0.0
        %3743 = vmatpush1.xpose.msra.mxu0 0.0
        %3744 = vmatprep.subr.mxu0 0.0
        %3745 = vmatpush1.xpose.msra.mxu0 0.0
        %3746 = vmatprep.subr.mxu0 0.0
        %3747 = vmatpush1.xpose.msra.mxu0 0.0
        %3748 = vmatprep.subr.mxu0 0.0
        %3749 = vmatpush1.xpose.msra.mxu0 0.0
        %3750 = vmatprep.subr.mxu0 0.0
        %3751 = vmatpush1.xpose.msra.mxu0 0.0
        %3752 = vmatprep.subr.mxu0 0.0
        %3753 = vmatpush1.xpose.msra.mxu0 0.0
        %3754 = vmatprep.subr.mxu0 0.0
        %3755 = vmatpush1.xpose.msra.mxu0 0.0
        %3756 = vmatprep.subr.mxu0 0.0
        %3757 = vmatpush1.xpose.msra.mxu0 0.0
        %3758 = vmatprep.subr.mxu0 0.0
        %3759 = vmatpush1.xpose.msra.mxu0 0.0
        %3760 = vmatprep.subr.mxu0 0.0
        %3761 = vmatpush1.xpose.msra.mxu0 0.0
        %3762 = vmatprep.subr.mxu0 0.0
        %3763 = vmatpush1.xpose.msra.mxu0 0.0
        %3764 = vmatprep.subr.mxu0 0.0
        %3765 = vmatpush1.xpose.msra.mxu0 0.0
        %3766 = vmatprep.subr.mxu0 0.0
        %3767 = vmatpush1.xpose.msra.mxu0 0.0
        %3768 = vmatprep.subr.mxu0 0.0
        %3769 = vmatpush1.xpose.msra.mxu0 0.0
        %3770 = vmatprep.subr.mxu0 0.0
        %3771 = vmatpush1.xpose.msra.mxu0 0.0
        %3772 = vmatprep.subr.mxu0 0.0
        %3773 = vmatpush1.xpose.msra.mxu0 0.0
        %3774 = vmatprep.subr.mxu0 0.0
        %3775 = vmatpush1.xpose.msra.mxu0 0.0
        %3776 = vmatprep.subr.mxu0 0.0
        %3777 = vmatpush1.xpose.msra.mxu0 0.0
        %3778 = vmatprep.subr.mxu0 0.0
        %3779 = vmatpush1.xpose.msra.mxu0 0.0
        %3780 = vmatprep.subr.mxu0 0.0
        %3781 = vmatpush1.xpose.msra.mxu0 0.0
        %3782 = vmatprep.subr.mxu0 0.0
        %3783 = vmatpush1.xpose.msra.mxu0 0.0
        %3784 = vmatprep.subr.mxu0 0.0
        %3785 = vmatpush1.xpose.msra.mxu0 0.0
        %3786 = vmatprep.subr.mxu0 0.0
        %3787 = vmatpush1.xpose.msra.mxu0 0.0
        %3788 = vmatprep.subr.mxu0 0.0
        %3789 = vmatpush1.xpose.msra.mxu0 0.0
        %3790 = vmatprep.subr.mxu0 0.0
        %3791 = vmatpush1.xpose.msra.mxu0 0.0
        %3792 = vmatprep.subr.mxu0 0.0
        %3793 = vmatpush1.xpose.msra.mxu0 0.0
        %3794 = vmatprep.mubr.f32.mxu0 0.0
        %3795 = vmatmul.mubr.f32.gmra.mrb[0].mxu0 %v3718
        %v3796 = vpop.f32.mrb[0].mxu0
        %v3797 = vadd.f32 0.0, %v3796
        %v3798 = vpop.f32.mrb[0].mxu0
        %3799 = vmatprep.mubr.f32.mxu0 0.0
        %3800 = vmatmul.mubr.f32.gmra.mrb[0].mxu0 %v3720
        %v3801 = vpop.f32.mrb[0].mxu0
        %v3802 = vadd.f32 0.0, %v3801
        %v3803 = vpop.f32.mrb[0].mxu0
        %3804 = vmatprep.mubr.f32.mxu0 0.0
        %3805 = vmatmul.mubr.f32.gmra.mrb[0].mxu0 %v3722
        %v3806 = vpop.f32.mrb[0].mxu0
        %v3807 = vadd.f32 0.0, %v3806
        %v3808 = vpop.f32.mrb[0].mxu0
        %3809 = vdwg.mxu0
        %v3810 = vmul.f32 %v3797, %v3083
        %v3811 = vmul.f32 %v3802, %v3083
        %v3812 = vmul.f32 %v3807, %v3083
        %v3813 = vsel %vm1269, -1e+30, %v3810
        %v3814 = vsel %vm1270, -1e+30, %v3811
        %v3815 = vsel %vm1271, -1e+30, %v3812
        %v3816 = vsel %vm1537, %v3813, -inf
        %3817 = vmax.xlane.f32.xlu0 %v3816
        %v3818 = vpop.xlane.xlu0 %3817
        %v3819 = vsel %vm1537, %v3814, -inf
        %3820 = vmax.xlane.f32.xlu0 %v3819
        %v3821 = vpop.xlane.xlu0 %3820
        %v3822 = vsel %vm1544, %v3815, -inf
        %3823 = vmax.xlane.f32.xlu0 %v3822
        %v3824 = vpop.xlane.xlu0 %3823
        %v3825 = vsub.f32 %v3813, %v3818
        %v3826 = vsub.f32 %v3814, %v3821
        %v3827 = vsub.f32 %v3815, %v3824
        %v3828 = vmul.f32 %v3825, 1.442695
        %v3829 = vpow.pop %v3828
        %v3830 = vmul.f32 %v3826, 1.442695
        %v3831 = vpow.pop %v3830
        %v3832 = vmul.f32 %v3827, 1.442695
        %v3833 = vpow.pop %v3832
        %v3834 = vsel %vm1537, %v3829, 0.0
        %3835 = vadd.xlane.f32.xlu0 %v3834
        %v3836 = vpop.xlane.xlu0 %3835
        %v3837 = vsel %vm1537, %v3831, 0.0
        %3838 = vadd.xlane.f32.xlu0 %v3837
        %v3839 = vpop.xlane.xlu0 %3838
        %v3840 = vsel %vm1544, %v3833, 0.0
        %3841 = vadd.xlane.f32.xlu0 %v3840
        %v3842 = vpop.xlane.xlu0 %3841
        %v3843 = vrcp.pop %v3836
        %v3844 = vrcp.pop %v3839
        %v3845 = vrcp.pop %v3842
        %v3846 = vmul.f32 %v3829, %v3843
        %v3847 = vmul.f32 %v3831, %v3844
        %v3848 = vmul.f32 %v3833, %v3845
        %3849 = vrot.lane.b32.xlu0 %v2969, 40
        %v3850 = vpop.permute.xlu0 %3849
        %3851 = vrot.lane.b32.xlu0 %v2974, 40
        %v3852 = vpop.permute.xlu0 %3851
        %3853 = vrot.lane.b32.xlu0 %v2979, 40
        %v3854 = vpop.permute.xlu0 %3853
        %v3858 = vsel %vm1537, %v3846, 0
        %v3861 = vsel %vm1537, %v3847, 0
        %v3864 = vsel %vm1537, %v3848, 0
        %v3866 = vsel %vm1249, %v3854, 0
        %3868 = vmatprep.subr.mxu0 0.0
        %3869 = vmatpush1.msra.mxu0 %v3850
        %3870 = vmatprep.subr.mxu0 0.0
        %3871 = vmatpush1.msra.mxu0 %v3852
        %3872 = vmatprep.subr.mxu0 0.0
        %3873 = vmatpush1.msra.mxu0 %v3866
        %3874 = vmatprep.subr.mxu0 0.0
        %3875 = vmatpush1.msra.mxu0 0.0
        %3876 = vmatprep.subr.mxu0 0.0
        %3877 = vmatpush1.msra.mxu0 0.0
        %3878 = vmatprep.subr.mxu0 0.0
        %3879 = vmatpush1.msra.mxu0 0.0
        %3880 = vmatprep.subr.mxu0 0.0
        %3881 = vmatpush1.msra.mxu0 0.0
        %3882 = vmatprep.subr.mxu0 0.0
        %3883 = vmatpush1.msra.mxu0 0.0
        %3884 = vmatprep.subr.mxu0 0.0
        %3885 = vmatpush1.msra.mxu0 0.0
        %3886 = vmatprep.subr.mxu0 0.0
        %3887 = vmatpush1.msra.mxu0 0.0
        %3888 = vmatprep.subr.mxu0 0.0
        %3889 = vmatpush1.msra.mxu0 0.0
        %3890 = vmatprep.subr.mxu0 0.0
        %3891 = vmatpush1.msra.mxu0 0.0
        %3892 = vmatprep.subr.mxu0 0.0
        %3893 = vmatpush1.msra.mxu0 0.0
        %3894 = vmatprep.subr.mxu0 0.0
        %3895 = vmatpush1.msra.mxu0 0.0
        %3896 = vmatprep.subr.mxu0 0.0
        %3897 = vmatpush1.msra.mxu0 0.0
        %3898 = vmatprep.subr.mxu0 0.0
        %3899 = vmatpush1.msra.mxu0 0.0
        %3900 = vmatprep.subr.mxu0 0.0
        %3901 = vmatpush1.msra.mxu0 0.0
        %3902 = vmatprep.subr.mxu0 0.0
        %3903 = vmatpush1.msra.mxu0 0.0
        %3904 = vmatprep.subr.mxu0 0.0
        %3905 = vmatpush1.msra.mxu0 0.0
        %3906 = vmatprep.subr.mxu0 0.0
        %3907 = vmatpush1.msra.mxu0 0.0
        %3908 = vmatprep.subr.mxu0 0.0
        %3909 = vmatpush1.msra.mxu0 0.0
        %3910 = vmatprep.subr.mxu0 0.0
        %3911 = vmatpush1.msra.mxu0 0.0
        %3912 = vmatprep.subr.mxu0 0.0
        %3913 = vmatpush1.msra.mxu0 0.0
        %3914 = vmatprep.subr.mxu0 0.0
        %3915 = vmatpush1.msra.mxu0 0.0
        %3916 = vmatprep.subr.mxu0 0.0
        %3917 = vmatpush1.msra.mxu0 0.0
        %3918 = vmatprep.subr.mxu0 0.0
        %3919 = vmatpush1.msra.mxu0 0.0
        %3920 = vmatprep.subr.mxu0 0.0
        %3921 = vmatpush1.msra.mxu0 0.0
        %3922 = vmatprep.subr.mxu0 0.0
        %3923 = vmatpush1.msra.mxu0 0.0
        %3924 = vmatprep.subr.mxu0 0.0
        %3925 = vmatpush1.msra.mxu0 0.0
        %3926 = vmatprep.subr.mxu0 0.0
        %3927 = vmatpush1.msra.mxu0 0.0
        %3928 = vmatprep.subr.mxu0 0.0
        %3929 = vmatpush1.msra.mxu0 0.0
        %3930 = vmatprep.subr.mxu0 0.0
        %3931 = vmatpush1.msra.mxu0 0.0
        %3932 = vmatprep.mubr.f32.mxu0 0.0
        %3933 = vmatmul.mubr.f32.gmra.mrb[0].mxu0 %v3858
        %v3934 = vpop.f32.mrb[0].mxu0
        %v3935 = vadd.f32 0.0, %v3934
        %v3936 = vpop.f32.mrb[0].mxu0
        %3937 = vmatprep.mubr.f32.mxu0 0.0
        %3938 = vmatmul.mubr.f32.gmra.mrb[0].mxu0 %v3861
        %v3939 = vpop.f32.mrb[0].mxu0
        %v3940 = vadd.f32 0.0, %v3939
        %v3941 = vpop.f32.mrb[0].mxu0
        %3942 = vmatprep.mubr.f32.mxu0 0.0
        %3943 = vmatmul.mubr.f32.gmra.mrb[0].mxu0 %v3864
        %v3944 = vpop.f32.mrb[0].mxu0
        %v3945 = vadd.f32 0.0, %v3944
        %v3946 = vpop.f32.mrb[0].mxu0
        %3947 = vdwg.mxu0
        %3951 = vrot.lane.b32.xlu0 %v3451, 8
        %v3952 = vpop.permute.xlu0 %3951
        %3953 = vrot.lane.b32.xlu0 %v3456, 8
        %v3954 = vpop.permute.xlu0 %3953
        %3955 = vrot.lane.b32.xlu0 %v3461, 8
        %v3956 = vpop.permute.xlu0 %3955
        %3963 = vrot.lane.b32.xlu0 %v3693, 16
        %v3964 = vpop.permute.xlu0 %3963
        %3965 = vrot.lane.b32.xlu0 %v3698, 16
        %v3966 = vpop.permute.xlu0 %3965
        %3967 = vrot.lane.b32.xlu0 %v3703, 16
        %v3968 = vpop.permute.xlu0 %3967
        %3975 = vrot.lane.b32.xlu0 %v3935, 24
        %v3976 = vpop.permute.xlu0 %3975
        %3977 = vrot.lane.b32.xlu0 %v3940, 24
        %v3978 = vpop.permute.xlu0 %3977
        %3979 = vrot.lane.b32.xlu0 %v3945, 24
        %v3980 = vpop.permute.xlu0 %3979
        %v3984 = vsel %vm1437, %v3209, %v3952
        %v3985 = vsel %vm1437, %v3214, %v3954
        %v3986 = vsel %vm1437, %v3219, %v3956
        %v3987 = vsel %vm2436, %v3984, %v3964
        %v3988 = vsel %vm2436, %v3985, %v3966
        %v3989 = vsel %vm2436, %v3986, %v3968
        %v3990 = vsel %vm2440, %v3987, %v3976
        %v3991 = vsel %vm2440, %v3988, %v3978
        %v3992 = vsel %vm2440, %v3989, %v3980
        %v3993 = vld [vmem:[%s43] sm:$0xff]
        %v3994 = vld [vmem:[%s43 + $0x8] sm:$0xff]
        %v3995 = vld [vmem:[%s43 + $0x10] sm:$0xff]
        %v3996 = vld [vmem:[%s43 + $0x18] sm:$0xff]
        %v3997 = vld [vmem:[%s45] sm:$0x1]
        %v3999 = vlaneseq
        %v4000 = vshrl.u32 %v3999, 7
        %v4001 = vsub.s32 0, %v4000
        %v4002 = vrot.slane %v3997, %v4001
        %v4005 = vsel %vm1275, %v3990, 0
        %v4008 = vsel %vm1275, %v3991, 0
        %v4011 = vsel %vm1275, %v3992, 0
        %4013 = vmatprep.subr.mxu0 0.0
        %4014 = vmatpush1.msra.mxu0 %v3993
        %4015 = vmatprep.subr.mxu0 0.0
        %4016 = vmatpush1.msra.mxu0 %v3994
        %4017 = vmatprep.subr.mxu0 0.0
        %4018 = vmatpush1.msra.mxu0 %v3995
        %4019 = vmatprep.subr.mxu0 0.0
        %4020 = vmatpush1.msra.mxu0 %v3996
        %4021 = vmatprep.subr.mxu0 0.0
        %4022 = vmatpush1.msra.mxu0 0.0
        %4023 = vmatprep.subr.mxu0 0.0
        %4024 = vmatpush1.msra.mxu0 0.0
        %4025 = vmatprep.subr.mxu0 0.0
        %4026 = vmatpush1.msra.mxu0 0.0
        %4027 = vmatprep.subr.mxu0 0.0
        %4028 = vmatpush1.msra.mxu0 0.0
        %4029 = vmatprep.subr.mxu0 0.0
        %4030 = vmatpush1.msra.mxu0 0.0
        %4031 = vmatprep.subr.mxu0 0.0
        %4032 = vmatpush1.msra.mxu0 0.0
        %4033 = vmatprep.subr.mxu0 0.0
        %4034 = vmatpush1.msra.mxu0 0.0
        %4035 = vmatprep.subr.mxu0 0.0
        %4036 = vmatpush1.msra.mxu0 0.0
        %4037 = vmatprep.subr.mxu0 0.0
        %4038 = vmatpush1.msra.mxu0 0.0
        %4039 = vmatprep.subr.mxu0 0.0
        %4040 = vmatpush1.msra.mxu0 0.0
        %4041 = vmatprep.subr.mxu0 0.0
        %4042 = vmatpush1.msra.mxu0 0.0
        %4043 = vmatprep.subr.mxu0 0.0
        %4044 = vmatpush1.msra.mxu0 0.0
        %4045 = vmatprep.subr.mxu0 0.0
        %4046 = vmatpush1.msra.mxu0 0.0
        %4047 = vmatprep.subr.mxu0 0.0
        %4048 = vmatpush1.msra.mxu0 0.0
        %4049 = vmatprep.subr.mxu0 0.0
        %4050 = vmatpush1.msra.mxu0 0.0
        %4051 = vmatprep.subr.mxu0 0.0
        %4052 = vmatpush1.msra.mxu0 0.0
        %4053 = vmatprep.subr.mxu0 0.0
        %4054 = vmatpush1.msra.mxu0 0.0
        %4055 = vmatprep.subr.mxu0 0.0
        %4056 = vmatpush1.msra.mxu0 0.0
        %4057 = vmatprep.subr.mxu0 0.0
        %4058 = vmatpush1.msra.mxu0 0.0
        %4059 = vmatprep.subr.mxu0 0.0
        %4060 = vmatpush1.msra.mxu0 0.0
        %4061 = vmatprep.subr.mxu0 0.0
        %4062 = vmatpush1.msra.mxu0 0.0
        %4063 = vmatprep.subr.mxu0 0.0
        %4064 = vmatpush1.msra.mxu0 0.0
        %4065 = vmatprep.subr.mxu0 0.0
        %4066 = vmatpush1.msra.mxu0 0.0
        %4067 = vmatprep.subr.mxu0 0.0
        %4068 = vmatpush1.msra.mxu0 0.0
        %4069 = vmatprep.subr.mxu0 0.0
        %4070 = vmatpush1.msra.mxu0 0.0
        %4071 = vmatprep.subr.mxu0 0.0
        %4072 = vmatpush1.msra.mxu0 0.0
        %4073 = vmatprep.subr.mxu0 0.0
        %4074 = vmatpush1.msra.mxu0 0.0
        %4075 = vmatprep.subr.mxu0 0.0
        %4076 = vmatpush1.msra.mxu0 0.0
        %4077 = vmatprep.mubr.f32.mxu0 0.0
        %4078 = vmatmul.mubr.f32.gmra.mrb[0].mxu0 %v4005
        %v4079 = vpop.f32.mrb[0].mxu0
        %v4080 = vadd.f32 %v4002, %v4079
        %v4081 = vpop.f32.mrb[0].mxu0
        %4082 = vmatprep.mubr.f32.mxu0 0.0
        %4083 = vmatmul.mubr.f32.gmra.mrb[0].mxu0 %v4008
        %v4084 = vpop.f32.mrb[0].mxu0
        %v4085 = vadd.f32 %v4002, %v4084
        %v4086 = vpop.f32.mrb[0].mxu0
        %4087 = vmatprep.mubr.f32.mxu0 0.0
        %4088 = vmatmul.mubr.f32.gmra.mrb[0].mxu0 %v4011
        %v4089 = vpop.f32.mrb[0].mxu0
        %v4090 = vadd.f32 %v4002, %v4089
        %v4091 = vpop.f32.mrb[0].mxu0
        %4092 = vdwg.mxu0
        %v4093 = vadd.f32 %v2826, %v4080
        %v4094 = vadd.f32 %v2827, %v4085
        %v4095 = vadd.f32 %v2828, %v4090
        %v4096 = vld [vmem:[%s47] sm:$0x1]
        %v4097 = vld [vmem:[%s49] sm:$0x1]
        %v4098 = vsel %vm1275, %v4093, 0.0
        %4099 = vadd.xlane.f32.xlu0 %v4098
        %v4100 = vpop.xlane.xlu0 %4099
        %v4101 = vsel %vm1275, %v4094, 0.0
        %4102 = vadd.xlane.f32.xlu0 %v4101
        %v4103 = vpop.xlane.xlu0 %4102
        %v4104 = vsel %vm1282, %v4095, 0.0
        %4105 = vadd.xlane.f32.xlu0 %v4104
        %v4106 = vpop.xlane.xlu0 %4105
        %v4107 = vmul.f32 %v4100, %v1286
        %v4108 = vmul.f32 %v4103, %v1286
        %v4109 = vmul.f32 %v4106, %v1286
        %v4110 = vsub.f32 %v4093, %v4107
        %v4111 = vsub.f32 %v4094, %v4108
        %v4112 = vsub.f32 %v4095, %v4109
        %v4113 = vmul.f32 %v4110, %v4110
        %v4114 = vmul.f32 %v4111, %v4111
        %v4115 = vmul.f32 %v4112, %v4112
        %v4116 = vsel %vm1275, %v4113, 0.0
        %4117 = vadd.xlane.f32.xlu0 %v4116
        %v4118 = vpop.xlane.xlu0 %4117
        %v4119 = vsel %vm1275, %v4114, 0.0
        %4120 = vadd.xlane.f32.xlu0 %v4119
        %v4121 = vpop.xlane.xlu0 %4120
        %v4122 = vsel %vm1282, %v4115, 0.0
        %4123 = vadd.xlane.f32.xlu0 %v4122
        %v4124 = vpop.xlane.xlu0 %4123
        %v4125 = vmul.f32 %v4118, %v1286
        %v4126 = vmul.f32 %v4121, %v1286
        %v4127 = vmul.f32 %v4124, %v1286
        %v4128 = vadd.f32 %v4125, 1e-05
        %v4129 = vadd.f32 %v4126, 1e-05
        %v4130 = vadd.f32 %v4127, 1e-05
        %v4131 = vrsqrt.pop %v4128
        %v4132 = vrsqrt.pop %v4129
        %v4133 = vrsqrt.pop %v4130
        %v4134 = vmul.f32 %v4110, %v4131
        %v4135 = vmul.f32 %v4111, %v4132
        %v4136 = vmul.f32 %v4112, %v4133
        %v4138 = vlaneseq
        %v4139 = vshrl.u32 %v4138, 7
        %v4140 = vsub.s32 0, %v4139
        %v4141 = vrot.slane %v4096, %v4140
        %v4143 = vmul.f32 %v4134, %v4141
        %v4144 = vmul.f32 %v4135, %v4141
        %v4145 = vmul.f32 %v4136, %v4141
        %v4147 = vlaneseq
        %v4148 = vshrl.u32 %v4147, 7
        %v4149 = vsub.s32 0, %v4148
        %v4150 = vrot.slane %v4097, %v4149
        %v4152 = vadd.f32 %v4143, %v4150
        %v4153 = vadd.f32 %v4144, %v4150
        %v4154 = vadd.f32 %v4145, %v4150
        %v4155 = vld [vmem:[%s51] sm:$0xff]
        %v4156 = vld [vmem:[%s51 + $0x8] sm:$0xff]
        %v4157 = vld [vmem:[%s51 + $0x10] sm:$0xff]
        %v4158 = vld [vmem:[%s51 + $0x18] sm:$0xff]
        %v4159 = vld [vmem:[%s53] sm:$0x1]
        %v4161 = vlaneseq
        %v4162 = vshrl.u32 %v4161, 7
        %v4163 = vsub.s32 0, %v4162
        %v4164 = vrot.slane %v4159, %v4163
        %v4167 = vsel %vm1275, %v4152, 0
        %v4170 = vsel %vm1275, %v4153, 0
        %v4173 = vsel %vm1275, %v4154, 0
        %4175 = vmatprep.subr.mxu0 0.0
        %4176 = vmatpush1.msra.mxu0 %v4155
        %4177 = vmatprep.subr.mxu0 0.0
        %4178 = vmatpush1.msra.mxu0 %v4156
        %4179 = vmatprep.subr.mxu0 0.0
        %4180 = vmatpush1.msra.mxu0 %v4157
        %4181 = vmatprep.subr.mxu0 0.0
        %4182 = vmatpush1.msra.mxu0 %v4158
        %4183 = vmatprep.subr.mxu0 0.0
        %4184 = vmatpush1.msra.mxu0 0.0
        %4185 = vmatprep.subr.mxu0 0.0
        %4186 = vmatpush1.msra.mxu0 0.0
        %4187 = vmatprep.subr.mxu0 0.0
        %4188 = vmatpush1.msra.mxu0 0.0
        %4189 = vmatprep.subr.mxu0 0.0
        %4190 = vmatpush1.msra.mxu0 0.0
        %4191 = vmatprep.subr.mxu0 0.0
        %4192 = vmatpush1.msra.mxu0 0.0
        %4193 = vmatprep.subr.mxu0 0.0
        %4194 = vmatpush1.msra.mxu0 0.0
        %4195 = vmatprep.subr.mxu0 0.0
        %4196 = vmatpush1.msra.mxu0 0.0
        %4197 = vmatprep.subr.mxu0 0.0
        %4198 = vmatpush1.msra.mxu0 0.0
        %4199 = vmatprep.subr.mxu0 0.0
        %4200 = vmatpush1.msra.mxu0 0.0
        %4201 = vmatprep.subr.mxu0 0.0
        %4202 = vmatpush1.msra.mxu0 0.0
        %4203 = vmatprep.subr.mxu0 0.0
        %4204 = vmatpush1.msra.mxu0 0.0
        %4205 = vmatprep.subr.mxu0 0.0
        %4206 = vmatpush1.msra.mxu0 0.0
        %4207 = vmatprep.subr.mxu0 0.0
        %4208 = vmatpush1.msra.mxu0 0.0
        %4209 = vmatprep.subr.mxu0 0.0
        %4210 = vmatpush1.msra.mxu0 0.0
        %4211 = vmatprep.subr.mxu0 0.0
        %4212 = vmatpush1.msra.mxu0 0.0
        %4213 = vmatprep.subr.mxu0 0.0
        %4214 = vmatpush1.msra.mxu0 0.0
        %4215 = vmatprep.subr.mxu0 0.0
        %4216 = vmatpush1.msra.mxu0 0.0
        %4217 = vmatprep.subr.mxu0 0.0
        %4218 = vmatpush1.msra.mxu0 0.0
        %4219 = vmatprep.subr.mxu0 0.0
        %4220 = vmatpush1.msra.mxu0 0.0
        %4221 = vmatprep.subr.mxu0 0.0
        %4222 = vmatpush1.msra.mxu0 0.0
        %4223 = vmatprep.subr.mxu0 0.0
        %4224 = vmatpush1.msra.mxu0 0.0
        %4225 = vmatprep.subr.mxu0 0.0
        %4226 = vmatpush1.msra.mxu0 0.0
        %4227 = vmatprep.subr.mxu0 0.0
        %4228 = vmatpush1.msra.mxu0 0.0
        %4229 = vmatprep.subr.mxu0 0.0
        %4230 = vmatpush1.msra.mxu0 0.0
        %4231 = vmatprep.subr.mxu0 0.0
        %4232 = vmatpush1.msra.mxu0 0.0
        %4233 = vmatprep.subr.mxu0 0.0
        %4234 = vmatpush1.msra.mxu0 0.0
        %4235 = vmatprep.subr.mxu0 0.0
        %4236 = vmatpush1.msra.mxu0 0.0
        %4237 = vmatprep.subr.mxu0 0.0
        %4238 = vmatpush1.msra.mxu0 0.0
        %4239 = vmatprep.mubr.f32.mxu0 0.0
        %4240 = vmatmul.mubr.f32.gmra.mrb[0].mxu0 %v4167
        %v4241 = vpop.f32.mrb[0].mxu0
        %v4242 = vadd.f32 %v4164, %v4241
        %v4243 = vpop.f32.mrb[0].mxu0
        %4244 = vmatprep.mubr.f32.mxu0 0.0
        %4245 = vmatmul.mubr.f32.gmra.mrb[0].mxu0 %v4170
        %v4246 = vpop.f32.mrb[0].mxu0
        %v4247 = vadd.f32 %v4164, %v4246
        %v4248 = vpop.f32.mrb[0].mxu0
        %4249 = vmatprep.mubr.f32.mxu0 0.0
        %4250 = vmatmul.mubr.f32.gmra.mrb[0].mxu0 %v4173
        %v4251 = vpop.f32.mrb[0].mxu0
        %v4252 = vadd.f32 %v4164, %v4251
        %v4253 = vpop.f32.mrb[0].mxu0
        %4254 = vdwg.mxu0
        %v4255 = vmul.f32 %v4242, 0.5
        %v4256 = vmul.f32 %v4247, 0.5
        %v4257 = vmul.f32 %v4252, 0.5
        %v4258 = vmul.f32 %v4242, 0.70710677
        %v4259 = vmul.f32 %v4247, 0.70710677
        %v4260 = vmul.f32 %v4252, 0.70710677
        %v4261 = verf.f32.pop %v4258
        %v4262 = verf.f32.pop %v4259
        %v4263 = verf.f32.pop %v4260
        %v4264 = vadd.f32 %v4261, 1.0
        %v4265 = vadd.f32 %v4262, 1.0
        %v4266 = vadd.f32 %v4263, 1.0
        %v4267 = vmul.f32 %v4255, %v4264
        %v4268 = vmul.f32 %v4256, %v4265
        %v4269 = vmul.f32 %v4257, %v4266
        %v4270 = vld [vmem:[%s55] sm:$0xff]
        %v4271 = vld [vmem:[%s55 + $0x8] sm:$0xff]
        %v4272 = vld [vmem:[%s55 + $0x10] sm:$0xff]
        %v4273 = vld [vmem:[%s55 + $0x18] sm:$0xff]
        %v4274 = vld [vmem:[%s55 + $0x20] sm:$0xff]
        %v4275 = vld [vmem:[%s55 + $0x28] sm:$0xff]
        %v4276 = vld [vmem:[%s55 + $0x30] sm:$0xff]
        %v4277 = vld [vmem:[%s55 + $0x38] sm:$0xff]
        %v4278 = vld [vmem:[%s57] sm:$0x1]
        %v4280 = vlaneseq
        %v4281 = vshrl.u32 %v4280, 7
        %v4282 = vsub.s32 0, %v4281
        %v4283 = vrot.slane %v4278, %v4282
        %v4286 = vsel %vm2736, %v4267, 0
        %v4289 = vsel %vm2736, %v4268, 0
        %v4292 = vsel %vm2736, %v4269, 0
        %4294 = vmatprep.subr.mxu0 0.0
        %4295 = vmatpush1.msra.mxu0 %v4270
        %4296 = vmatprep.subr.mxu0 0.0
        %4297 = vmatpush1.msra.mxu0 %v4271
        %4298 = vmatprep.subr.mxu0 0.0
        %4299 = vmatpush1.msra.mxu0 %v4272
        %4300 = vmatprep.subr.mxu0 0.0
        %4301 = vmatpush1.msra.mxu0 %v4273
        %4302 = vmatprep.subr.mxu0 0.0
        %4303 = vmatpush1.msra.mxu0 %v4274
        %4304 = vmatprep.subr.mxu0 0.0
        %4305 = vmatpush1.msra.mxu0 %v4275
        %4306 = vmatprep.subr.mxu0 0.0
        %4307 = vmatpush1.msra.mxu0 %v4276
        %4308 = vmatprep.subr.mxu0 0.0
        %4309 = vmatpush1.msra.mxu0 %v4277
        %4310 = vmatprep.subr.mxu0 0.0
        %4311 = vmatpush1.msra.mxu0 0.0
        %4312 = vmatprep.subr.mxu0 0.0
        %4313 = vmatpush1.msra.mxu0 0.0
        %4314 = vmatprep.subr.mxu0 0.0
        %4315 = vmatpush1.msra.mxu0 0.0
        %4316 = vmatprep.subr.mxu0 0.0
        %4317 = vmatpush1.msra.mxu0 0.0
        %4318 = vmatprep.subr.mxu0 0.0
        %4319 = vmatpush1.msra.mxu0 0.0
        %4320 = vmatprep.subr.mxu0 0.0
        %4321 = vmatpush1.msra.mxu0 0.0
        %4322 = vmatprep.subr.mxu0 0.0
        %4323 = vmatpush1.msra.mxu0 0.0
        %4324 = vmatprep.subr.mxu0 0.0
        %4325 = vmatpush1.msra.mxu0 0.0
        %4326 = vmatprep.subr.mxu0 0.0
        %4327 = vmatpush1.msra.mxu0 0.0
        %4328 = vmatprep.subr.mxu0 0.0
        %4329 = vmatpush1.msra.mxu0 0.0
        %4330 = vmatprep.subr.mxu0 0.0
        %4331 = vmatpush1.msra.mxu0 0.0
        %4332 = vmatprep.subr.mxu0 0.0
        %4333 = vmatpush1.msra.mxu0 0.0
        %4334 = vmatprep.subr.mxu0 0.0
        %4335 = vmatpush1.msra.mxu0 0.0
        %4336 = vmatprep.subr.mxu0 0.0
        %4337 = vmatpush1.msra.mxu0 0.0
        %4338 = vmatprep.subr.mxu0 0.0
        %4339 = vmatpush1.msra.mxu0 0.0
        %4340 = vmatprep.subr.mxu0 0.0
        %4341 = vmatpush1.msra.mxu0 0.0
        %4342 = vmatprep.subr.mxu0 0.0
        %4343 = vmatpush1.msra.mxu0 0.0
        %4344 = vmatprep.subr.mxu0 0.0
        %4345 = vmatpush1.msra.mxu0 0.0
        %4346 = vmatprep.subr.mxu0 0.0
        %4347 = vmatpush1.msra.mxu0 0.0
        %4348 = vmatprep.subr.mxu0 0.0
        %4349 = vmatpush1.msra.mxu0 0.0
        %4350 = vmatprep.subr.mxu0 0.0
        %4351 = vmatpush1.msra.mxu0 0.0
        %4352 = vmatprep.subr.mxu0 0.0
        %4353 = vmatpush1.msra.mxu0 0.0
        %4354 = vmatprep.subr.mxu0 0.0
        %4355 = vmatpush1.msra.mxu0 0.0
        %4356 = vmatprep.subr.mxu0 0.0
        %4357 = vmatpush1.msra.mxu0 0.0
        %4358 = vmatprep.mubr.f32.mxu0 0.0
        %4359 = vmatmul.mubr.f32.gmra.mrb[0].mxu0 %v4286
        %v4360 = vpop.f32.mrb[0].mxu0
        %v4361 = vadd.f32 %v4283, %v4360
        %v4362 = vpop.f32.mrb[0].mxu0
        %4363 = vmatprep.mubr.f32.mxu0 0.0
        %4364 = vmatmul.mubr.f32.gmra.mrb[0].mxu0 %v4289
        %v4365 = vpop.f32.mrb[0].mxu0
        %v4366 = vpop.f32.mrb[0].mxu0
        %4367 = vmatprep.mubr.f32.mxu0 0.0
        %4368 = vmatmul.mubr.f32.gmra.mrb[0].mxu0 %v4292
        %v4369 = vpop.f32.mrb[0].mxu0
        %v4370 = vpop.f32.mrb[0].mxu0
        %4371 = vdwg.mxu0
        %v4372 = vadd.f32 %v4093, %v4361
        %v4373 = vld [vmem:[%s59] sm:$0x1]
        %v4374 = vld [vmem:[%s61] sm:$0x1]
        %v4375 = vsel %vm1282, %v4372, 0.0
        %4376 = vadd.xlane.f32.xlu0 %v4375
        %v4377 = vpop.xlane.xlu0 %4376
        %v4378 = vmul.f32 %v4377, %v1286
        %v4379 = vsub.f32 %v4372, %v4378
        %v4380 = vmul.f32 %v4379, %v4379
        %v4381 = vsel %vm1282, %v4380, 0.0
        %4382 = vadd.xlane.f32.xlu0 %v4381
        %v4383 = vpop.xlane.xlu0 %4382
        %v4384 = vmul.f32 %v4383, %v1286
        %v4385 = vadd.f32 %v4384, 1e-05
        %v4386 = vrsqrt.pop %v4385
        %v4387 = vmul.f32 %v4379, %v4386
        %v4388 = vmul.f32 %v4387, %v4373
        %v4389 = vadd.f32 %v4388, %v4374
        %v4390 = vld [vmem:[%s63] sm:$0xff]
        %v4391 = vld [vmem:[%s63 + $0x8] sm:$0xff]
        %v4392 = vld [vmem:[%s63 + $0x10] sm:$0xff]
        %v4393 = vld [vmem:[%s63 + $0x18] sm:$0xff]
        %v4394 = vld [vmem:[%s65] sm:$0x1]
        %v4396 = vsel %vm1275, %v4389, 0
        %4398 = vmatprep.subr.mxu0 0.0
        %4399 = vmatpush1.msra.mxu0 %v4390
        %4400 = vmatprep.subr.mxu0 0.0
        %4401 = vmatpush1.msra.mxu0 %v4391
        %4402 = vmatprep.subr.mxu0 0.0
        %4403 = vmatpush1.msra.mxu0 %v4392
        %4404 = vmatprep.subr.mxu0 0.0
        %4405 = vmatpush1.msra.mxu0 %v4393
        %4406 = vmatprep.subr.mxu0 0.0
        %4407 = vmatpush1.msra.mxu0 0.0
        %4408 = vmatprep.subr.mxu0 0.0
        %4409 = vmatpush1.msra.mxu0 0.0
        %4410 = vmatprep.subr.mxu0 0.0
        %4411 = vmatpush1.msra.mxu0 0.0
        %4412 = vmatprep.subr.mxu0 0.0
        %4413 = vmatpush1.msra.mxu0 0.0
        %4414 = vmatprep.subr.mxu0 0.0
        %4415 = vmatpush1.msra.mxu0 0.0
        %4416 = vmatprep.subr.mxu0 0.0
        %4417 = vmatpush1.msra.mxu0 0.0
        %4418 = vmatprep.subr.mxu0 0.0
        %4419 = vmatpush1.msra.mxu0 0.0
        %4420 = vmatprep.subr.mxu0 0.0
        %4421 = vmatpush1.msra.mxu0 0.0
        %4422 = vmatprep.subr.mxu0 0.0
        %4423 = vmatpush1.msra.mxu0 0.0
        %4424 = vmatprep.subr.mxu0 0.0
        %4425 = vmatpush1.msra.mxu0 0.0
        %4426 = vmatprep.subr.mxu0 0.0
        %4427 = vmatpush1.msra.mxu0 0.0
        %4428 = vmatprep.subr.mxu0 0.0
        %4429 = vmatpush1.msra.mxu0 0.0
        %4430 = vmatprep.subr.mxu0 0.0
        %4431 = vmatpush1.msra.mxu0 0.0
        %4432 = vmatprep.subr.mxu0 0.0
        %4433 = vmatpush1.msra.mxu0 0.0
        %4434 = vmatprep.subr.mxu0 0.0
        %4435 = vmatpush1.msra.mxu0 0.0
        %4436 = vmatprep.subr.mxu0 0.0
        %4437 = vmatpush1.msra.mxu0 0.0
        %4438 = vmatprep.subr.mxu0 0.0
        %4439 = vmatpush1.msra.mxu0 0.0
        %4440 = vmatprep.subr.mxu0 0.0
        %4441 = vmatpush1.msra.mxu0 0.0
        %4442 = vmatprep.subr.mxu0 0.0
        %4443 = vmatpush1.msra.mxu0 0.0
        %4444 = vmatprep.subr.mxu0 0.0
        %4445 = vmatpush1.msra.mxu0 0.0
        %4446 = vmatprep.subr.mxu0 0.0
        %4447 = vmatpush1.msra.mxu0 0.0
        %4448 = vmatprep.subr.mxu0 0.0
        %4449 = vmatpush1.msra.mxu0 0.0
        %4450 = vmatprep.subr.mxu0 0.0
        %4451 = vmatpush1.msra.mxu0 0.0
        %4452 = vmatprep.subr.mxu0 0.0
        %4453 = vmatpush1.msra.mxu0 0.0
        %4454 = vmatprep.subr.mxu0 0.0
        %4455 = vmatpush1.msra.mxu0 0.0
        %4456 = vmatprep.subr.mxu0 0.0
        %4457 = vmatpush1.msra.mxu0 0.0
        %4458 = vmatprep.subr.mxu0 0.0
        %4459 = vmatpush1.msra.mxu0 0.0
        %4460 = vmatprep.subr.mxu0 0.0
        %4461 = vmatpush1.msra.mxu0 0.0
        %4462 = vmatprep.mubr.f32.mxu0 0.0
        %4463 = vmatmul.mubr.f32.gmra.mrb[0].mxu0 %v4396
        %v4464 = vpop.f32.mrb[0].mxu0
        %v4465 = vadd.f32 %v4394, %v4464
        %v4466 = vpop.f32.mrb[0].mxu0
        %4467 = vdwg.mxu0
        %4468 = vst [vmem:[%s1048] sm:$0x1] %v4465
        %s4469 = sand.u32 %s811, 1
        %s4470 = scalar_lea.sflag [#allocation3], %s4469
        %s4471 = sand.u32 %s811, 1
        %s4472 = scalar_lea.vmem [#allocation5], %s4471
        // Predicated region
        $region161: #{vit_forward.1} parent=155 // pred_check
          %p4473 = pneg %p821
        $region162: #{vit_forward.1} parent=155 // pred_check_branch
          %4475 = sbr.rel (%p4473) target = $region164
        $region163: #{vit_forward.1} parent=155 // pred_region
          %s4477 = ssub.s32 16, 16
          %4478 = vsyncadd %s4470, %s4477
          %s4479 = smul.addr %s84, 16
          %s4480 = scalar_lea.hbm %s69, %s4479
          %s4482 = sshll.u32 %s4472, 4
          %s4483 = int_to_ptr.vmem [resolvable:$true] %s4482
          %4485 = dma.vmem_to_hbm [thread:$0]  %s4483, 16, %s4480, %s4470
        $region164: #{vit_forward.1} parent=155 // pred_fallthru
          _
      $region156: #{vit_forward.1} parent=5 // pred_fallthru
        _
      %p4486 = scmp.le.s32.totalorder 2, %s79
      // Predicated region
      $region165: #{vit_forward.1} parent=5 // pred_check
        %p4487 = pneg %p4486
      $region166: #{vit_forward.1} parent=5 // pred_check_branch
        %4489 = sbr.rel (%p4487) target = $region168
      $region167: #{vit_forward.1} parent=5 // pred_region
        %s4490 = ssub.s32 %s79, 2
        // Predicated region
        $region169: #{vit_forward.1} parent=167 // pred_check
          %p4491 = pneg %p827
        $region170: #{vit_forward.1} parent=167 // pred_check_branch
          %4493 = sbr.rel (%p4491) target = $region172
        $region171: #{vit_forward.1} parent=167 // pred_region
          %s4494 = sand.u32 %s812, 1
          %s4495 = scalar_lea.sflag [#allocation3], %s4494
          %s4496 = sand.u32 %s812, 1
          %s4497 = scalar_lea.vmem [#allocation5], %s4496
          %4498 = dma.done %s4495, 16
        $region172: #{vit_forward.1} parent=167 // pred_fallthru
          _
      $region168: #{vit_forward.1} parent=5 // pred_fallthru
        _
    $region6: #{vit_forward.1} parent=1 // loop_footer
      %s83 = sadd.s32 1, %s79
    $region7: #{vit_forward.1} parent=1 // loop_footer_branch
      %78 = sbr.rel target = $region3
    $region8: #{vit_forward.1} parent=1 // loop_exit
      _
    %4499 = vsyncpa [#allocation3], 1
    %s4500 = scalar_lea.sflag [#allocation3], 1
    %4501 = vsyncpa %s4500, 1
    %4502 = vsyncpa [#allocation4], 1
    %s4503 = scalar_lea.sflag [#allocation4], 1
    %4504 = vsyncpa %s4503, 1

</llo_original>
